<compile_context>
chip_gen: v7x
topology: tpu7x:2x2x1
jax: 0.10.0
libtpu: 0.0.40
codegen_flags: <defaults>
</compile_context>

<pallas_src>
import functools

import jax
import jax.numpy as jnp
from jax import lax
from jax.experimental import pallas as pl
from jax.experimental.pallas import tpu as pltpu

LANE = 128


def _round_up(n, m):
    return ((n + m - 1) // m) * m


# ----------------------------------------------------------------------------
# Fused kernel: one tile of `tb` batch elements per grid step, all in VMEM.
# ----------------------------------------------------------------------------
def _dpcnn_kernel(x_ref, wr_ref, br_ref, wc_ref, bc_ref, wf_ref, bf_ref, o_ref,
                  *, tb, seq_len):
    """DPCNN forward for a tile of `tb` batch elements.

    x_ref : (1, tb*L, Ep)  embedded input (f32), element b at rows [b*L, (b+1)*L)
    wr_ref: (3*Ep, Fp)     region conv weight, im2col layout (compute dtype)
    br_ref: (1, Fp)        region conv bias (f32)
    wc_ref: (3*Fp, Fp)     (3,1) conv weight, im2col layout (compute dtype)
    bc_ref: (1, Fp)        conv bias (f32)
    wf_ref: (Fp, Cp)       fc weight (compute dtype)
    bf_ref: (1, Cp)        fc bias (f32)
    o_ref : (1, tb, Cp)    logits (f32), one lane-dense store per step
    """
    fp = wc_ref.shape[1]
    cdt = wc_ref.dtype                      # MXU operand dtype (bf16 by default)

    def elem_rows(m, h):
        # per-element row index (0..h-1) for each flat row, broadcast over lanes
        return lax.broadcasted_iota(jnp.int32, (m, fp), 0) % h

    def shift_down1(v):
        # flat shift by +1 row (row r <- v[r-1]); row 0 <- 0
        return jnp.concatenate([jnp.zeros((1, fp), v.dtype), v[:-1, :]], axis=0)

    def shift_up(v, k):
        # flat shift by -k rows (row r <- v[r+k]); last k rows <- 0
        return jnp.concatenate([v[k:, :], jnp.zeros((k, fp), v.dtype)], axis=0)

    def pad_relu_conv(val, h):
        # padding1 (1 zero row above/below EACH element) -> ReLU -> conv(3,1).
        # relu(pad(x)) == pad(relu(x)); per-element edges are realized with
        # masks so the whole tile is one (tb*h, 3*Fp) @ (3*Fp, Fp) matmul.
        m = val.shape[0]
        r = jnp.maximum(val, 0.0)
        if h == 1:
            a0 = jnp.zeros_like(r)                              # p[i]   = pad
            a2 = jnp.zeros_like(r)                              # p[i+2] = pad
        else:
            rows = elem_rows(m, h)
            a0 = jnp.where(rows == 0, 0.0, shift_down1(r))      # tap 0: p[i]
            a2 = jnp.where(rows == h - 1, 0.0, shift_up(r, 1))  # tap 2: p[i+2]
        slab = jnp.concatenate(
            [a0.astype(cdt), r.astype(cdt), a2.astype(cdt)], axis=1)
        acc = jnp.dot(slab, wc_ref[...], preferred_element_type=jnp.float32)
        return acc + bc_ref[...]

    def block(val, h):
        # DPCNN._block: padding2 (bottom) -> maxpool(3,1)/stride2 -> conv x2 -> +px
        m = val.shape[0]
        h_out = (h - 2) // 2 + 1
        rows = elem_rows(m, h)
        # Vectorized pool: window-start max for ALL rows via two masked shifts
        # (the masks also realize the per-element bottom zero-pad row, matching
        # the reference pool which includes the literal zero pad), then keep the
        # stride-2 (even) rows of each element.
        s1 = jnp.where(rows == h - 1, 0.0, shift_up(val, 1))     # p[i+1]
        if h > 2:
            s2 = jnp.where(rows >= h - 2, 0.0, shift_up(val, 2)) # p[i+2]
        else:
            s2 = jnp.zeros_like(val)
        mx = jnp.maximum(jnp.maximum(val, s1), s2)
        px = jnp.concatenate(
            [mx[b * h + 2 * j: b * h + 2 * j + 1, :]
             for b in range(tb) for j in range(h_out)], axis=0)  # (tb*h_out, Fp)
        y = pad_relu_conv(px, h_out)
        y = pad_relu_conv(y, h_out) + px                         # residual fused
        return y, h_out

    # ---- conv_region: (3, embed) valid conv, whole tile in ONE matmul --------
    L = seq_len
    h = L - 2
    xv = x_ref[0]                                                # (tb*L, Ep)
    taps = []
    for k in range(3):
        taps.append(jnp.concatenate(
            [xv[b * L + k: b * L + k + h, :] for b in range(tb)],
            axis=0).astype(wr_ref.dtype))                        # (tb*h, Ep)
    slab0 = jnp.concatenate(taps, axis=1)                        # (tb*h, 3*Ep)
    y = jnp.dot(slab0, wr_ref[...],
                preferred_element_type=jnp.float32) + br_ref[...]

    # ---- two pre-pyramid conv blocks ----------------------------------------
    y = pad_relu_conv(y, h)
    y = pad_relu_conv(y, h)

    # ---- pyramid: static shapes, unrolls at trace time (matches `while >=2`) -
    while h >= 2:
        y, h = block(y, h)
    # here h == 1, y is (tb, Fp)

    # ---- fc: one lane-dense (tb, Cp) store per grid step ---------------------
    logits = jnp.dot(y.astype(wf_ref.dtype), wf_ref[...],
                     preferred_element_type=jnp.float32) + bf_ref[...]
    o_ref[0] = logits


# ----------------------------------------------------------------------------
# Wrapper: single pallas_call for the whole forward, batch-tiled grid.
# ----------------------------------------------------------------------------
@functools.partial(jax.jit, static_argnums=(2, 3))
def dpcnn_forward(x, params, num_classes, batch_tile=4):
    wr, br, wc, bc, wf, bf = params
    B, L, E = x.shape
    assert L >= 3, "sequence length must be >= 3 for the region conv"
    ep = wr.shape[0] // 3
    fp = wc.shape[1]
    cp = wf.shape[1]

    tb = max(1, min(batch_tile, B))
    b_pad = _round_up(B, tb)

    # One-time channel / batch padding (zeros contribute nothing; pad rows of
    # the batch are sliced away at the end).
    pad_e = ep - E
    pad_b = b_pad - B
    if pad_e or pad_b:
        x = jnp.pad(x, ((0, pad_b), (0, 0), (0, pad_e)))
    # Group (batch, seq) rows per tile: grid step i sees only tile i's rows.
    x3 = x.reshape(b_pad // tb, tb * L, ep)

    kernel = functools.partial(_dpcnn_kernel, tb=tb, seq_len=L)
    out = pl.pallas_call(
        kernel,
        out_shape=jax.ShapeDtypeStruct((b_pad // tb, tb, cp), jnp.float32),
        grid=(b_pad // tb,),
        in_specs=[
            pl.BlockSpec((1, tb * L, ep), lambda i: (i, 0, 0)),
            # Weights/biases: constant block index -> DMA'd once, reused.
            pl.BlockSpec((3 * ep, fp), lambda i: (0, 0)),
            pl.BlockSpec((1, fp), lambda i: (0, 0)),
            pl.BlockSpec((3 * fp, fp), lambda i: (0, 0)),
            pl.BlockSpec((1, fp), lambda i: (0, 0)),
            pl.BlockSpec((fp, cp), lambda i: (0, 0)),
            pl.BlockSpec((1, cp), lambda i: (0, 0)),
        ],
        out_specs=pl.BlockSpec((1, tb, cp), lambda i: (i, 0, 0)),
        compiler_params=pltpu.CompilerParams(
            dimension_semantics=("parallel",)),     # batch tiles across TCs (v7x)
    )(x3, wr, br, wc, bc, wf, bf)

    return out.reshape(b_pad, cp)[:B, :num_classes]


# ----------------------------------------------------------------------------
# Parameters: PyTorch-shaped init + kernel-layout packing (padded, im2col).
# ----------------------------------------------------------------------------
def init_params(key, num_filters, embed_dim, num_classes):
    k = jax.random.split(key, 6)
    w_region = 0.1 * jax.random.normal(k[0], (num_filters, 1, 3, embed_dim), jnp.float32)
    b_region = 0.1 * jax.random.normal(k[1], (num_filters,), jnp.float32)
    w_conv = 0.1 * jax.random.normal(k[2], (num_filters, num_filters, 3, 1), jnp.float32)
    b_conv = 0.1 * jax.random.normal(k[3], (num_filters,), jnp.float32)
    w_fc = 0.1 * jax.random.normal(k[4], (num_classes, num_filters), jnp.float32)
    b_fc = 0.1 * jax.random.normal(k[5], (num_classes,), jnp.float32)
    return w_region, b_region, w_conv, b_conv, w_fc, b_fc


def pack_params(torch_params, embed_dim, num_filters, num_classes,
                compute_dtype=jnp.bfloat16):
    """Pad channel axes to 128 lanes and stack the 3 conv taps (im2col layout)."""
    w_region_t, b_region_t, w_conv_t, b_conv_t, w_fc_t, b_fc_t = torch_params
    ep = _round_up(embed_dim, LANE)
    fp = _round_up(num_filters, LANE)
    cp = _round_up(num_classes, LANE)

    # region conv (F, 1, 3, E) -> (3*Ep, Fp): rows [k*Ep:(k+1)*Ep] = tap k.
    taps = []
    for k in range(3):
        wk = w_region_t[:, 0, k, :].T                            # (E, F)
        taps.append(jnp.pad(wk, ((0, ep - embed_dim), (0, fp - num_filters))))
    wr = jnp.concatenate(taps, axis=0).astype(compute_dtype)     # (3*Ep, Fp)
    br = jnp.pad(b_region_t, (0, fp - num_filters)).reshape(1, fp).astype(jnp.float32)

    # (3,1) conv (F, F, 3, 1) -> (3*Fp, Fp).
    taps = []
    for k in range(3):
        wk = w_conv_t[:, :, k, 0].T                              # (F_in, F_out)
        taps.append(jnp.pad(wk, ((0, fp - num_filters), (0, fp - num_filters))))
    wc = jnp.concatenate(taps, axis=0).astype(compute_dtype)     # (3*Fp, Fp)
    bc = jnp.pad(b_conv_t, (0, fp - num_filters)).reshape(1, fp).astype(jnp.float32)

    # fc (C, F) -> (Fp, Cp).
    wf = jnp.pad(w_fc_t.T, ((0, fp - num_filters),
                            (0, cp - num_classes))).astype(compute_dtype)
    bf = jnp.pad(b_fc_t, (0, cp - num_classes)).reshape(1, cp).astype(jnp.float32)

    return wr, br, wc, bc, wf, bf


# ----------------------------------------------------------------------------
# Pure-JAX reference (mirrors the PyTorch module; same compute-dtype rounding
# points as the kernel so the comparison isolates layout/indexing bugs).
# ----------------------------------------------------------------------------
def dpcnn_reference(x, torch_params, compute_dtype=jnp.bfloat16):
    w_r, b_r, w_c, b_c, w_f, b_f = torch_params

    def q(a):
        return a.astype(compute_dtype).astype(jnp.float32)

    wr = q(jnp.concatenate([w_r[:, 0, k, :].T for k in range(3)], axis=0))  # (3E, F)
    wc = q(jnp.concatenate([w_c[:, :, k, 0].T for k in range(3)], axis=0))  # (3F, F)
    wf = q(w_f.T)                                                           # (F, C)

    def conv3(p, w, b):                       # p: (B, H+2, Cin) -> (B, H, Fout)
        hh = p.shape[1] - 2
        slab = q(jnp.concatenate([p[:, k:k + hh, :] for k in range(3)], axis=-1))
        return jnp.einsum("bhk,kf->bhf", slab, w) + b

    def pad1(v):
        return jnp.pad(v, ((0, 0), (1, 1), (0, 0)))

    y = conv3(x, wr, b_r)                                   # conv_region
    y = conv3(pad1(jnp.maximum(y, 0.0)), wc, b_c)
    y = conv3(pad1(jnp.maximum(y, 0.0)), wc, b_c)
    while y.shape[1] >= 2:                                  # matches the module
        p = jnp.pad(y, ((0, 0), (0, 1), (0, 0)))            # padding2
        h_out = (p.shape[1] - 3) // 2 + 1
        px = jnp.stack([jnp.max(p[:, 2 * j:2 * j + 3, :], axis=1)
                        for j in range(h_out)], axis=1)
        z = conv3(pad1(jnp.maximum(px, 0.0)), wc, b_c)
        z = conv3(pad1(jnp.maximum(z, 0.0)), wc, b_c)
        y = z + px
    return jnp.einsum("bhf,fc->bhc", q(y), wf)[:, 0, :] + b_f


if __name__ == "__main__":
    # Small shapes consistent with the module: (batch, seq_len, embed_dim).
    B, L, E, F, C = 8, 16, 32, 32, 2
    TB = 4                                  # 2 grid steps -> both TCs busy on v7x
    key = jax.random.PRNGKey(0)
    k_params, k_x = jax.random.split(key)

    torch_params = init_params(k_params, num_filters=F, embed_dim=E, num_classes=C)
    params = pack_params(torch_params, embed_dim=E, num_filters=F, num_classes=C,
                         compute_dtype=jnp.bfloat16)
    x = jax.random.normal(k_x, (B, L, E), jnp.float32)

    out = dpcnn_forward(x, params, C, TB)
    out = jax.block_until_ready(out)
    assert out.shape == (B, C), out.shape
    assert bool(jnp.all(jnp.isfinite(out)))

    ref = dpcnn_reference(x, torch_params, compute_dtype=jnp.bfloat16)
    assert bool(jnp.allclose(out, ref, rtol=2e-2, atol=2e-3)), (
        float(jnp.max(jnp.abs(out - ref))))
    print("KERNEL_OK")
</pallas_src>

<mosaic_0001>
module attributes {stable_mosaic.version = 11 : i64} {
  func.func @_dpcnn_kernel(%arg0: i32, %arg1: memref<1x64x128xf32, #tpu.memory_space<vmem>>, %arg2: memref<384x128xbf16, #tpu.memory_space<vmem>>, %arg3: memref<1x128xf32, #tpu.memory_space<vmem>>, %arg4: memref<384x128xbf16, #tpu.memory_space<vmem>>, %arg5: memref<1x128xf32, #tpu.memory_space<vmem>>, %arg6: memref<128x128xbf16, #tpu.memory_space<vmem>>, %arg7: memref<1x128xf32, #tpu.memory_space<vmem>>, %arg8: memref<1x4x128xf32, #tpu.memory_space<vmem>>) attributes {dimension_semantics = [#tpu.dimension_semantics<parallel>], iteration_bounds = array<i64: 2>, scalar_prefetch = 0 : i64, scratch_operands = 0 : i64, tpu.core_type = #tpu.core_type<tc>, window_params = [{transform_indices = @transform_0, window_bounds = array<i64: 1, 64, 128>}, {pipeline_mode = #tpu.pipeline_mode<synchronous>, transform_indices = @transform_1, window_bounds = array<i64: 384, 128>}, {pipeline_mode = #tpu.pipeline_mode<synchronous>, transform_indices = @transform_2, window_bounds = array<i64: 1, 128>}, {pipeline_mode = #tpu.pipeline_mode<synchronous>, transform_indices = @transform_3, window_bounds = array<i64: 384, 128>}, {pipeline_mode = #tpu.pipeline_mode<synchronous>, transform_indices = @transform_4, window_bounds = array<i64: 1, 128>}, {pipeline_mode = #tpu.pipeline_mode<synchronous>, transform_indices = @transform_5, window_bounds = array<i64: 128, 128>}, {pipeline_mode = #tpu.pipeline_mode<synchronous>, transform_indices = @transform_6, window_bounds = array<i64: 1, 128>}, {transform_indices = @transform_7, window_bounds = array<i64: 1, 4, 128>}]} {
    %c0 = arith.constant 0 : index
    %c0_0 = arith.constant 0 : index
    %c0_1 = arith.constant 0 : index
    %0 = vector.load %arg1[%c0, %c0_0, %c0_1] : memref<1x64x128xf32, #tpu.memory_space<vmem>>, vector<1x64x128xf32>
    %1 = vector.shape_cast %0 : vector<1x64x128xf32> to vector<64x128xf32>
    %2 = vector.extract_strided_slice %1 {offsets = [0, 0], sizes = [14, 128], strides = [1, 1]} : vector<64x128xf32> to vector<14x128xf32>
    %3 = vector.extract_strided_slice %1 {offsets = [16, 0], sizes = [14, 128], strides = [1, 1]} : vector<64x128xf32> to vector<14x128xf32>
    %4 = vector.extract_strided_slice %1 {offsets = [32, 0], sizes = [14, 128], strides = [1, 1]} : vector<64x128xf32> to vector<14x128xf32>
    %5 = vector.extract_strided_slice %1 {offsets = [48, 0], sizes = [14, 128], strides = [1, 1]} : vector<64x128xf32> to vector<14x128xf32>
    %6 = tpu.concatenate %2, %3, %4, %5 in 0 : vector<14x128xf32>, vector<14x128xf32>, vector<14x128xf32>, vector<14x128xf32> -> vector<56x128xf32>
    %7 = arith.truncf %6 : vector<56x128xf32> to vector<56x128xbf16>
    %8 = vector.extract_strided_slice %1 {offsets = [1, 0], sizes = [14, 128], strides = [1, 1]} : vector<64x128xf32> to vector<14x128xf32>
    %9 = vector.extract_strided_slice %1 {offsets = [17, 0], sizes = [14, 128], strides = [1, 1]} : vector<64x128xf32> to vector<14x128xf32>
    %10 = vector.extract_strided_slice %1 {offsets = [33, 0], sizes = [14, 128], strides = [1, 1]} : vector<64x128xf32> to vector<14x128xf32>
    %11 = vector.extract_strided_slice %1 {offsets = [49, 0], sizes = [14, 128], strides = [1, 1]} : vector<64x128xf32> to vector<14x128xf32>
    %12 = tpu.concatenate %8, %9, %10, %11 in 0 : vector<14x128xf32>, vector<14x128xf32>, vector<14x128xf32>, vector<14x128xf32> -> vector<56x128xf32>
    %13 = arith.truncf %12 : vector<56x128xf32> to vector<56x128xbf16>
    %14 = vector.extract_strided_slice %1 {offsets = [2, 0], sizes = [14, 128], strides = [1, 1]} : vector<64x128xf32> to vector<14x128xf32>
    %15 = vector.extract_strided_slice %1 {offsets = [18, 0], sizes = [14, 128], strides = [1, 1]} : vector<64x128xf32> to vector<14x128xf32>
    %16 = vector.extract_strided_slice %1 {offsets = [34, 0], sizes = [14, 128], strides = [1, 1]} : vector<64x128xf32> to vector<14x128xf32>
    %17 = vector.extract_strided_slice %1 {offsets = [50, 0], sizes = [14, 128], strides = [1, 1]} : vector<64x128xf32> to vector<14x128xf32>
    %18 = tpu.concatenate %14, %15, %16, %17 in 0 : vector<14x128xf32>, vector<14x128xf32>, vector<14x128xf32>, vector<14x128xf32> -> vector<56x128xf32>
    %19 = arith.truncf %18 : vector<56x128xf32> to vector<56x128xbf16>
    %20 = tpu.concatenate %7, %13, %19 in 1 : vector<56x128xbf16>, vector<56x128xbf16>, vector<56x128xbf16> -> vector<56x384xbf16>
    %c0_2 = arith.constant 0 : index
    %c0_3 = arith.constant 0 : index
    %21 = vector.load %arg2[%c0_2, %c0_3] : memref<384x128xbf16, #tpu.memory_space<vmem>>, vector<384x128xbf16>
    %cst = arith.constant dense<0.000000e+00> : vector<56x128xf32>
    %22 = tpu.matmul %20, %21, %cst {dimension_numbers = #tpu.dot_dimension_numbers<[1], [0], [0], [1], [0, 0, 1, 1], [], []>} : vector<56x384xbf16>, vector<384x128xbf16>, vector<56x128xf32> -> vector<56x128xf32>
    %c0_4 = arith.constant 0 : index
    %c0_5 = arith.constant 0 : index
    %23 = vector.load %arg3[%c0_4, %c0_5] : memref<1x128xf32, #tpu.memory_space<vmem>>, vector<1x128xf32>
    %24 = vector.broadcast %23 : vector<1x128xf32> to vector<56x128xf32>
    %25 = arith.addf %22, %24 : vector<56x128xf32>
    %cst_6 = arith.constant 0.000000e+00 : f32
    %26 = vector.broadcast %cst_6 : f32 to vector<56x128xf32>
    %27 = arith.maximumf %25, %26 : vector<56x128xf32>
    %28 = tpu.iota {dimensions = array<i32: 0>} : vector<56x128xi32>
    %c14_i32 = arith.constant 14 : i32
    %c0_i32 = arith.constant 0 : i32
    %29 = arith.cmpi eq, %c14_i32, %c0_i32 : i32
    %c1_i32 = arith.constant 1 : i32
    %30 = arith.select %29, %c1_i32, %c14_i32 : i32
    %31 = vector.broadcast %30 : i32 to vector<56x128xi32>
    %32 = arith.remsi %28, %31 : vector<56x128xi32>
    %c0_i32_7 = arith.constant 0 : i32
    %33 = vector.broadcast %c0_i32_7 : i32 to vector<56x128xi32>
    %34 = arith.cmpi ne, %32, %33 : vector<56x128xi32>
    %c0_i32_8 = arith.constant 0 : i32
    %35 = vector.broadcast %c0_i32_8 : i32 to vector<56x128xi32>
    %36 = arith.cmpi slt, %32, %35 : vector<56x128xi32>
    %c0_i32_9 = arith.constant 0 : i32
    %37 = arith.cmpi slt, %30, %c0_i32_9 : i32
    %38 = vector.broadcast %37 : i1 to vector<56x128xi1>
    %39 = vector.broadcast %38 : vector<56x128xi1> to vector<56x128xi1>
    %40 = arith.xori %36, %39 : vector<56x128xi1>
    %41 = arith.andi %40, %34 : vector<56x128xi1>
    %42 = vector.broadcast %30 : i32 to vector<56x128xi32>
    %43 = arith.addi %32, %42 : vector<56x128xi32>
    %44 = arith.select %41, %43, %32 : vector<56x128xi1>, vector<56x128xi32>
    %c0_i32_10 = arith.constant 0 : i32
    %45 = vector.broadcast %c0_i32_10 : i32 to vector<56x128xi32>
    %46 = arith.cmpi eq, %44, %45 : vector<56x128xi32>
    %cst_11 = arith.constant 0.000000e+00 : f32
    %47 = vector.broadcast %cst_11 : f32 to vector<1x128xf32>
    %48 = vector.extract_strided_slice %27 {offsets = [0, 0], sizes = [55, 128], strides = [1, 1]} : vector<56x128xf32> to vector<55x128xf32>
    %49 = tpu.concatenate %47, %48 in 0 : vector<1x128xf32>, vector<55x128xf32> -> vector<56x128xf32>
    %cst_12 = arith.constant 0.000000e+00 : f32
    %50 = vector.broadcast %cst_12 : f32 to vector<56x128xf32>
    %51 = arith.select %46, %50, %49 : vector<56x128xi1>, vector<56x128xf32>
    %c13_i32 = arith.constant 13 : i32
    %52 = vector.broadcast %c13_i32 : i32 to vector<56x128xi32>
    %53 = arith.cmpi eq, %44, %52 : vector<56x128xi32>
    %54 = vector.extract_strided_slice %27 {offsets = [1, 0], sizes = [55, 128], strides = [1, 1]} : vector<56x128xf32> to vector<55x128xf32>
    %cst_13 = arith.constant 0.000000e+00 : f32
    %55 = vector.broadcast %cst_13 : f32 to vector<1x128xf32>
    %56 = tpu.concatenate %54, %55 in 0 : vector<55x128xf32>, vector<1x128xf32> -> vector<56x128xf32>
    %cst_14 = arith.constant 0.000000e+00 : f32
    %57 = vector.broadcast %cst_14 : f32 to vector<56x128xf32>
    %58 = arith.select %53, %57, %56 : vector<56x128xi1>, vector<56x128xf32>
    %59 = arith.truncf %51 : vector<56x128xf32> to vector<56x128xbf16>
    %60 = arith.truncf %27 : vector<56x128xf32> to vector<56x128xbf16>
    %61 = arith.truncf %58 : vector<56x128xf32> to vector<56x128xbf16>
    %62 = tpu.concatenate %59, %60, %61 in 1 : vector<56x128xbf16>, vector<56x128xbf16>, vector<56x128xbf16> -> vector<56x384xbf16>
    %c0_15 = arith.constant 0 : index
    %c0_16 = arith.constant 0 : index
    %63 = vector.load %arg4[%c0_15, %c0_16] : memref<384x128xbf16, #tpu.memory_space<vmem>>, vector<384x128xbf16>
    %cst_17 = arith.constant dense<0.000000e+00> : vector<56x128xf32>
    %64 = tpu.matmul %62, %63, %cst_17 {dimension_numbers = #tpu.dot_dimension_numbers<[1], [0], [0], [1], [0, 0, 1, 1], [], []>} : vector<56x384xbf16>, vector<384x128xbf16>, vector<56x128xf32> -> vector<56x128xf32>
    %c0_18 = arith.constant 0 : index
    %c0_19 = arith.constant 0 : index
    %65 = vector.load %arg5[%c0_18, %c0_19] : memref<1x128xf32, #tpu.memory_space<vmem>>, vector<1x128xf32>
    %66 = vector.broadcast %65 : vector<1x128xf32> to vector<56x128xf32>
    %67 = arith.addf %64, %66 : vector<56x128xf32>
    %cst_20 = arith.constant 0.000000e+00 : f32
    %68 = vector.broadcast %cst_20 : f32 to vector<56x128xf32>
    %69 = arith.maximumf %67, %68 : vector<56x128xf32>
    %70 = tpu.iota {dimensions = array<i32: 0>} : vector<56x128xi32>
    %c14_i32_21 = arith.constant 14 : i32
    %c0_i32_22 = arith.constant 0 : i32
    %71 = arith.cmpi eq, %c14_i32_21, %c0_i32_22 : i32
    %c1_i32_23 = arith.constant 1 : i32
    %72 = arith.select %71, %c1_i32_23, %c14_i32_21 : i32
    %73 = vector.broadcast %72 : i32 to vector<56x128xi32>
    %74 = arith.remsi %70, %73 : vector<56x128xi32>
    %c0_i32_24 = arith.constant 0 : i32
    %75 = vector.broadcast %c0_i32_24 : i32 to vector<56x128xi32>
    %76 = arith.cmpi ne, %74, %75 : vector<56x128xi32>
    %c0_i32_25 = arith.constant 0 : i32
    %77 = vector.broadcast %c0_i32_25 : i32 to vector<56x128xi32>
    %78 = arith.cmpi slt, %74, %77 : vector<56x128xi32>
    %c0_i32_26 = arith.constant 0 : i32
    %79 = arith.cmpi slt, %72, %c0_i32_26 : i32
    %80 = vector.broadcast %79 : i1 to vector<56x128xi1>
    %81 = vector.broadcast %80 : vector<56x128xi1> to vector<56x128xi1>
    %82 = arith.xori %78, %81 : vector<56x128xi1>
    %83 = arith.andi %82, %76 : vector<56x128xi1>
    %84 = vector.broadcast %72 : i32 to vector<56x128xi32>
    %85 = arith.addi %74, %84 : vector<56x128xi32>
    %86 = arith.select %83, %85, %74 : vector<56x128xi1>, vector<56x128xi32>
    %c0_i32_27 = arith.constant 0 : i32
    %87 = vector.broadcast %c0_i32_27 : i32 to vector<56x128xi32>
    %88 = arith.cmpi eq, %86, %87 : vector<56x128xi32>
    %cst_28 = arith.constant 0.000000e+00 : f32
    %89 = vector.broadcast %cst_28 : f32 to vector<1x128xf32>
    %90 = vector.extract_strided_slice %69 {offsets = [0, 0], sizes = [55, 128], strides = [1, 1]} : vector<56x128xf32> to vector<55x128xf32>
    %91 = tpu.concatenate %89, %90 in 0 : vector<1x128xf32>, vector<55x128xf32> -> vector<56x128xf32>
    %cst_29 = arith.constant 0.000000e+00 : f32
    %92 = vector.broadcast %cst_29 : f32 to vector<56x128xf32>
    %93 = arith.select %88, %92, %91 : vector<56x128xi1>, vector<56x128xf32>
    %c13_i32_30 = arith.constant 13 : i32
    %94 = vector.broadcast %c13_i32_30 : i32 to vector<56x128xi32>
    %95 = arith.cmpi eq, %86, %94 : vector<56x128xi32>
    %96 = vector.extract_strided_slice %69 {offsets = [1, 0], sizes = [55, 128], strides = [1, 1]} : vector<56x128xf32> to vector<55x128xf32>
    %cst_31 = arith.constant 0.000000e+00 : f32
    %97 = vector.broadcast %cst_31 : f32 to vector<1x128xf32>
    %98 = tpu.concatenate %96, %97 in 0 : vector<55x128xf32>, vector<1x128xf32> -> vector<56x128xf32>
    %cst_32 = arith.constant 0.000000e+00 : f32
    %99 = vector.broadcast %cst_32 : f32 to vector<56x128xf32>
    %100 = arith.select %95, %99, %98 : vector<56x128xi1>, vector<56x128xf32>
    %101 = arith.truncf %93 : vector<56x128xf32> to vector<56x128xbf16>
    %102 = arith.truncf %69 : vector<56x128xf32> to vector<56x128xbf16>
    %103 = arith.truncf %100 : vector<56x128xf32> to vector<56x128xbf16>
    %104 = tpu.concatenate %101, %102, %103 in 1 : vector<56x128xbf16>, vector<56x128xbf16>, vector<56x128xbf16> -> vector<56x384xbf16>
    %c0_33 = arith.constant 0 : index
    %c0_34 = arith.constant 0 : index
    %105 = vector.load %arg4[%c0_33, %c0_34] : memref<384x128xbf16, #tpu.memory_space<vmem>>, vector<384x128xbf16>
    %cst_35 = arith.constant dense<0.000000e+00> : vector<56x128xf32>
    %106 = tpu.matmul %104, %105, %cst_35 {dimension_numbers = #tpu.dot_dimension_numbers<[1], [0], [0], [1], [0, 0, 1, 1], [], []>} : vector<56x384xbf16>, vector<384x128xbf16>, vector<56x128xf32> -> vector<56x128xf32>
    %c0_36 = arith.constant 0 : index
    %c0_37 = arith.constant 0 : index
    %107 = vector.load %arg5[%c0_36, %c0_37] : memref<1x128xf32, #tpu.memory_space<vmem>>, vector<1x128xf32>
    %108 = vector.broadcast %107 : vector<1x128xf32> to vector<56x128xf32>
    %109 = arith.addf %106, %108 : vector<56x128xf32>
    %110 = tpu.iota {dimensions = array<i32: 0>} : vector<56x128xi32>
    %c14_i32_38 = arith.constant 14 : i32
    %c0_i32_39 = arith.constant 0 : i32
    %111 = arith.cmpi eq, %c14_i32_38, %c0_i32_39 : i32
    %c1_i32_40 = arith.constant 1 : i32
    %112 = arith.select %111, %c1_i32_40, %c14_i32_38 : i32
    %113 = vector.broadcast %112 : i32 to vector<56x128xi32>
    %114 = arith.remsi %110, %113 : vector<56x128xi32>
    %c0_i32_41 = arith.constant 0 : i32
    %115 = vector.broadcast %c0_i32_41 : i32 to vector<56x128xi32>
    %116 = arith.cmpi ne, %114, %115 : vector<56x128xi32>
    %c0_i32_42 = arith.constant 0 : i32
    %117 = vector.broadcast %c0_i32_42 : i32 to vector<56x128xi32>
    %118 = arith.cmpi slt, %114, %117 : vector<56x128xi32>
    %c0_i32_43 = arith.constant 0 : i32
    %119 = arith.cmpi slt, %112, %c0_i32_43 : i32
    %120 = vector.broadcast %119 : i1 to vector<56x128xi1>
    %121 = vector.broadcast %120 : vector<56x128xi1> to vector<56x128xi1>
    %122 = arith.xori %118, %121 : vector<56x128xi1>
    %123 = arith.andi %122, %116 : vector<56x128xi1>
    %124 = vector.broadcast %112 : i32 to vector<56x128xi32>
    %125 = arith.addi %114, %124 : vector<56x128xi32>
    %126 = arith.select %123, %125, %114 : vector<56x128xi1>, vector<56x128xi32>
    %c13_i32_44 = arith.constant 13 : i32
    %127 = vector.broadcast %c13_i32_44 : i32 to vector<56x128xi32>
    %128 = arith.cmpi eq, %126, %127 : vector<56x128xi32>
    %129 = vector.extract_strided_slice %109 {offsets = [1, 0], sizes = [55, 128], strides = [1, 1]} : vector<56x128xf32> to vector<55x128xf32>
    %cst_45 = arith.constant 0.000000e+00 : f32
    %130 = vector.broadcast %cst_45 : f32 to vector<1x128xf32>
    %131 = tpu.concatenate %129, %130 in 0 : vector<55x128xf32>, vector<1x128xf32> -> vector<56x128xf32>
    %cst_46 = arith.constant 0.000000e+00 : f32
    %132 = vector.broadcast %cst_46 : f32 to vector<56x128xf32>
    %133 = arith.select %128, %132, %131 : vector<56x128xi1>, vector<56x128xf32>
    %c12_i32 = arith.constant 12 : i32
    %134 = vector.broadcast %c12_i32 : i32 to vector<56x128xi32>
    %135 = arith.cmpi sge, %126, %134 : vector<56x128xi32>
    %136 = vector.extract_strided_slice %109 {offsets = [2, 0], sizes = [54, 128], strides = [1, 1]} : vector<56x128xf32> to vector<54x128xf32>
    %cst_47 = arith.constant 0.000000e+00 : f32
    %137 = vector.broadcast %cst_47 : f32 to vector<2x128xf32>
    %138 = tpu.concatenate %136, %137 in 0 : vector<54x128xf32>, vector<2x128xf32> -> vector<56x128xf32>
    %cst_48 = arith.constant 0.000000e+00 : f32
    %139 = vector.broadcast %cst_48 : f32 to vector<56x128xf32>
    %140 = arith.select %135, %139, %138 : vector<56x128xi1>, vector<56x128xf32>
    %141 = arith.maximumf %109, %133 : vector<56x128xf32>
    %142 = arith.maximumf %141, %140 : vector<56x128xf32>
    %143 = vector.extract_strided_slice %142 {offsets = [0, 0], sizes = [1, 128], strides = [1, 1]} : vector<56x128xf32> to vector<1x128xf32>
    %144 = vector.extract_strided_slice %142 {offsets = [2, 0], sizes = [1, 128], strides = [1, 1]} : vector<56x128xf32> to vector<1x128xf32>
    %145 = vector.extract_strided_slice %142 {offsets = [4, 0], sizes = [1, 128], strides = [1, 1]} : vector<56x128xf32> to vector<1x128xf32>
    %146 = vector.extract_strided_slice %142 {offsets = [6, 0], sizes = [1, 128], strides = [1, 1]} : vector<56x128xf32> to vector<1x128xf32>
    %147 = vector.extract_strided_slice %142 {offsets = [8, 0], sizes = [1, 128], strides = [1, 1]} : vector<56x128xf32> to vector<1x128xf32>
    %148 = vector.extract_strided_slice %142 {offsets = [10, 0], sizes = [1, 128], strides = [1, 1]} : vector<56x128xf32> to vector<1x128xf32>
    %149 = vector.extract_strided_slice %142 {offsets = [12, 0], sizes = [1, 128], strides = [1, 1]} : vector<56x128xf32> to vector<1x128xf32>
    %150 = vector.extract_strided_slice %142 {offsets = [14, 0], sizes = [1, 128], strides = [1, 1]} : vector<56x128xf32> to vector<1x128xf32>
    %151 = vector.extract_strided_slice %142 {offsets = [16, 0], sizes = [1, 128], strides = [1, 1]} : vector<56x128xf32> to vector<1x128xf32>
    %152 = vector.extract_strided_slice %142 {offsets = [18, 0], sizes = [1, 128], strides = [1, 1]} : vector<56x128xf32> to vector<1x128xf32>
    %153 = vector.extract_strided_slice %142 {offsets = [20, 0], sizes = [1, 128], strides = [1, 1]} : vector<56x128xf32> to vector<1x128xf32>
    %154 = vector.extract_strided_slice %142 {offsets = [22, 0], sizes = [1, 128], strides = [1, 1]} : vector<56x128xf32> to vector<1x128xf32>
    %155 = vector.extract_strided_slice %142 {offsets = [24, 0], sizes = [1, 128], strides = [1, 1]} : vector<56x128xf32> to vector<1x128xf32>
    %156 = vector.extract_strided_slice %142 {offsets = [26, 0], sizes = [1, 128], strides = [1, 1]} : vector<56x128xf32> to vector<1x128xf32>
    %157 = vector.extract_strided_slice %142 {offsets = [28, 0], sizes = [1, 128], strides = [1, 1]} : vector<56x128xf32> to vector<1x128xf32>
    %158 = vector.extract_strided_slice %142 {offsets = [30, 0], sizes = [1, 128], strides = [1, 1]} : vector<56x128xf32> to vector<1x128xf32>
    %159 = vector.extract_strided_slice %142 {offsets = [32, 0], sizes = [1, 128], strides = [1, 1]} : vector<56x128xf32> to vector<1x128xf32>
    %160 = vector.extract_strided_slice %142 {offsets = [34, 0], sizes = [1, 128], strides = [1, 1]} : vector<56x128xf32> to vector<1x128xf32>
    %161 = vector.extract_strided_slice %142 {offsets = [36, 0], sizes = [1, 128], strides = [1, 1]} : vector<56x128xf32> to vector<1x128xf32>
    %162 = vector.extract_strided_slice %142 {offsets = [38, 0], sizes = [1, 128], strides = [1, 1]} : vector<56x128xf32> to vector<1x128xf32>
    %163 = vector.extract_strided_slice %142 {offsets = [40, 0], sizes = [1, 128], strides = [1, 1]} : vector<56x128xf32> to vector<1x128xf32>
    %164 = vector.extract_strided_slice %142 {offsets = [42, 0], sizes = [1, 128], strides = [1, 1]} : vector<56x128xf32> to vector<1x128xf32>
    %165 = vector.extract_strided_slice %142 {offsets = [44, 0], sizes = [1, 128], strides = [1, 1]} : vector<56x128xf32> to vector<1x128xf32>
    %166 = vector.extract_strided_slice %142 {offsets = [46, 0], sizes = [1, 128], strides = [1, 1]} : vector<56x128xf32> to vector<1x128xf32>
    %167 = vector.extract_strided_slice %142 {offsets = [48, 0], sizes = [1, 128], strides = [1, 1]} : vector<56x128xf32> to vector<1x128xf32>
    %168 = vector.extract_strided_slice %142 {offsets = [50, 0], sizes = [1, 128], strides = [1, 1]} : vector<56x128xf32> to vector<1x128xf32>
    %169 = vector.extract_strided_slice %142 {offsets = [52, 0], sizes = [1, 128], strides = [1, 1]} : vector<56x128xf32> to vector<1x128xf32>
    %170 = vector.extract_strided_slice %142 {offsets = [54, 0], sizes = [1, 128], strides = [1, 1]} : vector<56x128xf32> to vector<1x128xf32>
    %171 = tpu.concatenate %143, %144, %145, %146, %147, %148, %149, %150, %151, %152, %153, %154, %155, %156, %157, %158 in 0 : vector<1x128xf32>, vector<1x128xf32>, vector<1x128xf32>, vector<1x128xf32>, vector<1x128xf32>, vector<1x128xf32>, vector<1x128xf32>, vector<1x128xf32>, vector<1x128xf32>, vector<1x128xf32>, vector<1x128xf32>, vector<1x128xf32>, vector<1x128xf32>, vector<1x128xf32>, vector<1x128xf32>, vector<1x128xf32> -> vector<16x128xf32>
    %172 = tpu.concatenate %159, %160, %161, %162, %163, %164, %165, %166, %167, %168, %169, %170 in 0 : vector<1x128xf32>, vector<1x128xf32>, vector<1x128xf32>, vector<1x128xf32>, vector<1x128xf32>, vector<1x128xf32>, vector<1x128xf32>, vector<1x128xf32>, vector<1x128xf32>, vector<1x128xf32>, vector<1x128xf32>, vector<1x128xf32> -> vector<12x128xf32>
    %173 = tpu.concatenate %171, %172 in 0 : vector<16x128xf32>, vector<12x128xf32> -> vector<28x128xf32>
    %cst_49 = arith.constant 0.000000e+00 : f32
    %174 = vector.broadcast %cst_49 : f32 to vector<28x128xf32>
    %175 = arith.maximumf %173, %174 : vector<28x128xf32>
    %176 = tpu.iota {dimensions = array<i32: 0>} : vector<28x128xi32>
    %c7_i32 = arith.constant 7 : i32
    %c0_i32_50 = arith.constant 0 : i32
    %177 = arith.cmpi eq, %c7_i32, %c0_i32_50 : i32
    %c1_i32_51 = arith.constant 1 : i32
    %178 = arith.select %177, %c1_i32_51, %c7_i32 : i32
    %179 = vector.broadcast %178 : i32 to vector<28x128xi32>
    %180 = arith.remsi %176, %179 : vector<28x128xi32>
    %c0_i32_52 = arith.constant 0 : i32
    %181 = vector.broadcast %c0_i32_52 : i32 to vector<28x128xi32>
    %182 = arith.cmpi ne, %180, %181 : vector<28x128xi32>
    %c0_i32_53 = arith.constant 0 : i32
    %183 = vector.broadcast %c0_i32_53 : i32 to vector<28x128xi32>
    %184 = arith.cmpi slt, %180, %183 : vector<28x128xi32>
    %c0_i32_54 = arith.constant 0 : i32
    %185 = arith.cmpi slt, %178, %c0_i32_54 : i32
    %186 = vector.broadcast %185 : i1 to vector<28x128xi1>
    %187 = vector.broadcast %186 : vector<28x128xi1> to vector<28x128xi1>
    %188 = arith.xori %184, %187 : vector<28x128xi1>
    %189 = arith.andi %188, %182 : vector<28x128xi1>
    %190 = vector.broadcast %178 : i32 to vector<28x128xi32>
    %191 = arith.addi %180, %190 : vector<28x128xi32>
    %192 = arith.select %189, %191, %180 : vector<28x128xi1>, vector<28x128xi32>
    %c0_i32_55 = arith.constant 0 : i32
    %193 = vector.broadcast %c0_i32_55 : i32 to vector<28x128xi32>
    %194 = arith.cmpi eq, %192, %193 : vector<28x128xi32>
    %cst_56 = arith.constant 0.000000e+00 : f32
    %195 = vector.broadcast %cst_56 : f32 to vector<1x128xf32>
    %196 = vector.extract_strided_slice %175 {offsets = [0, 0], sizes = [27, 128], strides = [1, 1]} : vector<28x128xf32> to vector<27x128xf32>
    %197 = tpu.concatenate %195, %196 in 0 : vector<1x128xf32>, vector<27x128xf32> -> vector<28x128xf32>
    %cst_57 = arith.constant 0.000000e+00 : f32
    %198 = vector.broadcast %cst_57 : f32 to vector<28x128xf32>
    %199 = arith.select %194, %198, %197 : vector<28x128xi1>, vector<28x128xf32>
    %c6_i32 = arith.constant 6 : i32
    %200 = vector.broadcast %c6_i32 : i32 to vector<28x128xi32>
    %201 = arith.cmpi eq, %192, %200 : vector<28x128xi32>
    %202 = vector.extract_strided_slice %175 {offsets = [1, 0], sizes = [27, 128], strides = [1, 1]} : vector<28x128xf32> to vector<27x128xf32>
    %cst_58 = arith.constant 0.000000e+00 : f32
    %203 = vector.broadcast %cst_58 : f32 to vector<1x128xf32>
    %204 = tpu.concatenate %202, %203 in 0 : vector<27x128xf32>, vector<1x128xf32> -> vector<28x128xf32>
    %cst_59 = arith.constant 0.000000e+00 : f32
    %205 = vector.broadcast %cst_59 : f32 to vector<28x128xf32>
    %206 = arith.select %201, %205, %204 : vector<28x128xi1>, vector<28x128xf32>
    %207 = arith.truncf %199 : vector<28x128xf32> to vector<28x128xbf16>
    %208 = arith.truncf %175 : vector<28x128xf32> to vector<28x128xbf16>
    %209 = arith.truncf %206 : vector<28x128xf32> to vector<28x128xbf16>
    %210 = tpu.concatenate %207, %208, %209 in 1 : vector<28x128xbf16>, vector<28x128xbf16>, vector<28x128xbf16> -> vector<28x384xbf16>
    %c0_60 = arith.constant 0 : index
    %c0_61 = arith.constant 0 : index
    %211 = vector.load %arg4[%c0_60, %c0_61] : memref<384x128xbf16, #tpu.memory_space<vmem>>, vector<384x128xbf16>
    %cst_62 = arith.constant dense<0.000000e+00> : vector<28x128xf32>
    %212 = tpu.matmul %210, %211, %cst_62 {dimension_numbers = #tpu.dot_dimension_numbers<[1], [0], [0], [1], [0, 0, 1, 1], [], []>} : vector<28x384xbf16>, vector<384x128xbf16>, vector<28x128xf32> -> vector<28x128xf32>
    %c0_63 = arith.constant 0 : index
    %c0_64 = arith.constant 0 : index
    %213 = vector.load %arg5[%c0_63, %c0_64] : memref<1x128xf32, #tpu.memory_space<vmem>>, vector<1x128xf32>
    %214 = vector.broadcast %213 : vector<1x128xf32> to vector<28x128xf32>
    %215 = arith.addf %212, %214 : vector<28x128xf32>
    %cst_65 = arith.constant 0.000000e+00 : f32
    %216 = vector.broadcast %cst_65 : f32 to vector<28x128xf32>
    %217 = arith.maximumf %215, %216 : vector<28x128xf32>
    %218 = tpu.iota {dimensions = array<i32: 0>} : vector<28x128xi32>
    %c7_i32_66 = arith.constant 7 : i32
    %c0_i32_67 = arith.constant 0 : i32
    %219 = arith.cmpi eq, %c7_i32_66, %c0_i32_67 : i32
    %c1_i32_68 = arith.constant 1 : i32
    %220 = arith.select %219, %c1_i32_68, %c7_i32_66 : i32
    %221 = vector.broadcast %220 : i32 to vector<28x128xi32>
    %222 = arith.remsi %218, %221 : vector<28x128xi32>
    %c0_i32_69 = arith.constant 0 : i32
    %223 = vector.broadcast %c0_i32_69 : i32 to vector<28x128xi32>
    %224 = arith.cmpi ne, %222, %223 : vector<28x128xi32>
    %c0_i32_70 = arith.constant 0 : i32
    %225 = vector.broadcast %c0_i32_70 : i32 to vector<28x128xi32>
    %226 = arith.cmpi slt, %222, %225 : vector<28x128xi32>
    %c0_i32_71 = arith.constant 0 : i32
    %227 = arith.cmpi slt, %220, %c0_i32_71 : i32
    %228 = vector.broadcast %227 : i1 to vector<28x128xi1>
    %229 = vector.broadcast %228 : vector<28x128xi1> to vector<28x128xi1>
    %230 = arith.xori %226, %229 : vector<28x128xi1>
    %231 = arith.andi %230, %224 : vector<28x128xi1>
    %232 = vector.broadcast %220 : i32 to vector<28x128xi32>
    %233 = arith.addi %222, %232 : vector<28x128xi32>
    %234 = arith.select %231, %233, %222 : vector<28x128xi1>, vector<28x128xi32>
    %c0_i32_72 = arith.constant 0 : i32
    %235 = vector.broadcast %c0_i32_72 : i32 to vector<28x128xi32>
    %236 = arith.cmpi eq, %234, %235 : vector<28x128xi32>
    %cst_73 = arith.constant 0.000000e+00 : f32
    %237 = vector.broadcast %cst_73 : f32 to vector<1x128xf32>
    %238 = vector.extract_strided_slice %217 {offsets = [0, 0], sizes = [27, 128], strides = [1, 1]} : vector<28x128xf32> to vector<27x128xf32>
    %239 = tpu.concatenate %237, %238 in 0 : vector<1x128xf32>, vector<27x128xf32> -> vector<28x128xf32>
    %cst_74 = arith.constant 0.000000e+00 : f32
    %240 = vector.broadcast %cst_74 : f32 to vector<28x128xf32>
    %241 = arith.select %236, %240, %239 : vector<28x128xi1>, vector<28x128xf32>
    %c6_i32_75 = arith.constant 6 : i32
    %242 = vector.broadcast %c6_i32_75 : i32 to vector<28x128xi32>
    %243 = arith.cmpi eq, %234, %242 : vector<28x128xi32>
    %244 = vector.extract_strided_slice %217 {offsets = [1, 0], sizes = [27, 128], strides = [1, 1]} : vector<28x128xf32> to vector<27x128xf32>
    %cst_76 = arith.constant 0.000000e+00 : f32
    %245 = vector.broadcast %cst_76 : f32 to vector<1x128xf32>
    %246 = tpu.concatenate %244, %245 in 0 : vector<27x128xf32>, vector<1x128xf32> -> vector<28x128xf32>
    %cst_77 = arith.constant 0.000000e+00 : f32
    %247 = vector.broadcast %cst_77 : f32 to vector<28x128xf32>
    %248 = arith.select %243, %247, %246 : vector<28x128xi1>, vector<28x128xf32>
    %249 = arith.truncf %241 : vector<28x128xf32> to vector<28x128xbf16>
    %250 = arith.truncf %217 : vector<28x128xf32> to vector<28x128xbf16>
    %251 = arith.truncf %248 : vector<28x128xf32> to vector<28x128xbf16>
    %252 = tpu.concatenate %249, %250, %251 in 1 : vector<28x128xbf16>, vector<28x128xbf16>, vector<28x128xbf16> -> vector<28x384xbf16>
    %c0_78 = arith.constant 0 : index
    %c0_79 = arith.constant 0 : index
    %253 = vector.load %arg4[%c0_78, %c0_79] : memref<384x128xbf16, #tpu.memory_space<vmem>>, vector<384x128xbf16>
    %cst_80 = arith.constant dense<0.000000e+00> : vector<28x128xf32>
    %254 = tpu.matmul %252, %253, %cst_80 {dimension_numbers = #tpu.dot_dimension_numbers<[1], [0], [0], [1], [0, 0, 1, 1], [], []>} : vector<28x384xbf16>, vector<384x128xbf16>, vector<28x128xf32> -> vector<28x128xf32>
    %c0_81 = arith.constant 0 : index
    %c0_82 = arith.constant 0 : index
    %255 = vector.load %arg5[%c0_81, %c0_82] : memref<1x128xf32, #tpu.memory_space<vmem>>, vector<1x128xf32>
    %256 = vector.broadcast %255 : vector<1x128xf32> to vector<28x128xf32>
    %257 = arith.addf %254, %256 : vector<28x128xf32>
    %258 = arith.addf %257, %173 : vector<28x128xf32>
    %259 = tpu.iota {dimensions = array<i32: 0>} : vector<28x128xi32>
    %c7_i32_83 = arith.constant 7 : i32
    %c0_i32_84 = arith.constant 0 : i32
    %260 = arith.cmpi eq, %c7_i32_83, %c0_i32_84 : i32
    %c1_i32_85 = arith.constant 1 : i32
    %261 = arith.select %260, %c1_i32_85, %c7_i32_83 : i32
    %262 = vector.broadcast %261 : i32 to vector<28x128xi32>
    %263 = arith.remsi %259, %262 : vector<28x128xi32>
    %c0_i32_86 = arith.constant 0 : i32
    %264 = vector.broadcast %c0_i32_86 : i32 to vector<28x128xi32>
    %265 = arith.cmpi ne, %263, %264 : vector<28x128xi32>
    %c0_i32_87 = arith.constant 0 : i32
    %266 = vector.broadcast %c0_i32_87 : i32 to vector<28x128xi32>
    %267 = arith.cmpi slt, %263, %266 : vector<28x128xi32>
    %c0_i32_88 = arith.constant 0 : i32
    %268 = arith.cmpi slt, %261, %c0_i32_88 : i32
    %269 = vector.broadcast %268 : i1 to vector<28x128xi1>
    %270 = vector.broadcast %269 : vector<28x128xi1> to vector<28x128xi1>
    %271 = arith.xori %267, %270 : vector<28x128xi1>
    %272 = arith.andi %271, %265 : vector<28x128xi1>
    %273 = vector.broadcast %261 : i32 to vector<28x128xi32>
    %274 = arith.addi %263, %273 : vector<28x128xi32>
    %275 = arith.select %272, %274, %263 : vector<28x128xi1>, vector<28x128xi32>
    %c6_i32_89 = arith.constant 6 : i32
    %276 = vector.broadcast %c6_i32_89 : i32 to vector<28x128xi32>
    %277 = arith.cmpi eq, %275, %276 : vector<28x128xi32>
    %278 = vector.extract_strided_slice %258 {offsets = [1, 0], sizes = [27, 128], strides = [1, 1]} : vector<28x128xf32> to vector<27x128xf32>
    %cst_90 = arith.constant 0.000000e+00 : f32
    %279 = vector.broadcast %cst_90 : f32 to vector<1x128xf32>
    %280 = tpu.concatenate %278, %279 in 0 : vector<27x128xf32>, vector<1x128xf32> -> vector<28x128xf32>
    %cst_91 = arith.constant 0.000000e+00 : f32
    %281 = vector.broadcast %cst_91 : f32 to vector<28x128xf32>
    %282 = arith.select %277, %281, %280 : vector<28x128xi1>, vector<28x128xf32>
    %c5_i32 = arith.constant 5 : i32
    %283 = vector.broadcast %c5_i32 : i32 to vector<28x128xi32>
    %284 = arith.cmpi sge, %275, %283 : vector<28x128xi32>
    %285 = vector.extract_strided_slice %258 {offsets = [2, 0], sizes = [26, 128], strides = [1, 1]} : vector<28x128xf32> to vector<26x128xf32>
    %cst_92 = arith.constant 0.000000e+00 : f32
    %286 = vector.broadcast %cst_92 : f32 to vector<2x128xf32>
    %287 = tpu.concatenate %285, %286 in 0 : vector<26x128xf32>, vector<2x128xf32> -> vector<28x128xf32>
    %cst_93 = arith.constant 0.000000e+00 : f32
    %288 = vector.broadcast %cst_93 : f32 to vector<28x128xf32>
    %289 = arith.select %284, %288, %287 : vector<28x128xi1>, vector<28x128xf32>
    %290 = arith.maximumf %258, %282 : vector<28x128xf32>
    %291 = arith.maximumf %290, %289 : vector<28x128xf32>
    %292 = vector.extract_strided_slice %291 {offsets = [0, 0], sizes = [1, 128], strides = [1, 1]} : vector<28x128xf32> to vector<1x128xf32>
    %293 = vector.extract_strided_slice %291 {offsets = [2, 0], sizes = [1, 128], strides = [1, 1]} : vector<28x128xf32> to vector<1x128xf32>
    %294 = vector.extract_strided_slice %291 {offsets = [4, 0], sizes = [1, 128], strides = [1, 1]} : vector<28x128xf32> to vector<1x128xf32>
    %295 = vector.extract_strided_slice %291 {offsets = [7, 0], sizes = [1, 128], strides = [1, 1]} : vector<28x128xf32> to vector<1x128xf32>
    %296 = vector.extract_strided_slice %291 {offsets = [9, 0], sizes = [1, 128], strides = [1, 1]} : vector<28x128xf32> to vector<1x128xf32>
    %297 = vector.extract_strided_slice %291 {offsets = [11, 0], sizes = [1, 128], strides = [1, 1]} : vector<28x128xf32> to vector<1x128xf32>
    %298 = vector.extract_strided_slice %291 {offsets = [14, 0], sizes = [1, 128], strides = [1, 1]} : vector<28x128xf32> to vector<1x128xf32>
    %299 = vector.extract_strided_slice %291 {offsets = [16, 0], sizes = [1, 128], strides = [1, 1]} : vector<28x128xf32> to vector<1x128xf32>
    %300 = vector.extract_strided_slice %291 {offsets = [18, 0], sizes = [1, 128], strides = [1, 1]} : vector<28x128xf32> to vector<1x128xf32>
    %301 = vector.extract_strided_slice %291 {offsets = [21, 0], sizes = [1, 128], strides = [1, 1]} : vector<28x128xf32> to vector<1x128xf32>
    %302 = vector.extract_strided_slice %291 {offsets = [23, 0], sizes = [1, 128], strides = [1, 1]} : vector<28x128xf32> to vector<1x128xf32>
    %303 = vector.extract_strided_slice %291 {offsets = [25, 0], sizes = [1, 128], strides = [1, 1]} : vector<28x128xf32> to vector<1x128xf32>
    %304 = tpu.concatenate %292, %293, %294, %295, %296, %297, %298, %299, %300, %301, %302, %303 in 0 : vector<1x128xf32>, vector<1x128xf32>, vector<1x128xf32>, vector<1x128xf32>, vector<1x128xf32>, vector<1x128xf32>, vector<1x128xf32>, vector<1x128xf32>, vector<1x128xf32>, vector<1x128xf32>, vector<1x128xf32>, vector<1x128xf32> -> vector<12x128xf32>
    %cst_94 = arith.constant 0.000000e+00 : f32
    %305 = vector.broadcast %cst_94 : f32 to vector<12x128xf32>
    %306 = arith.maximumf %304, %305 : vector<12x128xf32>
    %307 = tpu.iota {dimensions = array<i32: 0>} : vector<12x128xi32>
    %c3_i32 = arith.constant 3 : i32
    %c0_i32_95 = arith.constant 0 : i32
    %308 = arith.cmpi eq, %c3_i32, %c0_i32_95 : i32
    %c1_i32_96 = arith.constant 1 : i32
    %309 = arith.select %308, %c1_i32_96, %c3_i32 : i32
    %310 = vector.broadcast %309 : i32 to vector<12x128xi32>
    %311 = arith.remsi %307, %310 : vector<12x128xi32>
    %c0_i32_97 = arith.constant 0 : i32
    %312 = vector.broadcast %c0_i32_97 : i32 to vector<12x128xi32>
    %313 = arith.cmpi ne, %311, %312 : vector<12x128xi32>
    %c0_i32_98 = arith.constant 0 : i32
    %314 = vector.broadcast %c0_i32_98 : i32 to vector<12x128xi32>
    %315 = arith.cmpi slt, %311, %314 : vector<12x128xi32>
    %c0_i32_99 = arith.constant 0 : i32
    %316 = arith.cmpi slt, %309, %c0_i32_99 : i32
    %317 = vector.broadcast %316 : i1 to vector<12x128xi1>
    %318 = vector.broadcast %317 : vector<12x128xi1> to vector<12x128xi1>
    %319 = arith.xori %315, %318 : vector<12x128xi1>
    %320 = arith.andi %319, %313 : vector<12x128xi1>
    %321 = vector.broadcast %309 : i32 to vector<12x128xi32>
    %322 = arith.addi %311, %321 : vector<12x128xi32>
    %323 = arith.select %320, %322, %311 : vector<12x128xi1>, vector<12x128xi32>
    %c0_i32_100 = arith.constant 0 : i32
    %324 = vector.broadcast %c0_i32_100 : i32 to vector<12x128xi32>
    %325 = arith.cmpi eq, %323, %324 : vector<12x128xi32>
    %cst_101 = arith.constant 0.000000e+00 : f32
    %326 = vector.broadcast %cst_101 : f32 to vector<1x128xf32>
    %327 = vector.extract_strided_slice %306 {offsets = [0, 0], sizes = [11, 128], strides = [1, 1]} : vector<12x128xf32> to vector<11x128xf32>
    %328 = tpu.concatenate %326, %327 in 0 : vector<1x128xf32>, vector<11x128xf32> -> vector<12x128xf32>
    %cst_102 = arith.constant 0.000000e+00 : f32
    %329 = vector.broadcast %cst_102 : f32 to vector<12x128xf32>
    %330 = arith.select %325, %329, %328 : vector<12x128xi1>, vector<12x128xf32>
    %c2_i32 = arith.constant 2 : i32
    %331 = vector.broadcast %c2_i32 : i32 to vector<12x128xi32>
    %332 = arith.cmpi eq, %323, %331 : vector<12x128xi32>
    %333 = vector.extract_strided_slice %306 {offsets = [1, 0], sizes = [11, 128], strides = [1, 1]} : vector<12x128xf32> to vector<11x128xf32>
    %cst_103 = arith.constant 0.000000e+00 : f32
    %334 = vector.broadcast %cst_103 : f32 to vector<1x128xf32>
    %335 = tpu.concatenate %333, %334 in 0 : vector<11x128xf32>, vector<1x128xf32> -> vector<12x128xf32>
    %cst_104 = arith.constant 0.000000e+00 : f32
    %336 = vector.broadcast %cst_104 : f32 to vector<12x128xf32>
    %337 = arith.select %332, %336, %335 : vector<12x128xi1>, vector<12x128xf32>
    %338 = arith.truncf %330 : vector<12x128xf32> to vector<12x128xbf16>
    %339 = arith.truncf %306 : vector<12x128xf32> to vector<12x128xbf16>
    %340 = arith.truncf %337 : vector<12x128xf32> to vector<12x128xbf16>
    %341 = tpu.concatenate %338, %339, %340 in 1 : vector<12x128xbf16>, vector<12x128xbf16>, vector<12x128xbf16> -> vector<12x384xbf16>
    %c0_105 = arith.constant 0 : index
    %c0_106 = arith.constant 0 : index
    %342 = vector.load %arg4[%c0_105, %c0_106] : memref<384x128xbf16, #tpu.memory_space<vmem>>, vector<384x128xbf16>
    %cst_107 = arith.constant dense<0.000000e+00> : vector<12x128xf32>
    %343 = tpu.matmul %341, %342, %cst_107 {dimension_numbers = #tpu.dot_dimension_numbers<[1], [0], [0], [1], [0, 0, 1, 1], [], []>} : vector<12x384xbf16>, vector<384x128xbf16>, vector<12x128xf32> -> vector<12x128xf32>
    %c0_108 = arith.constant 0 : index
    %c0_109 = arith.constant 0 : index
    %344 = vector.load %arg5[%c0_108, %c0_109] : memref<1x128xf32, #tpu.memory_space<vmem>>, vector<1x128xf32>
    %345 = vector.broadcast %344 : vector<1x128xf32> to vector<12x128xf32>
    %346 = arith.addf %343, %345 : vector<12x128xf32>
    %cst_110 = arith.constant 0.000000e+00 : f32
    %347 = vector.broadcast %cst_110 : f32 to vector<12x128xf32>
    %348 = arith.maximumf %346, %347 : vector<12x128xf32>
    %349 = tpu.iota {dimensions = array<i32: 0>} : vector<12x128xi32>
    %c3_i32_111 = arith.constant 3 : i32
    %c0_i32_112 = arith.constant 0 : i32
    %350 = arith.cmpi eq, %c3_i32_111, %c0_i32_112 : i32
    %c1_i32_113 = arith.constant 1 : i32
    %351 = arith.select %350, %c1_i32_113, %c3_i32_111 : i32
    %352 = vector.broadcast %351 : i32 to vector<12x128xi32>
    %353 = arith.remsi %349, %352 : vector<12x128xi32>
    %c0_i32_114 = arith.constant 0 : i32
    %354 = vector.broadcast %c0_i32_114 : i32 to vector<12x128xi32>
    %355 = arith.cmpi ne, %353, %354 : vector<12x128xi32>
    %c0_i32_115 = arith.constant 0 : i32
    %356 = vector.broadcast %c0_i32_115 : i32 to vector<12x128xi32>
    %357 = arith.cmpi slt, %353, %356 : vector<12x128xi32>
    %c0_i32_116 = arith.constant 0 : i32
    %358 = arith.cmpi slt, %351, %c0_i32_116 : i32
    %359 = vector.broadcast %358 : i1 to vector<12x128xi1>
    %360 = vector.broadcast %359 : vector<12x128xi1> to vector<12x128xi1>
    %361 = arith.xori %357, %360 : vector<12x128xi1>
    %362 = arith.andi %361, %355 : vector<12x128xi1>
    %363 = vector.broadcast %351 : i32 to vector<12x128xi32>
    %364 = arith.addi %353, %363 : vector<12x128xi32>
    %365 = arith.select %362, %364, %353 : vector<12x128xi1>, vector<12x128xi32>
    %c0_i32_117 = arith.constant 0 : i32
    %366 = vector.broadcast %c0_i32_117 : i32 to vector<12x128xi32>
    %367 = arith.cmpi eq, %365, %366 : vector<12x128xi32>
    %cst_118 = arith.constant 0.000000e+00 : f32
    %368 = vector.broadcast %cst_118 : f32 to vector<1x128xf32>
    %369 = vector.extract_strided_slice %348 {offsets = [0, 0], sizes = [11, 128], strides = [1, 1]} : vector<12x128xf32> to vector<11x128xf32>
    %370 = tpu.concatenate %368, %369 in 0 : vector<1x128xf32>, vector<11x128xf32> -> vector<12x128xf32>
    %cst_119 = arith.constant 0.000000e+00 : f32
    %371 = vector.broadcast %cst_119 : f32 to vector<12x128xf32>
    %372 = arith.select %367, %371, %370 : vector<12x128xi1>, vector<12x128xf32>
    %c2_i32_120 = arith.constant 2 : i32
    %373 = vector.broadcast %c2_i32_120 : i32 to vector<12x128xi32>
    %374 = arith.cmpi eq, %365, %373 : vector<12x128xi32>
    %375 = vector.extract_strided_slice %348 {offsets = [1, 0], sizes = [11, 128], strides = [1, 1]} : vector<12x128xf32> to vector<11x128xf32>
    %cst_121 = arith.constant 0.000000e+00 : f32
    %376 = vector.broadcast %cst_121 : f32 to vector<1x128xf32>
    %377 = tpu.concatenate %375, %376 in 0 : vector<11x128xf32>, vector<1x128xf32> -> vector<12x128xf32>
    %cst_122 = arith.constant 0.000000e+00 : f32
    %378 = vector.broadcast %cst_122 : f32 to vector<12x128xf32>
    %379 = arith.select %374, %378, %377 : vector<12x128xi1>, vector<12x128xf32>
    %380 = arith.truncf %372 : vector<12x128xf32> to vector<12x128xbf16>
    %381 = arith.truncf %348 : vector<12x128xf32> to vector<12x128xbf16>
    %382 = arith.truncf %379 : vector<12x128xf32> to vector<12x128xbf16>
    %383 = tpu.concatenate %380, %381, %382 in 1 : vector<12x128xbf16>, vector<12x128xbf16>, vector<12x128xbf16> -> vector<12x384xbf16>
    %c0_123 = arith.constant 0 : index
    %c0_124 = arith.constant 0 : index
    %384 = vector.load %arg4[%c0_123, %c0_124] : memref<384x128xbf16, #tpu.memory_space<vmem>>, vector<384x128xbf16>
    %cst_125 = arith.constant dense<0.000000e+00> : vector<12x128xf32>
    %385 = tpu.matmul %383, %384, %cst_125 {dimension_numbers = #tpu.dot_dimension_numbers<[1], [0], [0], [1], [0, 0, 1, 1], [], []>} : vector<12x384xbf16>, vector<384x128xbf16>, vector<12x128xf32> -> vector<12x128xf32>
    %c0_126 = arith.constant 0 : index
    %c0_127 = arith.constant 0 : index
    %386 = vector.load %arg5[%c0_126, %c0_127] : memref<1x128xf32, #tpu.memory_space<vmem>>, vector<1x128xf32>
    %387 = vector.broadcast %386 : vector<1x128xf32> to vector<12x128xf32>
    %388 = arith.addf %385, %387 : vector<12x128xf32>
    %389 = arith.addf %388, %304 : vector<12x128xf32>
    %390 = tpu.iota {dimensions = array<i32: 0>} : vector<12x128xi32>
    %c3_i32_128 = arith.constant 3 : i32
    %c0_i32_129 = arith.constant 0 : i32
    %391 = arith.cmpi eq, %c3_i32_128, %c0_i32_129 : i32
    %c1_i32_130 = arith.constant 1 : i32
    %392 = arith.select %391, %c1_i32_130, %c3_i32_128 : i32
    %393 = vector.broadcast %392 : i32 to vector<12x128xi32>
    %394 = arith.remsi %390, %393 : vector<12x128xi32>
    %c0_i32_131 = arith.constant 0 : i32
    %395 = vector.broadcast %c0_i32_131 : i32 to vector<12x128xi32>
    %396 = arith.cmpi ne, %394, %395 : vector<12x128xi32>
    %c0_i32_132 = arith.constant 0 : i32
    %397 = vector.broadcast %c0_i32_132 : i32 to vector<12x128xi32>
    %398 = arith.cmpi slt, %394, %397 : vector<12x128xi32>
    %c0_i32_133 = arith.constant 0 : i32
    %399 = arith.cmpi slt, %392, %c0_i32_133 : i32
    %400 = vector.broadcast %399 : i1 to vector<12x128xi1>
    %401 = vector.broadcast %400 : vector<12x128xi1> to vector<12x128xi1>
    %402 = arith.xori %398, %401 : vector<12x128xi1>
    %403 = arith.andi %402, %396 : vector<12x128xi1>
    %404 = vector.broadcast %392 : i32 to vector<12x128xi32>
    %405 = arith.addi %394, %404 : vector<12x128xi32>
    %406 = arith.select %403, %405, %394 : vector<12x128xi1>, vector<12x128xi32>
    %c2_i32_134 = arith.constant 2 : i32
    %407 = vector.broadcast %c2_i32_134 : i32 to vector<12x128xi32>
    %408 = arith.cmpi eq, %406, %407 : vector<12x128xi32>
    %409 = vector.extract_strided_slice %389 {offsets = [1, 0], sizes = [11, 128], strides = [1, 1]} : vector<12x128xf32> to vector<11x128xf32>
    %cst_135 = arith.constant 0.000000e+00 : f32
    %410 = vector.broadcast %cst_135 : f32 to vector<1x128xf32>
    %411 = tpu.concatenate %409, %410 in 0 : vector<11x128xf32>, vector<1x128xf32> -> vector<12x128xf32>
    %cst_136 = arith.constant 0.000000e+00 : f32
    %412 = vector.broadcast %cst_136 : f32 to vector<12x128xf32>
    %413 = arith.select %408, %412, %411 : vector<12x128xi1>, vector<12x128xf32>
    %c1_i32_137 = arith.constant 1 : i32
    %414 = vector.broadcast %c1_i32_137 : i32 to vector<12x128xi32>
    %415 = arith.cmpi sge, %406, %414 : vector<12x128xi32>
    %416 = vector.extract_strided_slice %389 {offsets = [2, 0], sizes = [10, 128], strides = [1, 1]} : vector<12x128xf32> to vector<10x128xf32>
    %cst_138 = arith.constant 0.000000e+00 : f32
    %417 = vector.broadcast %cst_138 : f32 to vector<2x128xf32>
    %418 = tpu.concatenate %416, %417 in 0 : vector<10x128xf32>, vector<2x128xf32> -> vector<12x128xf32>
    %cst_139 = arith.constant 0.000000e+00 : f32
    %419 = vector.broadcast %cst_139 : f32 to vector<12x128xf32>
    %420 = arith.select %415, %419, %418 : vector<12x128xi1>, vector<12x128xf32>
    %421 = arith.maximumf %389, %413 : vector<12x128xf32>
    %422 = arith.maximumf %421, %420 : vector<12x128xf32>
    %423 = vector.extract_strided_slice %422 {offsets = [0, 0], sizes = [1, 128], strides = [1, 1]} : vector<12x128xf32> to vector<1x128xf32>
    %424 = vector.extract_strided_slice %422 {offsets = [3, 0], sizes = [1, 128], strides = [1, 1]} : vector<12x128xf32> to vector<1x128xf32>
    %425 = vector.extract_strided_slice %422 {offsets = [6, 0], sizes = [1, 128], strides = [1, 1]} : vector<12x128xf32> to vector<1x128xf32>
    %426 = vector.extract_strided_slice %422 {offsets = [9, 0], sizes = [1, 128], strides = [1, 1]} : vector<12x128xf32> to vector<1x128xf32>
    %427 = tpu.concatenate %423, %424, %425, %426 in 0 : vector<1x128xf32>, vector<1x128xf32>, vector<1x128xf32>, vector<1x128xf32> -> vector<4x128xf32>
    %cst_140 = arith.constant 0.000000e+00 : f32
    %428 = vector.broadcast %cst_140 : f32 to vector<4x128xf32>
    %429 = arith.maximumf %427, %428 : vector<4x128xf32>
    %cst_141 = arith.constant 0.000000e+00 : f32
    %430 = vector.broadcast %cst_141 : f32 to vector<4x128xf32>
    %cst_142 = arith.constant 0.000000e+00 : f32
    %431 = vector.broadcast %cst_142 : f32 to vector<4x128xf32>
    %432 = arith.truncf %430 : vector<4x128xf32> to vector<4x128xbf16>
    %433 = arith.truncf %429 : vector<4x128xf32> to vector<4x128xbf16>
    %434 = arith.truncf %431 : vector<4x128xf32> to vector<4x128xbf16>
    %435 = tpu.concatenate %432, %433, %434 in 1 : vector<4x128xbf16>, vector<4x128xbf16>, vector<4x128xbf16> -> vector<4x384xbf16>
    %c0_143 = arith.constant 0 : index
    %c0_144 = arith.constant 0 : index
    %436 = vector.load %arg4[%c0_143, %c0_144] : memref<384x128xbf16, #tpu.memory_space<vmem>>, vector<384x128xbf16>
    %cst_145 = arith.constant dense<0.000000e+00> : vector<4x128xf32>
    %437 = tpu.matmul %435, %436, %cst_145 {dimension_numbers = #tpu.dot_dimension_numbers<[1], [0], [0], [1], [0, 0, 1, 1], [], []>} : vector<4x384xbf16>, vector<384x128xbf16>, vector<4x128xf32> -> vector<4x128xf32>
    %c0_146 = arith.constant 0 : index
    %c0_147 = arith.constant 0 : index
    %438 = vector.load %arg5[%c0_146, %c0_147] : memref<1x128xf32, #tpu.memory_space<vmem>>, vector<1x128xf32>
    %439 = vector.broadcast %438 : vector<1x128xf32> to vector<4x128xf32>
    %440 = arith.addf %437, %439 : vector<4x128xf32>
    %cst_148 = arith.constant 0.000000e+00 : f32
    %441 = vector.broadcast %cst_148 : f32 to vector<4x128xf32>
    %442 = arith.maximumf %440, %441 : vector<4x128xf32>
    %cst_149 = arith.constant 0.000000e+00 : f32
    %443 = vector.broadcast %cst_149 : f32 to vector<4x128xf32>
    %cst_150 = arith.constant 0.000000e+00 : f32
    %444 = vector.broadcast %cst_150 : f32 to vector<4x128xf32>
    %445 = arith.truncf %443 : vector<4x128xf32> to vector<4x128xbf16>
    %446 = arith.truncf %442 : vector<4x128xf32> to vector<4x128xbf16>
    %447 = arith.truncf %444 : vector<4x128xf32> to vector<4x128xbf16>
    %448 = tpu.concatenate %445, %446, %447 in 1 : vector<4x128xbf16>, vector<4x128xbf16>, vector<4x128xbf16> -> vector<4x384xbf16>
    %c0_151 = arith.constant 0 : index
    %c0_152 = arith.constant 0 : index
    %449 = vector.load %arg4[%c0_151, %c0_152] : memref<384x128xbf16, #tpu.memory_space<vmem>>, vector<384x128xbf16>
    %cst_153 = arith.constant dense<0.000000e+00> : vector<4x128xf32>
    %450 = tpu.matmul %448, %449, %cst_153 {dimension_numbers = #tpu.dot_dimension_numbers<[1], [0], [0], [1], [0, 0, 1, 1], [], []>} : vector<4x384xbf16>, vector<384x128xbf16>, vector<4x128xf32> -> vector<4x128xf32>
    %c0_154 = arith.constant 0 : index
    %c0_155 = arith.constant 0 : index
    %451 = vector.load %arg5[%c0_154, %c0_155] : memref<1x128xf32, #tpu.memory_space<vmem>>, vector<1x128xf32>
    %452 = vector.broadcast %451 : vector<1x128xf32> to vector<4x128xf32>
    %453 = arith.addf %450, %452 : vector<4x128xf32>
    %454 = arith.addf %453, %427 : vector<4x128xf32>
    %455 = arith.truncf %454 : vector<4x128xf32> to vector<4x128xbf16>
    %c0_156 = arith.constant 0 : index
    %c0_157 = arith.constant 0 : index
    %456 = vector.load %arg6[%c0_156, %c0_157] : memref<128x128xbf16, #tpu.memory_space<vmem>>, vector<128x128xbf16>
    %cst_158 = arith.constant dense<0.000000e+00> : vector<4x128xf32>
    %457 = tpu.matmul %455, %456, %cst_158 {dimension_numbers = #tpu.dot_dimension_numbers<[1], [0], [0], [1], [0, 0, 1, 1], [], []>} : vector<4x128xbf16>, vector<128x128xbf16>, vector<4x128xf32> -> vector<4x128xf32>
    %c0_159 = arith.constant 0 : index
    %c0_160 = arith.constant 0 : index
    %458 = vector.load %arg7[%c0_159, %c0_160] : memref<1x128xf32, #tpu.memory_space<vmem>>, vector<1x128xf32>
    %459 = vector.broadcast %458 : vector<1x128xf32> to vector<4x128xf32>
    %460 = arith.addf %457, %459 : vector<4x128xf32>
    %c0_161 = arith.constant 0 : index
    %c0_162 = arith.constant 0 : index
    %c0_163 = arith.constant 0 : index
    %461 = vector.load %arg8[%c0_161, %c0_162, %c0_163] : memref<1x4x128xf32, #tpu.memory_space<vmem>>, vector<1x4x128xf32>
    %462 = vector.shape_cast %461 : vector<1x4x128xf32> to vector<4x128xf32>
    %463 = vector.shape_cast %460 : vector<4x128xf32> to vector<1x4x128xf32>
    tpu.vector_store %arg8[%c0_161, %c0_162, %c0_163], %463 {strides = array<i32>} : memref<1x4x128xf32, #tpu.memory_space<vmem>>, vector<1x4x128xf32>,
    return
  }
  func.func @transform_0(%arg0: i32) -> (i32, i32, i32) {
    %c0_i32 = arith.constant 0 : i32
    %c0_i32_0 = arith.constant 0 : i32
    %c0_i32_1 = arith.constant 0 : i32
    return %arg0, %c0_i32, %c0_i32_0 : i32, i32, i32
  }
  func.func @transform_1(%arg0: i32) -> (i32, i32) {
    %c0_i32 = arith.constant 0 : i32
    %c0_i32_0 = arith.constant 0 : i32
    %c0_i32_1 = arith.constant 0 : i32
    return %c0_i32, %c0_i32_0 : i32, i32
  }
  func.func @transform_2(%arg0: i32) -> (i32, i32) {
    %c0_i32 = arith.constant 0 : i32
    %c0_i32_0 = arith.constant 0 : i32
    %c0_i32_1 = arith.constant 0 : i32
    return %c0_i32, %c0_i32_0 : i32, i32
  }
  func.func @transform_3(%arg0: i32) -> (i32, i32) {
    %c0_i32 = arith.constant 0 : i32
    %c0_i32_0 = arith.constant 0 : i32
    %c0_i32_1 = arith.constant 0 : i32
    return %c0_i32, %c0_i32_0 : i32, i32
  }
  func.func @transform_4(%arg0: i32) -> (i32, i32) {
    %c0_i32 = arith.constant 0 : i32
    %c0_i32_0 = arith.constant 0 : i32
    %c0_i32_1 = arith.constant 0 : i32
    return %c0_i32, %c0_i32_0 : i32, i32
  }
  func.func @transform_5(%arg0: i32) -> (i32, i32) {
    %c0_i32 = arith.constant 0 : i32
    %c0_i32_0 = arith.constant 0 : i32
    %c0_i32_1 = arith.constant 0 : i32
    return %c0_i32, %c0_i32_0 : i32, i32
  }
  func.func @transform_6(%arg0: i32) -> (i32, i32) {
    %c0_i32 = arith.constant 0 : i32
    %c0_i32_0 = arith.constant 0 : i32
    %c0_i32_1 = arith.constant 0 : i32
    return %c0_i32, %c0_i32_0 : i32, i32
  }
  func.func @transform_7(%arg0: i32) -> (i32, i32, i32) {
    %c0_i32 = arith.constant 0 : i32
    %c0_i32_0 = arith.constant 0 : i32
    %c0_i32_1 = arith.constant 0 : i32
    return %arg0, %c0_i32, %c0_i32_0 : i32, i32, i32
  }
}

</mosaic_0001>

<llo_original>
// kernel: dpcnn_forward.1
$region0: #{dpcnn_forward.1}
  #allocation0 [shape = 'u32[]', space=smem, size = 0x4, offset = 0x4, fixed_abs, tag = 'smem constant byte address 0x4 - core index']
  #allocation1 [shape = 'u32[144,128]{1,0:T(1,128)}', space=vmem, size = 0x12000, scoped, tag = 'internal scratch']
  %s0 = inlined_call_operand.vmem [shape: f32[2,64,128], index: 0, kind: input, shape index: {}]
  %s1 = inlined_call_operand.vmem [shape: bf16[384,128], index: 1, kind: input, shape index: {}]
  %s2 = inlined_call_operand.vmem [shape: f32[1,128], index: 2, kind: input, shape index: {}]
  %s3 = inlined_call_operand.hbm [shape: bf16[384,128], index: 3, kind: input, shape index: {}]
  %s4 = inlined_call_operand.vmem [shape: f32[1,128], index: 4, kind: input, shape index: {}]
  %s5 = inlined_call_operand.vmem [shape: bf16[128,128], index: 5, kind: input, shape index: {}]
  %s6 = inlined_call_operand.vmem [shape: f32[1,128], index: 6, kind: input, shape index: {}]
  %s7 = inlined_call_operand.vmem [shape: f32[2,4,128], index: 7, kind: output, shape index: {}]
  %s8 = sld [smem:[#allocation0]]
  $region65: #{dpcnn_forward.1} parent=0
    _
  %s10 = ssub.s32 1, %s8
  %s11 = scalar_select 0, %s10, %s8
  $region1: #{dpcnn_forward.1} parent=0
    #allocation2 [shape = 'u8[98304]{0}', space=vmem, size = 0x18000, scoped, tag = 'input window, operand 3, single buffered']
    #allocation3 [shape = 's32[2]{0}', space=sflag, size = 0x8, scoped, tag = 'scoped memory for dpcnn_forward.1']
    %12 = vsyncpa [#allocation3], 0
    loop: start=0, step=1, limit=4
    $region2: #{dpcnn_forward.1} parent=1 // loop_pre_header
      _
    $region3: #{dpcnn_forward.1} parent=1 // loop_header
      %s14 = sphi 0, %s18
      %p15 = scmp.ge.s32.totalorder %s14, 4
      %s24 = sphi 0, %s26
      %s27 = sphi 0, %s24
      %s28 = sphi 0, %s27
      %s44 = sphi 0, %s28
      %s48 = sphi 0, %s48
      %s50 = sphi 0, %s48
      %s51 = sphi 0, %s50
      %s65 = sphi 0, %s51
      %s69 = sphi 0, %s69
      %s71 = sphi 0, %s69
      %s72 = sphi 0, %s71
      %s86 = sphi 0, %s72
      %s90 = sphi 0, %s90
      %s92 = sphi 0, %s90
      %s93 = sphi 0, %s92
      %s107 = sphi 0, %s93
      %s111 = sphi 0, %s111
      %s113 = sphi 0, %s111
      %s114 = sphi 0, %s113
      %s128 = sphi 0, %s114
      %s132 = sphi 0, %s132
      %s134 = sphi 0, %s132
      %s135 = sphi 0, %s134
      %s149 = sphi 0, %s135
      %s153 = sphi 0, %s153
      %s155 = sphi 0, %s153
      %s156 = sphi 0, %s155
      %s170 = sphi 0, %s156
      %s176 = sphi 0, %s178
      %s179 = sphi 0, %s176
      %s180 = sphi 0, %s179
      %s196 = sphi 0, %s180
    $region4: #{dpcnn_forward.1} parent=1 // loop_header_branch
      %17 = sbr.rel (%p15) target = $region8
    $region5: #{dpcnn_forward.1} parent=1 // loop_body
      %s19 = ssub.s32 %s14, 1
      %s20 = ssub.s32 %s14, 2
      %s21 = sadd.s32 %s14, 1
      %s22 = ssub.s32 %s14, %s21
      %p23 = scmp.eq.s32.totalorder %s22, 0
      %s25 = sadd.s32 %s24, 1
      %s26 = scalar_select %p23, %s24, %s25
      %p29 = pneg %p23
      %p30 = scmp.eq.s32.totalorder %s14, 1
      %p31 = por %p29, %p30
      %p32 = scmp.ne.s32.totalorder %s24, %s27
      %p33 = scmp.eq.s32.totalorder %s14, 0
      %p34 = por %p32, %p33
      %p35 = scmp.ne.s32.totalorder %s24, %s27
      %p36 = scmp.eq.s32.totalorder %s19, 1
      %p37 = por %p35, %p36
      %p38 = scmp.ne.s32.totalorder %s27, %s28
      %p39 = scmp.eq.s32.totalorder %s19, 0
      %p40 = por %p38, %p39
      %p41 = scmp.ne.s32.totalorder %s27, %s28
      %p42 = scmp.eq.s32.totalorder %s20, 1
      %p43 = por %p41, %p42
      %p45 = scmp.ne.s32.totalorder %s28, %s44
      %p46 = scmp.eq.s32.totalorder %s20, 0
      %p47 = por %p45, %p46
      %s49 = sadd.s32 %s48, 1
      %p52 = scmp.eq.s32.totalorder %s14, 1
      %p53 = scmp.ne.s32.totalorder %s48, %s50
      %p54 = scmp.eq.s32.totalorder %s14, 0
      %p55 = por %p53, %p54
      %p56 = scmp.ne.s32.totalorder %s48, %s50
      %p57 = scmp.eq.s32.totalorder %s19, 1
      %p58 = por %p56, %p57
      %p59 = scmp.ne.s32.totalorder %s50, %s51
      %p60 = scmp.eq.s32.totalorder %s19, 0
      %p61 = por %p59, %p60
      %p62 = scmp.ne.s32.totalorder %s50, %s51
      %p63 = scmp.eq.s32.totalorder %s20, 1
      %p64 = por %p62, %p63
      %p66 = scmp.ne.s32.totalorder %s51, %s65
      %p67 = scmp.eq.s32.totalorder %s20, 0
      %p68 = por %p66, %p67
      %s70 = sadd.s32 %s69, 1
      %p73 = scmp.eq.s32.totalorder %s14, 1
      %p74 = scmp.ne.s32.totalorder %s69, %s71
      %p75 = scmp.eq.s32.totalorder %s14, 0
      %p76 = por %p74, %p75
      %p77 = scmp.ne.s32.totalorder %s69, %s71
      %p78 = scmp.eq.s32.totalorder %s19, 1
      %p79 = por %p77, %p78
      %p80 = scmp.ne.s32.totalorder %s71, %s72
      %p81 = scmp.eq.s32.totalorder %s19, 0
      %p82 = por %p80, %p81
      %p83 = scmp.ne.s32.totalorder %s71, %s72
      %p84 = scmp.eq.s32.totalorder %s20, 1
      %p85 = por %p83, %p84
      %p87 = scmp.ne.s32.totalorder %s72, %s86
      %p88 = scmp.eq.s32.totalorder %s20, 0
      %p89 = por %p87, %p88
      %s91 = sadd.s32 %s90, 1
      %p94 = scmp.eq.s32.totalorder %s14, 1
      %p95 = scmp.ne.s32.totalorder %s90, %s92
      %p96 = scmp.eq.s32.totalorder %s14, 0
      %p97 = por %p95, %p96
      %p98 = scmp.ne.s32.totalorder %s90, %s92
      %p99 = scmp.eq.s32.totalorder %s19, 1
      %p100 = por %p98, %p99
      %p101 = scmp.ne.s32.totalorder %s92, %s93
      %p102 = scmp.eq.s32.totalorder %s19, 0
      %p103 = por %p101, %p102
      %p104 = scmp.ne.s32.totalorder %s92, %s93
      %p105 = scmp.eq.s32.totalorder %s20, 1
      %p106 = por %p104, %p105
      %p108 = scmp.ne.s32.totalorder %s93, %s107
      %p109 = scmp.eq.s32.totalorder %s20, 0
      %p110 = por %p108, %p109
      %s112 = sadd.s32 %s111, 1
      %p115 = scmp.eq.s32.totalorder %s14, 1
      %p116 = scmp.ne.s32.totalorder %s111, %s113
      %p117 = scmp.eq.s32.totalorder %s14, 0
      %p118 = por %p116, %p117
      %p119 = scmp.ne.s32.totalorder %s111, %s113
      %p120 = scmp.eq.s32.totalorder %s19, 1
      %p121 = por %p119, %p120
      %p122 = scmp.ne.s32.totalorder %s113, %s114
      %p123 = scmp.eq.s32.totalorder %s19, 0
      %p124 = por %p122, %p123
      %p125 = scmp.ne.s32.totalorder %s113, %s114
      %p126 = scmp.eq.s32.totalorder %s20, 1
      %p127 = por %p125, %p126
      %p129 = scmp.ne.s32.totalorder %s114, %s128
      %p130 = scmp.eq.s32.totalorder %s20, 0
      %p131 = por %p129, %p130
      %s133 = sadd.s32 %s132, 1
      %p136 = scmp.eq.s32.totalorder %s14, 1
      %p137 = scmp.ne.s32.totalorder %s132, %s134
      %p138 = scmp.eq.s32.totalorder %s14, 0
      %p139 = por %p137, %p138
      %p140 = scmp.ne.s32.totalorder %s132, %s134
      %p141 = scmp.eq.s32.totalorder %s19, 1
      %p142 = por %p140, %p141
      %p143 = scmp.ne.s32.totalorder %s134, %s135
      %p144 = scmp.eq.s32.totalorder %s19, 0
      %p145 = por %p143, %p144
      %p146 = scmp.ne.s32.totalorder %s134, %s135
      %p147 = scmp.eq.s32.totalorder %s20, 1
      %p148 = por %p146, %p147
      %p150 = scmp.ne.s32.totalorder %s135, %s149
      %p151 = scmp.eq.s32.totalorder %s20, 0
      %p152 = por %p150, %p151
      %s154 = sadd.s32 %s153, 1
      %p157 = scmp.eq.s32.totalorder %s14, 1
      %p158 = scmp.ne.s32.totalorder %s153, %s155
      %p159 = scmp.eq.s32.totalorder %s14, 0
      %p160 = por %p158, %p159
      %p161 = scmp.ne.s32.totalorder %s153, %s155
      %p162 = scmp.eq.s32.totalorder %s19, 1
      %p163 = por %p161, %p162
      %p164 = scmp.ne.s32.totalorder %s155, %s156
      %p165 = scmp.eq.s32.totalorder %s19, 0
      %p166 = por %p164, %p165
      %p167 = scmp.ne.s32.totalorder %s155, %s156
      %p168 = scmp.eq.s32.totalorder %s20, 1
      %p169 = por %p167, %p168
      %p171 = scmp.ne.s32.totalorder %s156, %s170
      %p172 = scmp.eq.s32.totalorder %s20, 0
      %p173 = por %p171, %p172
      %s174 = ssub.s32 %s14, %s21
      %p175 = scmp.eq.s32.totalorder %s174, 0
      %s177 = sadd.s32 %s176, 1
      %s178 = scalar_select %p175, %s176, %s177
      %p181 = pneg %p175
      %p182 = scmp.eq.s32.totalorder %s14, 1
      %p183 = por %p181, %p182
      %p184 = scmp.ne.s32.totalorder %s176, %s179
      %p185 = scmp.eq.s32.totalorder %s14, 0
      %p186 = por %p184, %p185
      %p187 = scmp.ne.s32.totalorder %s176, %s179
      %p188 = scmp.eq.s32.totalorder %s19, 1
      %p189 = por %p187, %p188
      %p190 = scmp.ne.s32.totalorder %s179, %s180
      %p191 = scmp.eq.s32.totalorder %s19, 0
      %p192 = por %p190, %p191
      %p193 = scmp.ne.s32.totalorder %s179, %s180
      %p194 = scmp.eq.s32.totalorder %s20, 1
      %p195 = por %p193, %p194
      %p197 = scmp.ne.s32.totalorder %s180, %s196
      %p198 = scmp.eq.s32.totalorder %s20, 0
      %p199 = por %p197, %p198
      %p200 = scmp.le.s32.totalorder 1, %s14
      %p201 = scmp.lt.s32.totalorder %s14, 3
      %p202 = pnand %p200, %p201
      %p203 = pneg %p202
      // Predicated region
      $region9: #{dpcnn_forward.1} parent=5 // pred_check
        _
      $region10: #{dpcnn_forward.1} parent=5 // pred_check_branch
        %205 = sbr.rel (%p202) target = $region12
      $region11: #{dpcnn_forward.1} parent=5 // pred_region
        %s206 = ssub.s32 %s14, 1
        // Predicated region
        $region13: #{dpcnn_forward.1} parent=11 // pred_check
          %p207 = pneg %p61
        $region14: #{dpcnn_forward.1} parent=11 // pred_check_branch
          %209 = sbr.rel (%p207) target = $region16
        $region15: #{dpcnn_forward.1} parent=11 // pred_region
          _
        $region16: #{dpcnn_forward.1} parent=11 // pred_fallthru
          _
        // Predicated region
        $region17: #{dpcnn_forward.1} parent=11 // pred_check
          %p210 = pneg %p82
        $region18: #{dpcnn_forward.1} parent=11 // pred_check_branch
          %212 = sbr.rel (%p210) target = $region20
        $region19: #{dpcnn_forward.1} parent=11 // pred_region
          _
        $region20: #{dpcnn_forward.1} parent=11 // pred_fallthru
          _
        // Predicated region
        $region21: #{dpcnn_forward.1} parent=11 // pred_check
          %p213 = pneg %p103
        $region22: #{dpcnn_forward.1} parent=11 // pred_check_branch
          %215 = sbr.rel (%p213) target = $region24
        $region23: #{dpcnn_forward.1} parent=11 // pred_region
          %s217 = ssub.s32 3072, 3072
          %218 = vsyncadd [#allocation3], %s217
          %s219 = sshll.u32 [#allocation2], 4
          %s220 = int_to_ptr.vmem [resolvable:$true] %s219
          %225 = dma.hbm_to_vmem [thread:$0]  %s3, 3072, %s220, [#allocation3], 64, 64, 4
        $region24: #{dpcnn_forward.1} parent=11 // pred_fallthru
          _
        // Predicated region
        $region25: #{dpcnn_forward.1} parent=11 // pred_check
          %p226 = pneg %p124
        $region26: #{dpcnn_forward.1} parent=11 // pred_check_branch
          %228 = sbr.rel (%p226) target = $region28
        $region27: #{dpcnn_forward.1} parent=11 // pred_region
          _
        $region28: #{dpcnn_forward.1} parent=11 // pred_fallthru
          _
        // Predicated region
        $region29: #{dpcnn_forward.1} parent=11 // pred_check
          %p229 = pneg %p145
        $region30: #{dpcnn_forward.1} parent=11 // pred_check_branch
          %231 = sbr.rel (%p229) target = $region32
        $region31: #{dpcnn_forward.1} parent=11 // pred_region
          _
        $region32: #{dpcnn_forward.1} parent=11 // pred_fallthru
          _
        // Predicated region
        $region33: #{dpcnn_forward.1} parent=11 // pred_check
          %p232 = pneg %p166
        $region34: #{dpcnn_forward.1} parent=11 // pred_check_branch
          %234 = sbr.rel (%p232) target = $region36
        $region35: #{dpcnn_forward.1} parent=11 // pred_region
          _
        $region36: #{dpcnn_forward.1} parent=11 // pred_fallthru
          _
      $region12: #{dpcnn_forward.1} parent=5 // pred_fallthru
        _
      %p235 = scmp.lt.s32.totalorder %s14, 2
      // Predicated region
      $region37: #{dpcnn_forward.1} parent=5 // pred_check
        %p236 = pneg %p235
      $region38: #{dpcnn_forward.1} parent=5 // pred_check_branch
        %238 = sbr.rel (%p236) target = $region40
      $region39: #{dpcnn_forward.1} parent=5 // pred_region
        // Predicated region
        $region41: #{dpcnn_forward.1} parent=39 // pred_check
          %p239 = pneg %p34
        $region42: #{dpcnn_forward.1} parent=39 // pred_check_branch
          %241 = sbr.rel (%p239) target = $region44
        $region43: #{dpcnn_forward.1} parent=39 // pred_region
          %p242 = scmp.lt.s32.totalorder %s14, 1
          %s243 = scalar_select %p242, %s14, 1
          %s244 = smul.addr %s243, 8
          %s245 = smul.addr %s244, 8
          %s246 = scalar_lea.vmem %s0, %s245
        $region44: #{dpcnn_forward.1} parent=39 // pred_fallthru
          _
      $region40: #{dpcnn_forward.1} parent=5 // pred_fallthru
        _
      %p247 = scmp.le.s32.totalorder 1, %s14
      %p248 = scmp.lt.s32.totalorder %s14, 3
      %p249 = pnand %p247, %p248
      %p250 = pneg %p249
      // Predicated region
      $region45: #{dpcnn_forward.1} parent=5 // pred_check
        _
      $region46: #{dpcnn_forward.1} parent=5 // pred_check_branch
        %252 = sbr.rel (%p249) target = $region48
      $region47: #{dpcnn_forward.1} parent=5 // pred_region
        %s253 = ssub.s32 %s14, 1
        // Predicated region
        $region49: #{dpcnn_forward.1} parent=47 // pred_check
          %p254 = pneg %p103
        $region50: #{dpcnn_forward.1} parent=47 // pred_check_branch
          %256 = sbr.rel (%p254) target = $region52
        $region51: #{dpcnn_forward.1} parent=47 // pred_region
          %257 = dma.done [#allocation3], 3072
        $region52: #{dpcnn_forward.1} parent=47 // pred_fallthru
          _
        %p258 = scmp.lt.s32.totalorder %s19, 1
        %s259 = scalar_select %p258, %s19, 1
        %s260 = smul.addr %s259, 8
        %s261 = smul.addr %s260, 8
        %s262 = scalar_lea.vmem %s0, %s261
        %p263 = pneg %p40
        %p264 = pneg %p37
        %p265 = pneg %p61
        %p266 = pneg %p58
        %p267 = pneg %p82
        %p268 = pneg %p79
        %p269 = pneg %p103
        %p270 = pneg %p100
        %p271 = pneg %p124
        %p272 = pneg %p121
        %p273 = pneg %p145
        %p274 = pneg %p142
        %p275 = pneg %p166
        %p276 = pneg %p163
        %p277 = pneg %p192
        %p278 = pneg %p189
        %p279 = scmp.lt.s32.totalorder %s19, 1
        %s280 = scalar_select %p279, %s19, 1
        %s281 = smul.addr %s280, 4
        %s282 = scalar_lea.vmem %s7, %s281
        %p283 = scmp.lt.s32.totalorder %s19, 1
        %s284 = scalar_select %p283, %s19, 1
        %s285 = smul.addr %s284, 8
        %s286 = smul.addr %s285, 8
        %s287 = scalar_lea.vmem %s0, %s286
        %p288 = scmp.lt.s32.totalorder %s19, 1
        %s289 = scalar_select %p288, %s19, 1
        %s290 = smul.addr %s289, 4
        %s291 = scalar_lea.vmem %s7, %s290
        %v293 = vld [vmem:[%s287] sm:$0xff]
        %v294 = vld [vmem:[%s287 + $0x8] sm:$0xff]
        %v295 = vld [vmem:[%s287 + $0x10] sm:$0xff]
        %v296 = vld [vmem:[%s287 + $0x18] sm:$0xff]
        %v297 = vld [vmem:[%s287 + $0x20] sm:$0xff]
        %v298 = vld [vmem:[%s287 + $0x28] sm:$0xff]
        %v299 = vld [vmem:[%s287 + $0x30] sm:$0xff]
        %v300 = vld [vmem:[%s287 + $0x38] sm:$0xff]
        %vm303 = vcmask 1045504
        %v304 = vrot.slane %v295, 2
        %v305 = vrot.slane %v296, 2
        %v306 = vsel %vm303, %v304, %v305
        %vm312 = vcmask 1043456
        %v313 = vrot.slane %v297, 4
        %v314 = vrot.slane %v298, 4
        %v315 = vsel %vm312, %v313, %v314
        %vm321 = vcmask 1041408
        %v322 = vrot.slane %v299, 6
        %v323 = vrot.slane %v300, 6
        %v324 = vsel %vm321, %v322, %v323
        %v327 = vsel %vm303, %v294, %v304
        %v328 = vsel %vm312, %v305, %v313
        %v329 = vsel %vm321, %v314, %v322
        %v330 = vpack.c.bf16 %v327, %v293
        %v331 = vpack.c.bf16 %v328, %v306
        %v332 = vpack.c.bf16 %v329, %v315
        %v333 = vpack.c.bf16 %v324, %v324
        %vm336 = vcmask 1046528
        %v337 = vrot.slane %v293, 1
        %v338 = vrot.slane %v294, 1
        %v339 = vsel %vm336, %v337, %v338
        %vm342 = vcmask 1044480
        %v343 = vrot.slane %v295, 3
        %v344 = vrot.slane %v296, 3
        %v345 = vsel %vm342, %v343, %v344
        %vm349 = vcmask 1042432
        %v350 = vrot.slane %v297, 5
        %v351 = vrot.slane %v298, 5
        %v352 = vsel %vm349, %v350, %v351
        %vm356 = vcmask 1040384
        %v357 = vrot.slane %v299, 7
        %v358 = vrot.slane %v300, 7
        %v359 = vsel %vm356, %v357, %v358
        %v362 = vsel %vm303, %v338, %v343
        %v363 = vsel %vm312, %v344, %v350
        %v364 = vsel %vm321, %v351, %v357
        %v365 = vpack.c.bf16 %v362, %v339
        %v366 = vpack.c.bf16 %v363, %v345
        %v367 = vpack.c.bf16 %v364, %v352
        %v368 = vpack.c.bf16 %v359, %v359
        %v369 = vrot.slane %v293, 2
        %v370 = vrot.slane %v294, 2
        %v371 = vsel %vm303, %v369, %v370
        %v374 = vrot.slane %v295, 4
        %v375 = vrot.slane %v296, 4
        %v376 = vsel %vm312, %v374, %v375
        %v380 = vrot.slane %v297, 6
        %v381 = vrot.slane %v298, 6
        %v382 = vsel %vm321, %v380, %v381
        %v386 = vsel %vm303, %v370, %v374
        %v387 = vsel %vm312, %v375, %v380
        %v388 = vsel %vm321, %v381, %v299
        %v389 = vpack.c.bf16 %v386, %v371
        %v390 = vpack.c.bf16 %v387, %v376
        %v391 = vpack.c.bf16 %v388, %v382
        %v392 = vpack.c.bf16 %v300, %v300
        %v393 = vld [vmem:[%s1] sm:$0xf]
        %v394 = vld [vmem:[%s1 + $0x4] sm:$0xf]
        %v395 = vld [vmem:[%s1 + $0x8] sm:$0xf]
        %v396 = vld [vmem:[%s1 + $0xc] sm:$0xf]
        %v397 = vld [vmem:[%s1 + $0x10] sm:$0xf]
        %v398 = vld [vmem:[%s1 + $0x14] sm:$0xf]
        %v399 = vld [vmem:[%s1 + $0x18] sm:$0xf]
        %v400 = vld [vmem:[%s1 + $0x1c] sm:$0xf]
        %v401 = vld [vmem:[%s1 + $0x20] sm:$0xf]
        %v402 = vld [vmem:[%s1 + $0x24] sm:$0xf]
        %v403 = vld [vmem:[%s1 + $0x28] sm:$0xf]
        %v404 = vld [vmem:[%s1 + $0x2c] sm:$0xf]
        %v405 = vld [vmem:[%s1 + $0x30] sm:$0xf]
        %v406 = vld [vmem:[%s1 + $0x34] sm:$0xf]
        %v407 = vld [vmem:[%s1 + $0x38] sm:$0xf]
        %v408 = vld [vmem:[%s1 + $0x3c] sm:$0xf]
        %v409 = vld [vmem:[%s1 + $0x40] sm:$0xf]
        %v410 = vld [vmem:[%s1 + $0x44] sm:$0xf]
        %v411 = vld [vmem:[%s1 + $0x48] sm:$0xf]
        %v412 = vld [vmem:[%s1 + $0x4c] sm:$0xf]
        %v413 = vld [vmem:[%s1 + $0x50] sm:$0xf]
        %v414 = vld [vmem:[%s1 + $0x54] sm:$0xf]
        %v415 = vld [vmem:[%s1 + $0x58] sm:$0xf]
        %v416 = vld [vmem:[%s1 + $0x5c] sm:$0xf]
        %v417 = vld [vmem:[%s1 + $0x60] sm:$0xf]
        %v418 = vld [vmem:[%s1 + $0x64] sm:$0xf]
        %v419 = vld [vmem:[%s1 + $0x68] sm:$0xf]
        %v420 = vld [vmem:[%s1 + $0x6c] sm:$0xf]
        %v421 = vld [vmem:[%s1 + $0x70] sm:$0xf]
        %v422 = vld [vmem:[%s1 + $0x74] sm:$0xf]
        %v423 = vld [vmem:[%s1 + $0x78] sm:$0xf]
        %v424 = vld [vmem:[%s1 + $0x7c] sm:$0xf]
        %v425 = vld [vmem:[%s1 + $0x80] sm:$0xf]
        %v426 = vld [vmem:[%s1 + $0x84] sm:$0xf]
        %v427 = vld [vmem:[%s1 + $0x88] sm:$0xf]
        %v428 = vld [vmem:[%s1 + $0x8c] sm:$0xf]
        %v429 = vld [vmem:[%s1 + $0x90] sm:$0xf]
        %v430 = vld [vmem:[%s1 + $0x94] sm:$0xf]
        %v431 = vld [vmem:[%s1 + $0x98] sm:$0xf]
        %v432 = vld [vmem:[%s1 + $0x9c] sm:$0xf]
        %v433 = vld [vmem:[%s1 + $0xa0] sm:$0xf]
        %v434 = vld [vmem:[%s1 + $0xa4] sm:$0xf]
        %v435 = vld [vmem:[%s1 + $0xa8] sm:$0xf]
        %v436 = vld [vmem:[%s1 + $0xac] sm:$0xf]
        %v437 = vld [vmem:[%s1 + $0xb0] sm:$0xf]
        %v438 = vld [vmem:[%s1 + $0xb4] sm:$0xf]
        %v439 = vld [vmem:[%s1 + $0xb8] sm:$0xf]
        %v440 = vld [vmem:[%s1 + $0xbc] sm:$0xf]
        %v441 = vld [vmem:[%s2] sm:$0x1]
        %v443 = vlaneseq
        %v444 = vshrl.u32 %v443, 7
        %v445 = vsub.s32 0, %v444
        %v446 = vrot.slane %v441, %v445
        %v496 = vunpack.c.l.b16 %v393
        %v497 = vunpack.c.l.b16 %v394
        %v498 = vunpack.c.l.b16 %v395
        %v499 = vunpack.c.l.b16 %v396
        %v500 = vunpack.c.l.b16 %v397
        %v501 = vunpack.c.l.b16 %v398
        %v502 = vunpack.c.l.b16 %v399
        %v503 = vunpack.c.l.b16 %v400
        %v504 = vunpack.c.l.b16 %v401
        %v505 = vunpack.c.l.b16 %v402
        %v506 = vunpack.c.l.b16 %v403
        %v507 = vunpack.c.l.b16 %v404
        %v508 = vunpack.c.l.b16 %v405
        %v509 = vunpack.c.l.b16 %v406
        %v510 = vunpack.c.l.b16 %v407
        %v511 = vunpack.c.l.b16 %v408
        %v512 = vunpack.c.l.b16 %v409
        %v513 = vunpack.c.l.b16 %v410
        %v514 = vunpack.c.l.b16 %v411
        %v515 = vunpack.c.l.b16 %v412
        %v516 = vunpack.c.l.b16 %v413
        %v517 = vunpack.c.l.b16 %v414
        %v518 = vunpack.c.l.b16 %v415
        %v519 = vunpack.c.l.b16 %v416
        %v520 = vunpack.c.l.b16 %v417
        %v521 = vunpack.c.l.b16 %v418
        %v522 = vunpack.c.l.b16 %v419
        %v523 = vunpack.c.l.b16 %v420
        %v524 = vunpack.c.l.b16 %v421
        %v525 = vunpack.c.l.b16 %v422
        %v526 = vunpack.c.l.b16 %v423
        %v527 = vunpack.c.l.b16 %v424
        %v528 = vunpack.c.l.b16 %v425
        %v529 = vunpack.c.l.b16 %v426
        %v530 = vunpack.c.l.b16 %v427
        %v531 = vunpack.c.l.b16 %v428
        %v532 = vunpack.c.l.b16 %v429
        %v533 = vunpack.c.l.b16 %v430
        %v534 = vunpack.c.l.b16 %v431
        %v535 = vunpack.c.l.b16 %v432
        %v536 = vunpack.c.l.b16 %v433
        %v537 = vunpack.c.l.b16 %v434
        %v538 = vunpack.c.l.b16 %v435
        %v539 = vunpack.c.l.b16 %v436
        %v540 = vunpack.c.l.b16 %v437
        %v541 = vunpack.c.l.b16 %v438
        %v542 = vunpack.c.l.b16 %v439
        %v543 = vunpack.c.l.b16 %v440
        %v544 = vpack.c.b16 %v497, %v496
        %v545 = vpack.c.b16 %v499, %v498
        %v546 = vpack.c.b16 %v501, %v500
        %v547 = vpack.c.b16 %v503, %v502
        %v548 = vpack.c.b16 %v505, %v504
        %v549 = vpack.c.b16 %v507, %v506
        %v550 = vpack.c.b16 %v509, %v508
        %v551 = vpack.c.b16 %v511, %v510
        %v552 = vpack.c.b16 %v513, %v512
        %v553 = vpack.c.b16 %v515, %v514
        %v554 = vpack.c.b16 %v517, %v516
        %v555 = vpack.c.b16 %v519, %v518
        %v556 = vpack.c.b16 %v521, %v520
        %v557 = vpack.c.b16 %v523, %v522
        %v558 = vpack.c.b16 %v525, %v524
        %v559 = vpack.c.b16 %v527, %v526
        %v560 = vpack.c.b16 %v529, %v528
        %v561 = vpack.c.b16 %v531, %v530
        %v562 = vpack.c.b16 %v533, %v532
        %v563 = vpack.c.b16 %v535, %v534
        %v564 = vpack.c.b16 %v537, %v536
        %v565 = vpack.c.b16 %v539, %v538
        %v566 = vpack.c.b16 %v541, %v540
        %v567 = vpack.c.b16 %v543, %v542
        %592 = vmatprep.subr.bf16.mxu0 0
        %593 = vmatpush1.bf16.msra.mxu0 %v544
        %594 = vmatprep.subr.bf16.mxu0 0
        %595 = vmatpush1.bf16.msra.mxu0 %v545
        %596 = vmatprep.subr.bf16.mxu0 0
        %597 = vmatpush1.bf16.msra.mxu0 %v546
        %598 = vmatprep.subr.bf16.mxu0 0
        %599 = vmatpush1.bf16.msra.mxu0 %v547
        %600 = vmatprep.subr.bf16.mxu0 0
        %601 = vmatpush1.bf16.msra.mxu0 %v548
        %602 = vmatprep.subr.bf16.mxu0 0
        %603 = vmatpush1.bf16.msra.mxu0 %v549
        %604 = vmatprep.subr.bf16.mxu0 0
        %605 = vmatpush1.bf16.msra.mxu0 %v550
        %606 = vmatprep.subr.bf16.mxu0 0
        %607 = vmatpush1.bf16.msra.mxu0 %v551
        %608 = vmatprep.subr.bf16.mxu0 0
        %609 = vmatpush1.bf16.msra.mxu0 %v552
        %610 = vmatprep.subr.bf16.mxu0 0
        %611 = vmatpush1.bf16.msra.mxu0 %v553
        %612 = vmatprep.subr.bf16.mxu0 0
        %613 = vmatpush1.bf16.msra.mxu0 %v554
        %614 = vmatprep.subr.bf16.mxu0 0
        %615 = vmatpush1.bf16.msra.mxu0 %v555
        %616 = vmatprep.subr.bf16.mxu0 0
        %617 = vmatpush1.bf16.msra.mxu0 %v556
        %618 = vmatprep.subr.bf16.mxu0 0
        %619 = vmatpush1.bf16.msra.mxu0 %v557
        %620 = vmatprep.subr.bf16.mxu0 0
        %621 = vmatpush1.bf16.msra.mxu0 %v558
        %622 = vmatprep.subr.bf16.mxu0 0
        %623 = vmatpush1.bf16.msra.mxu0 %v559
        %624 = vmatprep.mubr.bf16.mxu0 %v365
        %625 = vmatmul.mubr.bf16.gmra.mrb[0].mxu0 %v330
        %v626 = vpop.f32.mrb[0].mxu0
        %v627 = vadd.f32 %v446, %v626
        %v628 = vpop.f32.mrb[0].mxu0
        %v629 = vpop.f32.mrb[0].mxu0
        %v630 = vadd.f32 %v446, %v629
        %v631 = vpop.f32.mrb[0].mxu0
        %632 = vmatprep.mubr.bf16.mxu0 %v366
        %633 = vmatmul.mubr.bf16.gmra.mrb[0].mxu0 %v331
        %v634 = vpop.f32.mrb[0].mxu0
        %v635 = vadd.f32 %v446, %v634
        %v636 = vpop.f32.mrb[0].mxu0
        %v637 = vpop.f32.mrb[0].mxu0
        %v638 = vadd.f32 %v446, %v637
        %v639 = vpop.f32.mrb[0].mxu0
        %640 = vmatprep.mubr.bf16.mxu0 %v367
        %641 = vmatmul.mubr.bf16.gmra.mrb[0].mxu0 %v332
        %v642 = vpop.f32.mrb[0].mxu0
        %v643 = vadd.f32 %v446, %v642
        %v644 = vpop.f32.mrb[0].mxu0
        %v645 = vpop.f32.mrb[0].mxu0
        %v646 = vadd.f32 %v446, %v645
        %v647 = vpop.f32.mrb[0].mxu0
        %648 = vmatprep.mubr.bf16.mxu0 %v368
        %649 = vmatmul.mubr.bf16.gmra.mrb[0].mxu0 %v333
        %v650 = vpop.f32.mrb[0].mxu0
        %v651 = vadd.f32 %v446, %v650
        %v652 = vpop.f32.mrb[0].mxu0
        %v653 = vpop.f32.mrb[0].mxu0
        %v654 = vpop.f32.mrb[0].mxu0
        %655 = vdwg.mxu0
        %656 = vmatprep.subr.bf16.mxu0 0
        %657 = vmatpush1.bf16.msra.mxu0 %v560
        %658 = vmatprep.subr.bf16.mxu0 0
        %659 = vmatpush1.bf16.msra.mxu0 %v561
        %660 = vmatprep.subr.bf16.mxu0 0
        %661 = vmatpush1.bf16.msra.mxu0 %v562
        %662 = vmatprep.subr.bf16.mxu0 0
        %663 = vmatpush1.bf16.msra.mxu0 %v563
        %664 = vmatprep.subr.bf16.mxu0 0
        %665 = vmatpush1.bf16.msra.mxu0 %v564
        %666 = vmatprep.subr.bf16.mxu0 0
        %667 = vmatpush1.bf16.msra.mxu0 %v565
        %668 = vmatprep.subr.bf16.mxu0 0
        %669 = vmatpush1.bf16.msra.mxu0 %v566
        %670 = vmatprep.subr.bf16.mxu0 0
        %671 = vmatpush1.bf16.msra.mxu0 %v567
        %672 = vmatprep.subr.bf16.mxu0 0
        %673 = vmatpush1.bf16.msra.mxu0 0
        %674 = vmatprep.subr.bf16.mxu0 0
        %675 = vmatpush1.bf16.msra.mxu0 0
        %676 = vmatprep.subr.bf16.mxu0 0
        %677 = vmatpush1.bf16.msra.mxu0 0
        %678 = vmatprep.subr.bf16.mxu0 0
        %679 = vmatpush1.bf16.msra.mxu0 0
        %680 = vmatprep.subr.bf16.mxu0 0
        %681 = vmatpush1.bf16.msra.mxu0 0
        %682 = vmatprep.subr.bf16.mxu0 0
        %683 = vmatpush1.bf16.msra.mxu0 0
        %684 = vmatprep.subr.bf16.mxu0 0
        %685 = vmatpush1.bf16.msra.mxu0 0
        %686 = vmatprep.subr.bf16.mxu0 0
        %687 = vmatpush1.bf16.msra.mxu0 0
        %688 = vmatprep.mubr.bf16.mxu0 0
        %689 = vmatmul.mubr.bf16.gmra.mrb[0].mxu0 %v389
        %v690 = vpop.f32.mrb[0].mxu0
        %v691 = vadd.f32 %v627, %v690
        %v692 = vpop.f32.mrb[0].mxu0
        %v693 = vpop.f32.mrb[0].mxu0
        %v694 = vadd.f32 %v630, %v693
        %v695 = vpop.f32.mrb[0].mxu0
        %696 = vmatprep.mubr.bf16.mxu0 0
        %697 = vmatmul.mubr.bf16.gmra.mrb[0].mxu0 %v390
        %v698 = vpop.f32.mrb[0].mxu0
        %v699 = vadd.f32 %v635, %v698
        %v700 = vpop.f32.mrb[0].mxu0
        %v701 = vpop.f32.mrb[0].mxu0
        %v702 = vadd.f32 %v638, %v701
        %v703 = vpop.f32.mrb[0].mxu0
        %704 = vmatprep.mubr.bf16.mxu0 0
        %705 = vmatmul.mubr.bf16.gmra.mrb[0].mxu0 %v391
        %v706 = vpop.f32.mrb[0].mxu0
        %v707 = vadd.f32 %v643, %v706
        %v708 = vpop.f32.mrb[0].mxu0
        %v709 = vpop.f32.mrb[0].mxu0
        %v710 = vadd.f32 %v646, %v709
        %v711 = vpop.f32.mrb[0].mxu0
        %712 = vmatprep.mubr.bf16.mxu0 0
        %713 = vmatmul.mubr.bf16.gmra.mrb[0].mxu0 %v392
        %v714 = vpop.f32.mrb[0].mxu0
        %v715 = vadd.f32 %v651, %v714
        %v716 = vpop.f32.mrb[0].mxu0
        %v717 = vpop.f32.mrb[0].mxu0
        %v718 = vpop.f32.mrb[0].mxu0
        %719 = vdwg.mxu0
        %v720 = vmax.f32 %v691, 0.0
        %v721 = vmax.f32 %v694, 0.0
        %v722 = vmax.f32 %v699, 0.0
        %v723 = vmax.f32 %v702, 0.0
        %v724 = vmax.f32 %v707, 0.0
        %v725 = vmax.f32 %v710, 0.0
        %v726 = vmax.f32 %v715, 0.0
        %v727 = vlaneseq
        %v728 = vshrl.u32 %v727, 7
        %v729 = vadd.s32 %v728, 8
        %v730 = vadd.s32 %v728, 16
        %v731 = vadd.s32 %v728, 24
        %v732 = vadd.s32 %v728, 32
        %v733 = vadd.s32 %v728, 40
        %v734 = vadd.s32 %v728, 48
        %vm735 = vcmp.lt.s32.totalorder %v728, 0
        %v736 = vsub.s32 0, %v728
        %v737 = vsel %vm735, %v736, %v728
        %v738 = vmul.u32.u64.compose %v737, 2454267026
        %v739 = vextract.low.u32 %v738
        %v740 = vextract.high.u32 %v738
        %vm741 = vc.u32 %v739, 2454267026
        %v742 = vsel %vm741, 1, 0
        %v743 = vadd.s32 %v740, %v742
        %v744 = vshrl.u32 %v743, 3
        %v745 = vmul.u32 %v744, 14
        %v746 = vsub.s32 %v737, %v745
        %v747 = vsub.s32 0, %v746
        %v748 = vsel %vm735, %v747, %v746
        %vm749 = vcmp.lt.s32.totalorder %v729, 0
        %v750 = vsub.s32 0, %v729
        %v751 = vsel %vm749, %v750, %v729
        %v752 = vmul.u32.u64.compose %v751, 2454267026
        %v753 = vextract.low.u32 %v752
        %v754 = vextract.high.u32 %v752
        %vm755 = vc.u32 %v753, 2454267026
        %v756 = vsel %vm755, 1, 0
        %v757 = vadd.s32 %v754, %v756
        %v758 = vshrl.u32 %v757, 3
        %v759 = vmul.u32 %v758, 14
        %v760 = vsub.s32 %v751, %v759
        %v761 = vsub.s32 0, %v760
        %v762 = vsel %vm749, %v761, %v760
        %vm763 = vcmp.lt.s32.totalorder %v730, 0
        %v764 = vsub.s32 0, %v730
        %v765 = vsel %vm763, %v764, %v730
        %v766 = vmul.u32.u64.compose %v765, 2454267026
        %v767 = vextract.low.u32 %v766
        %v768 = vextract.high.u32 %v766
        %vm769 = vc.u32 %v767, 2454267026
        %v770 = vsel %vm769, 1, 0
        %v771 = vadd.s32 %v768, %v770
        %v772 = vshrl.u32 %v771, 3
        %v773 = vmul.u32 %v772, 14
        %v774 = vsub.s32 %v765, %v773
        %v775 = vsub.s32 0, %v774
        %v776 = vsel %vm763, %v775, %v774
        %vm777 = vcmp.lt.s32.totalorder %v731, 0
        %v778 = vsub.s32 0, %v731
        %v779 = vsel %vm777, %v778, %v731
        %v780 = vmul.u32.u64.compose %v779, 2454267026
        %v781 = vextract.low.u32 %v780
        %v782 = vextract.high.u32 %v780
        %vm783 = vc.u32 %v781, 2454267026
        %v784 = vsel %vm783, 1, 0
        %v785 = vadd.s32 %v782, %v784
        %v786 = vshrl.u32 %v785, 3
        %v787 = vmul.u32 %v786, 14
        %v788 = vsub.s32 %v779, %v787
        %v789 = vsub.s32 0, %v788
        %v790 = vsel %vm777, %v789, %v788
        %vm791 = vcmp.lt.s32.totalorder %v732, 0
        %v792 = vsub.s32 0, %v732
        %v793 = vsel %vm791, %v792, %v732
        %v794 = vmul.u32.u64.compose %v793, 2454267026
        %v795 = vextract.low.u32 %v794
        %v796 = vextract.high.u32 %v794
        %vm797 = vc.u32 %v795, 2454267026
        %v798 = vsel %vm797, 1, 0
        %v799 = vadd.s32 %v796, %v798
        %v800 = vshrl.u32 %v799, 3
        %v801 = vmul.u32 %v800, 14
        %v802 = vsub.s32 %v793, %v801
        %v803 = vsub.s32 0, %v802
        %v804 = vsel %vm791, %v803, %v802
        %vm805 = vcmp.lt.s32.totalorder %v733, 0
        %v806 = vsub.s32 0, %v733
        %v807 = vsel %vm805, %v806, %v733
        %v808 = vmul.u32.u64.compose %v807, 2454267026
        %v809 = vextract.low.u32 %v808
        %v810 = vextract.high.u32 %v808
        %vm811 = vc.u32 %v809, 2454267026
        %v812 = vsel %vm811, 1, 0
        %v813 = vadd.s32 %v810, %v812
        %v814 = vshrl.u32 %v813, 3
        %v815 = vmul.u32 %v814, 14
        %v816 = vsub.s32 %v807, %v815
        %v817 = vsub.s32 0, %v816
        %v818 = vsel %vm805, %v817, %v816
        %vm819 = vcmp.lt.s32.totalorder %v734, 0
        %v820 = vsub.s32 0, %v734
        %v821 = vsel %vm819, %v820, %v734
        %v822 = vmul.u32.u64.compose %v821, 2454267026
        %v823 = vextract.low.u32 %v822
        %v824 = vextract.high.u32 %v822
        %vm825 = vc.u32 %v823, 2454267026
        %v826 = vsel %vm825, 1, 0
        %v827 = vadd.s32 %v824, %v826
        %v828 = vshrl.u32 %v827, 3
        %v829 = vmul.u32 %v828, 14
        %v830 = vsub.s32 %v821, %v829
        %v831 = vsub.s32 0, %v830
        %v832 = vsel %vm819, %v831, %v830
        %vm833 = vcmp.ne.s32.totalorder %v748, 0
        %vm834 = vcmp.ne.s32.totalorder %v762, 0
        %vm835 = vcmp.ne.s32.totalorder %v776, 0
        %vm836 = vcmp.ne.s32.totalorder %v790, 0
        %vm837 = vcmp.ne.s32.totalorder %v804, 0
        %vm838 = vcmp.ne.s32.totalorder %v818, 0
        %vm839 = vcmp.ne.s32.totalorder %v832, 0
        %vm840 = vcmp.lt.s32.totalorder %v748, 0
        %vm841 = vcmp.lt.s32.totalorder %v762, 0
        %vm842 = vcmp.lt.s32.totalorder %v776, 0
        %vm843 = vcmp.lt.s32.totalorder %v790, 0
        %vm844 = vcmp.lt.s32.totalorder %v804, 0
        %vm845 = vcmp.lt.s32.totalorder %v818, 0
        %vm846 = vcmp.lt.s32.totalorder %v832, 0
        %vm847 = vmand %vm840, %vm833
        %vm848 = vmand %vm841, %vm834
        %vm849 = vmand %vm842, %vm835
        %vm850 = vmand %vm843, %vm836
        %vm851 = vmand %vm844, %vm837
        %vm852 = vmand %vm845, %vm838
        %vm853 = vmand %vm846, %vm839
        %v854 = vadd.s32 %v748, 14
        %v855 = vadd.s32 %v762, 14
        %v856 = vadd.s32 %v776, 14
        %v857 = vadd.s32 %v790, 14
        %v858 = vadd.s32 %v804, 14
        %v859 = vadd.s32 %v818, 14
        %v860 = vadd.s32 %v832, 14
        %v861 = vsel %vm847, %v854, %v748
        %v862 = vsel %vm848, %v855, %v762
        %v863 = vsel %vm849, %v856, %v776
        %v864 = vsel %vm850, %v857, %v790
        %v865 = vsel %vm851, %v858, %v804
        %v866 = vsel %vm852, %v859, %v818
        %v867 = vsel %vm853, %v860, %v832
        %vm868 = vcmp.eq.s32.totalorder %v861, 0
        %vm869 = vcmp.eq.s32.totalorder %v862, 0
        %vm870 = vcmp.eq.s32.totalorder %v863, 0
        %vm871 = vcmp.eq.s32.totalorder %v864, 0
        %vm872 = vcmp.eq.s32.totalorder %v865, 0
        %vm873 = vcmp.eq.s32.totalorder %v866, 0
        %vm874 = vcmp.eq.s32.totalorder %v867, 0
        %v882 = vrot.slane %v720, 7
        %v883 = vrot.slane %v721, 7
        %v884 = vsel %vm356, %v882, %v883
        %v885 = vrot.slane %v722, 7
        %v886 = vsel %vm356, %v883, %v885
        %v887 = vrot.slane %v723, 7
        %v888 = vsel %vm356, %v885, %v887
        %v889 = vrot.slane %v724, 7
        %v890 = vsel %vm356, %v887, %v889
        %v891 = vrot.slane %v725, 7
        %v892 = vsel %vm356, %v889, %v891
        %v893 = vrot.slane %v726, 7
        %v894 = vsel %vm356, %v891, %v893
        %v902 = vsel %vm356, 0.0, %v882
        %v903 = vsel %vm868, 0.0, %v902
        %v904 = vsel %vm869, 0.0, %v884
        %v905 = vsel %vm870, 0.0, %v886
        %v906 = vsel %vm871, 0.0, %v888
        %v907 = vsel %vm872, 0.0, %v890
        %v908 = vsel %vm873, 0.0, %v892
        %v909 = vsel %vm874, 0.0, %v894
        %vm910 = vcmp.eq.s32.totalorder %v861, 13
        %vm911 = vcmp.eq.s32.totalorder %v862, 13
        %vm912 = vcmp.eq.s32.totalorder %v863, 13
        %vm913 = vcmp.eq.s32.totalorder %v864, 13
        %vm914 = vcmp.eq.s32.totalorder %v865, 13
        %vm915 = vcmp.eq.s32.totalorder %v866, 13
        %vm916 = vcmp.eq.s32.totalorder %v867, 13
        %v917 = vrot.slane %v720, 1
        %v918 = vrot.slane %v721, 1
        %v919 = vsel %vm336, %v917, %v918
        %v920 = vrot.slane %v722, 1
        %v921 = vsel %vm336, %v918, %v920
        %v922 = vrot.slane %v723, 1
        %v923 = vsel %vm336, %v920, %v922
        %v924 = vrot.slane %v724, 1
        %v925 = vsel %vm336, %v922, %v924
        %v926 = vrot.slane %v725, 1
        %v927 = vsel %vm336, %v924, %v926
        %v928 = vrot.slane %v726, 1
        %v929 = vsel %vm336, %v926, %v928
        %v937 = vsel %vm336, %v928, 0.0
        %v938 = vsel %vm910, 0.0, %v919
        %v939 = vsel %vm911, 0.0, %v921
        %v940 = vsel %vm912, 0.0, %v923
        %v941 = vsel %vm913, 0.0, %v925
        %v942 = vsel %vm914, 0.0, %v927
        %v943 = vsel %vm915, 0.0, %v929
        %v944 = vsel %vm916, 0.0, %v937
        %v945 = vpack.c.bf16 %v904, %v903
        %v946 = vpack.c.bf16 %v906, %v905
        %v947 = vpack.c.bf16 %v908, %v907
        %v948 = vpack.c.bf16 %v909, %v909
        %v949 = vpack.c.bf16 %v721, %v720
        %v950 = vpack.c.bf16 %v723, %v722
        %v951 = vpack.c.bf16 %v725, %v724
        %v952 = vpack.c.bf16 %v726, %v726
        %v953 = vpack.c.bf16 %v939, %v938
        %v954 = vpack.c.bf16 %v941, %v940
        %v955 = vpack.c.bf16 %v943, %v942
        %v956 = vpack.c.bf16 %v944, %v944
        %v957 = vld [vmem:[#allocation2] sm:$0xf]
        %v958 = vld [vmem:[#allocation2 + $0x4] sm:$0xf]
        %v959 = vld [vmem:[#allocation2 + $0x8] sm:$0xf]
        %v960 = vld [vmem:[#allocation2 + $0xc] sm:$0xf]
        %v961 = vld [vmem:[#allocation2 + $0x10] sm:$0xf]
        %v962 = vld [vmem:[#allocation2 + $0x14] sm:$0xf]
        %v963 = vld [vmem:[#allocation2 + $0x18] sm:$0xf]
        %v964 = vld [vmem:[#allocation2 + $0x1c] sm:$0xf]
        %v965 = vld [vmem:[#allocation2 + $0x20] sm:$0xf]
        %v966 = vld [vmem:[#allocation2 + $0x24] sm:$0xf]
        %v967 = vld [vmem:[#allocation2 + $0x28] sm:$0xf]
        %v968 = vld [vmem:[#allocation2 + $0x2c] sm:$0xf]
        %v969 = vld [vmem:[#allocation2 + $0x30] sm:$0xf]
        %v970 = vld [vmem:[#allocation2 + $0x34] sm:$0xf]
        %v971 = vld [vmem:[#allocation2 + $0x38] sm:$0xf]
        %v972 = vld [vmem:[#allocation2 + $0x3c] sm:$0xf]
        %v973 = vld [vmem:[#allocation2 + $0x40] sm:$0xf]
        %v974 = vld [vmem:[#allocation2 + $0x44] sm:$0xf]
        %v975 = vld [vmem:[#allocation2 + $0x48] sm:$0xf]
        %v976 = vld [vmem:[#allocation2 + $0x4c] sm:$0xf]
        %v977 = vld [vmem:[#allocation2 + $0x50] sm:$0xf]
        %v978 = vld [vmem:[#allocation2 + $0x54] sm:$0xf]
        %v979 = vld [vmem:[#allocation2 + $0x58] sm:$0xf]
        %v980 = vld [vmem:[#allocation2 + $0x5c] sm:$0xf]
        %v981 = vld [vmem:[#allocation2 + $0x60] sm:$0xf]
        %v982 = vld [vmem:[#allocation2 + $0x64] sm:$0xf]
        %v983 = vld [vmem:[#allocation2 + $0x68] sm:$0xf]
        %v984 = vld [vmem:[#allocation2 + $0x6c] sm:$0xf]
        %v985 = vld [vmem:[#allocation2 + $0x70] sm:$0xf]
        %v986 = vld [vmem:[#allocation2 + $0x74] sm:$0xf]
        %v987 = vld [vmem:[#allocation2 + $0x78] sm:$0xf]
        %v988 = vld [vmem:[#allocation2 + $0x7c] sm:$0xf]
        %v989 = vld [vmem:[#allocation2 + $0x80] sm:$0xf]
        %v990 = vld [vmem:[#allocation2 + $0x84] sm:$0xf]
        %v991 = vld [vmem:[#allocation2 + $0x88] sm:$0xf]
        %v992 = vld [vmem:[#allocation2 + $0x8c] sm:$0xf]
        %v993 = vld [vmem:[#allocation2 + $0x90] sm:$0xf]
        %v994 = vld [vmem:[#allocation2 + $0x94] sm:$0xf]
        %v995 = vld [vmem:[#allocation2 + $0x98] sm:$0xf]
        %v996 = vld [vmem:[#allocation2 + $0x9c] sm:$0xf]
        %v997 = vld [vmem:[#allocation2 + $0xa0] sm:$0xf]
        %v998 = vld [vmem:[#allocation2 + $0xa4] sm:$0xf]
        %v999 = vld [vmem:[#allocation2 + $0xa8] sm:$0xf]
        %v1000 = vld [vmem:[#allocation2 + $0xac] sm:$0xf]
        %v1001 = vld [vmem:[#allocation2 + $0xb0] sm:$0xf]
        %v1002 = vld [vmem:[#allocation2 + $0xb4] sm:$0xf]
        %v1003 = vld [vmem:[#allocation2 + $0xb8] sm:$0xf]
        %v1004 = vld [vmem:[#allocation2 + $0xbc] sm:$0xf]
        %v1005 = vld [vmem:[%s4] sm:$0x1]
        %v1007 = vlaneseq
        %v1008 = vshrl.u32 %v1007, 7
        %v1009 = vsub.s32 0, %v1008
        %v1010 = vrot.slane %v1005, %v1009
        %v1060 = vunpack.c.l.b16 %v957
        %v1061 = vunpack.c.l.b16 %v958
        %v1062 = vunpack.c.l.b16 %v959
        %v1063 = vunpack.c.l.b16 %v960
        %v1064 = vunpack.c.l.b16 %v961
        %v1065 = vunpack.c.l.b16 %v962
        %v1066 = vunpack.c.l.b16 %v963
        %v1067 = vunpack.c.l.b16 %v964
        %v1068 = vunpack.c.l.b16 %v965
        %v1069 = vunpack.c.l.b16 %v966
        %v1070 = vunpack.c.l.b16 %v967
        %v1071 = vunpack.c.l.b16 %v968
        %v1072 = vunpack.c.l.b16 %v969
        %v1073 = vunpack.c.l.b16 %v970
        %v1074 = vunpack.c.l.b16 %v971
        %v1075 = vunpack.c.l.b16 %v972
        %v1076 = vunpack.c.l.b16 %v973
        %v1077 = vunpack.c.l.b16 %v974
        %v1078 = vunpack.c.l.b16 %v975
        %v1079 = vunpack.c.l.b16 %v976
        %v1080 = vunpack.c.l.b16 %v977
        %v1081 = vunpack.c.l.b16 %v978
        %v1082 = vunpack.c.l.b16 %v979
        %v1083 = vunpack.c.l.b16 %v980
        %v1084 = vunpack.c.l.b16 %v981
        %v1085 = vunpack.c.l.b16 %v982
        %v1086 = vunpack.c.l.b16 %v983
        %v1087 = vunpack.c.l.b16 %v984
        %v1088 = vunpack.c.l.b16 %v985
        %v1089 = vunpack.c.l.b16 %v986
        %v1090 = vunpack.c.l.b16 %v987
        %v1091 = vunpack.c.l.b16 %v988
        %v1092 = vunpack.c.l.b16 %v989
        %v1093 = vunpack.c.l.b16 %v990
        %v1094 = vunpack.c.l.b16 %v991
        %v1095 = vunpack.c.l.b16 %v992
        %v1096 = vunpack.c.l.b16 %v993
        %v1097 = vunpack.c.l.b16 %v994
        %v1098 = vunpack.c.l.b16 %v995
        %v1099 = vunpack.c.l.b16 %v996
        %v1100 = vunpack.c.l.b16 %v997
        %v1101 = vunpack.c.l.b16 %v998
        %v1102 = vunpack.c.l.b16 %v999
        %v1103 = vunpack.c.l.b16 %v1000
        %v1104 = vunpack.c.l.b16 %v1001
        %v1105 = vunpack.c.l.b16 %v1002
        %v1106 = vunpack.c.l.b16 %v1003
        %v1107 = vunpack.c.l.b16 %v1004
        %v1108 = vpack.c.b16 %v1061, %v1060
        %v1109 = vpack.c.b16 %v1063, %v1062
        %v1110 = vpack.c.b16 %v1065, %v1064
        %v1111 = vpack.c.b16 %v1067, %v1066
        %v1112 = vpack.c.b16 %v1069, %v1068
        %v1113 = vpack.c.b16 %v1071, %v1070
        %v1114 = vpack.c.b16 %v1073, %v1072
        %v1115 = vpack.c.b16 %v1075, %v1074
        %v1116 = vpack.c.b16 %v1077, %v1076
        %v1117 = vpack.c.b16 %v1079, %v1078
        %v1118 = vpack.c.b16 %v1081, %v1080
        %v1119 = vpack.c.b16 %v1083, %v1082
        %v1120 = vpack.c.b16 %v1085, %v1084
        %v1121 = vpack.c.b16 %v1087, %v1086
        %v1122 = vpack.c.b16 %v1089, %v1088
        %v1123 = vpack.c.b16 %v1091, %v1090
        %v1124 = vpack.c.b16 %v1093, %v1092
        %v1125 = vpack.c.b16 %v1095, %v1094
        %v1126 = vpack.c.b16 %v1097, %v1096
        %v1127 = vpack.c.b16 %v1099, %v1098
        %v1128 = vpack.c.b16 %v1101, %v1100
        %v1129 = vpack.c.b16 %v1103, %v1102
        %v1130 = vpack.c.b16 %v1105, %v1104
        %v1131 = vpack.c.b16 %v1107, %v1106
        %1156 = vmatprep.subr.bf16.mxu0 0
        %1157 = vmatpush1.bf16.msra.mxu0 %v1108
        %1158 = vmatprep.subr.bf16.mxu0 0
        %1159 = vmatpush1.bf16.msra.mxu0 %v1109
        %1160 = vmatprep.subr.bf16.mxu0 0
        %1161 = vmatpush1.bf16.msra.mxu0 %v1110
        %1162 = vmatprep.subr.bf16.mxu0 0
        %1163 = vmatpush1.bf16.msra.mxu0 %v1111
        %1164 = vmatprep.subr.bf16.mxu0 0
        %1165 = vmatpush1.bf16.msra.mxu0 %v1112
        %1166 = vmatprep.subr.bf16.mxu0 0
        %1167 = vmatpush1.bf16.msra.mxu0 %v1113
        %1168 = vmatprep.subr.bf16.mxu0 0
        %1169 = vmatpush1.bf16.msra.mxu0 %v1114
        %1170 = vmatprep.subr.bf16.mxu0 0
        %1171 = vmatpush1.bf16.msra.mxu0 %v1115
        %1172 = vmatprep.subr.bf16.mxu0 0
        %1173 = vmatpush1.bf16.msra.mxu0 %v1116
        %1174 = vmatprep.subr.bf16.mxu0 0
        %1175 = vmatpush1.bf16.msra.mxu0 %v1117
        %1176 = vmatprep.subr.bf16.mxu0 0
        %1177 = vmatpush1.bf16.msra.mxu0 %v1118
        %1178 = vmatprep.subr.bf16.mxu0 0
        %1179 = vmatpush1.bf16.msra.mxu0 %v1119
        %1180 = vmatprep.subr.bf16.mxu0 0
        %1181 = vmatpush1.bf16.msra.mxu0 %v1120
        %1182 = vmatprep.subr.bf16.mxu0 0
        %1183 = vmatpush1.bf16.msra.mxu0 %v1121
        %1184 = vmatprep.subr.bf16.mxu0 0
        %1185 = vmatpush1.bf16.msra.mxu0 %v1122
        %1186 = vmatprep.subr.bf16.mxu0 0
        %1187 = vmatpush1.bf16.msra.mxu0 %v1123
        %1188 = vmatprep.mubr.bf16.mxu0 %v949
        %1189 = vmatmul.mubr.bf16.gmra.mrb[0].mxu0 %v945
        %v1190 = vpop.f32.mrb[0].mxu0
        %v1191 = vadd.f32 %v1010, %v1190
        %v1192 = vpop.f32.mrb[0].mxu0
        %v1193 = vpop.f32.mrb[0].mxu0
        %v1194 = vadd.f32 %v1010, %v1193
        %v1195 = vpop.f32.mrb[0].mxu0
        %1196 = vmatprep.mubr.bf16.mxu0 %v950
        %1197 = vmatmul.mubr.bf16.gmra.mrb[0].mxu0 %v946
        %v1198 = vpop.f32.mrb[0].mxu0
        %v1199 = vadd.f32 %v1010, %v1198
        %v1200 = vpop.f32.mrb[0].mxu0
        %v1201 = vpop.f32.mrb[0].mxu0
        %v1202 = vadd.f32 %v1010, %v1201
        %v1203 = vpop.f32.mrb[0].mxu0
        %1204 = vmatprep.mubr.bf16.mxu0 %v951
        %1205 = vmatmul.mubr.bf16.gmra.mrb[0].mxu0 %v947
        %v1206 = vpop.f32.mrb[0].mxu0
        %v1207 = vadd.f32 %v1010, %v1206
        %v1208 = vpop.f32.mrb[0].mxu0
        %v1209 = vpop.f32.mrb[0].mxu0
        %v1210 = vadd.f32 %v1010, %v1209
        %v1211 = vpop.f32.mrb[0].mxu0
        %1212 = vmatprep.mubr.bf16.mxu0 %v952
        %1213 = vmatmul.mubr.bf16.gmra.mrb[0].mxu0 %v948
        %v1214 = vpop.f32.mrb[0].mxu0
        %v1215 = vadd.f32 %v1010, %v1214
        %v1216 = vpop.f32.mrb[0].mxu0
        %v1217 = vpop.f32.mrb[0].mxu0
        %v1218 = vpop.f32.mrb[0].mxu0
        %1219 = vdwg.mxu0
        %1220 = vmatprep.subr.bf16.mxu0 0
        %1221 = vmatpush1.bf16.msra.mxu0 %v1124
        %1222 = vmatprep.subr.bf16.mxu0 0
        %1223 = vmatpush1.bf16.msra.mxu0 %v1125
        %1224 = vmatprep.subr.bf16.mxu0 0
        %1225 = vmatpush1.bf16.msra.mxu0 %v1126
        %1226 = vmatprep.subr.bf16.mxu0 0
        %1227 = vmatpush1.bf16.msra.mxu0 %v1127
        %1228 = vmatprep.subr.bf16.mxu0 0
        %1229 = vmatpush1.bf16.msra.mxu0 %v1128
        %1230 = vmatprep.subr.bf16.mxu0 0
        %1231 = vmatpush1.bf16.msra.mxu0 %v1129
        %1232 = vmatprep.subr.bf16.mxu0 0
        %1233 = vmatpush1.bf16.msra.mxu0 %v1130
        %1234 = vmatprep.subr.bf16.mxu0 0
        %1235 = vmatpush1.bf16.msra.mxu0 %v1131
        %1236 = vmatprep.subr.bf16.mxu0 0
        %1237 = vmatpush1.bf16.msra.mxu0 0
        %1238 = vmatprep.subr.bf16.mxu0 0
        %1239 = vmatpush1.bf16.msra.mxu0 0
        %1240 = vmatprep.subr.bf16.mxu0 0
        %1241 = vmatpush1.bf16.msra.mxu0 0
        %1242 = vmatprep.subr.bf16.mxu0 0
        %1243 = vmatpush1.bf16.msra.mxu0 0
        %1244 = vmatprep.subr.bf16.mxu0 0
        %1245 = vmatpush1.bf16.msra.mxu0 0
        %1246 = vmatprep.subr.bf16.mxu0 0
        %1247 = vmatpush1.bf16.msra.mxu0 0
        %1248 = vmatprep.subr.bf16.mxu0 0
        %1249 = vmatpush1.bf16.msra.mxu0 0
        %1250 = vmatprep.subr.bf16.mxu0 0
        %1251 = vmatpush1.bf16.msra.mxu0 0
        %1252 = vmatprep.mubr.bf16.mxu0 0
        %1253 = vmatmul.mubr.bf16.gmra.mrb[0].mxu0 %v953
        %v1254 = vpop.f32.mrb[0].mxu0
        %v1255 = vadd.f32 %v1191, %v1254
        %v1256 = vpop.f32.mrb[0].mxu0
        %v1257 = vpop.f32.mrb[0].mxu0
        %v1258 = vadd.f32 %v1194, %v1257
        %v1259 = vpop.f32.mrb[0].mxu0
        %1260 = vmatprep.mubr.bf16.mxu0 0
        %1261 = vmatmul.mubr.bf16.gmra.mrb[0].mxu0 %v954
        %v1262 = vpop.f32.mrb[0].mxu0
        %v1263 = vadd.f32 %v1199, %v1262
        %v1264 = vpop.f32.mrb[0].mxu0
        %v1265 = vpop.f32.mrb[0].mxu0
        %v1266 = vadd.f32 %v1202, %v1265
        %v1267 = vpop.f32.mrb[0].mxu0
        %1268 = vmatprep.mubr.bf16.mxu0 0
        %1269 = vmatmul.mubr.bf16.gmra.mrb[0].mxu0 %v955
        %v1270 = vpop.f32.mrb[0].mxu0
        %v1271 = vadd.f32 %v1207, %v1270
        %v1272 = vpop.f32.mrb[0].mxu0
        %v1273 = vpop.f32.mrb[0].mxu0
        %v1274 = vadd.f32 %v1210, %v1273
        %v1275 = vpop.f32.mrb[0].mxu0
        %1276 = vmatprep.mubr.bf16.mxu0 0
        %1277 = vmatmul.mubr.bf16.gmra.mrb[0].mxu0 %v956
        %v1278 = vpop.f32.mrb[0].mxu0
        %v1279 = vadd.f32 %v1215, %v1278
        %v1280 = vpop.f32.mrb[0].mxu0
        %v1281 = vpop.f32.mrb[0].mxu0
        %v1282 = vpop.f32.mrb[0].mxu0
        %1283 = vdwg.mxu0
        %v1284 = vmax.f32 %v1255, 0.0
        %v1285 = vmax.f32 %v1258, 0.0
        %v1286 = vmax.f32 %v1263, 0.0
        %v1287 = vmax.f32 %v1266, 0.0
        %v1288 = vmax.f32 %v1271, 0.0
        %v1289 = vmax.f32 %v1274, 0.0
        %v1290 = vmax.f32 %v1279, 0.0
        %v1298 = vrot.slane %v1284, 7
        %v1299 = vrot.slane %v1285, 7
        %v1300 = vsel %vm356, %v1298, %v1299
        %v1301 = vrot.slane %v1286, 7
        %v1302 = vsel %vm356, %v1299, %v1301
        %v1303 = vrot.slane %v1287, 7
        %v1304 = vsel %vm356, %v1301, %v1303
        %v1305 = vrot.slane %v1288, 7
        %v1306 = vsel %vm356, %v1303, %v1305
        %v1307 = vrot.slane %v1289, 7
        %v1308 = vsel %vm356, %v1305, %v1307
        %v1309 = vrot.slane %v1290, 7
        %v1310 = vsel %vm356, %v1307, %v1309
        %v1318 = vsel %vm356, 0.0, %v1298
        %v1319 = vsel %vm868, 0.0, %v1318
        %v1320 = vsel %vm869, 0.0, %v1300
        %v1321 = vsel %vm870, 0.0, %v1302
        %v1322 = vsel %vm871, 0.0, %v1304
        %v1323 = vsel %vm872, 0.0, %v1306
        %v1324 = vsel %vm873, 0.0, %v1308
        %v1325 = vsel %vm874, 0.0, %v1310
        %v1326 = vrot.slane %v1284, 1
        %v1327 = vrot.slane %v1285, 1
        %v1328 = vsel %vm336, %v1326, %v1327
        %v1329 = vrot.slane %v1286, 1
        %v1330 = vsel %vm336, %v1327, %v1329
        %v1331 = vrot.slane %v1287, 1
        %v1332 = vsel %vm336, %v1329, %v1331
        %v1333 = vrot.slane %v1288, 1
        %v1334 = vsel %vm336, %v1331, %v1333
        %v1335 = vrot.slane %v1289, 1
        %v1336 = vsel %vm336, %v1333, %v1335
        %v1337 = vrot.slane %v1290, 1
        %v1338 = vsel %vm336, %v1335, %v1337
        %v1346 = vsel %vm336, %v1337, 0.0
        %v1347 = vsel %vm910, 0.0, %v1328
        %v1348 = vsel %vm911, 0.0, %v1330
        %v1349 = vsel %vm912, 0.0, %v1332
        %v1350 = vsel %vm913, 0.0, %v1334
        %v1351 = vsel %vm914, 0.0, %v1336
        %v1352 = vsel %vm915, 0.0, %v1338
        %v1353 = vsel %vm916, 0.0, %v1346
        %v1354 = vpack.c.bf16 %v1320, %v1319
        %v1355 = vpack.c.bf16 %v1322, %v1321
        %v1356 = vpack.c.bf16 %v1324, %v1323
        %v1357 = vpack.c.bf16 %v1325, %v1325
        %v1358 = vpack.c.bf16 %v1285, %v1284
        %v1359 = vpack.c.bf16 %v1287, %v1286
        %v1360 = vpack.c.bf16 %v1289, %v1288
        %v1361 = vpack.c.bf16 %v1290, %v1290
        %v1362 = vpack.c.bf16 %v1348, %v1347
        %v1363 = vpack.c.bf16 %v1350, %v1349
        %v1364 = vpack.c.bf16 %v1352, %v1351
        %v1365 = vpack.c.bf16 %v1353, %v1353
        %1366 = vmatprep.subr.bf16.mxu0 0
        %1367 = vmatpush1.bf16.msra.mxu0 %v1108
        %1368 = vmatprep.subr.bf16.mxu0 0
        %1369 = vmatpush1.bf16.msra.mxu0 %v1109
        %1370 = vmatprep.subr.bf16.mxu0 0
        %1371 = vmatpush1.bf16.msra.mxu0 %v1110
        %1372 = vmatprep.subr.bf16.mxu0 0
        %1373 = vmatpush1.bf16.msra.mxu0 %v1111
        %1374 = vmatprep.subr.bf16.mxu0 0
        %1375 = vmatpush1.bf16.msra.mxu0 %v1112
        %1376 = vmatprep.subr.bf16.mxu0 0
        %1377 = vmatpush1.bf16.msra.mxu0 %v1113
        %1378 = vmatprep.subr.bf16.mxu0 0
        %1379 = vmatpush1.bf16.msra.mxu0 %v1114
        %1380 = vmatprep.subr.bf16.mxu0 0
        %1381 = vmatpush1.bf16.msra.mxu0 %v1115
        %1382 = vmatprep.subr.bf16.mxu0 0
        %1383 = vmatpush1.bf16.msra.mxu0 %v1116
        %1384 = vmatprep.subr.bf16.mxu0 0
        %1385 = vmatpush1.bf16.msra.mxu0 %v1117
        %1386 = vmatprep.subr.bf16.mxu0 0
        %1387 = vmatpush1.bf16.msra.mxu0 %v1118
        %1388 = vmatprep.subr.bf16.mxu0 0
        %1389 = vmatpush1.bf16.msra.mxu0 %v1119
        %1390 = vmatprep.subr.bf16.mxu0 0
        %1391 = vmatpush1.bf16.msra.mxu0 %v1120
        %1392 = vmatprep.subr.bf16.mxu0 0
        %1393 = vmatpush1.bf16.msra.mxu0 %v1121
        %1394 = vmatprep.subr.bf16.mxu0 0
        %1395 = vmatpush1.bf16.msra.mxu0 %v1122
        %1396 = vmatprep.subr.bf16.mxu0 0
        %1397 = vmatpush1.bf16.msra.mxu0 %v1123
        %1398 = vmatprep.mubr.bf16.mxu0 %v1358
        %1399 = vmatmul.mubr.bf16.gmra.mrb[0].mxu0 %v1354
        %v1400 = vpop.f32.mrb[0].mxu0
        %v1401 = vadd.f32 %v1010, %v1400
        %v1402 = vpop.f32.mrb[0].mxu0
        %v1403 = vpop.f32.mrb[0].mxu0
        %v1404 = vadd.f32 %v1010, %v1403
        %v1405 = vpop.f32.mrb[0].mxu0
        %1406 = vmatprep.mubr.bf16.mxu0 %v1359
        %1407 = vmatmul.mubr.bf16.gmra.mrb[0].mxu0 %v1355
        %v1408 = vpop.f32.mrb[0].mxu0
        %v1409 = vadd.f32 %v1010, %v1408
        %v1410 = vpop.f32.mrb[0].mxu0
        %v1411 = vpop.f32.mrb[0].mxu0
        %v1412 = vadd.f32 %v1010, %v1411
        %v1413 = vpop.f32.mrb[0].mxu0
        %1414 = vmatprep.mubr.bf16.mxu0 %v1360
        %1415 = vmatmul.mubr.bf16.gmra.mrb[0].mxu0 %v1356
        %v1416 = vpop.f32.mrb[0].mxu0
        %v1417 = vadd.f32 %v1010, %v1416
        %v1418 = vpop.f32.mrb[0].mxu0
        %v1419 = vpop.f32.mrb[0].mxu0
        %v1420 = vadd.f32 %v1010, %v1419
        %v1421 = vpop.f32.mrb[0].mxu0
        %1422 = vmatprep.mubr.bf16.mxu0 %v1361
        %1423 = vmatmul.mubr.bf16.gmra.mrb[0].mxu0 %v1357
        %v1424 = vpop.f32.mrb[0].mxu0
        %v1425 = vadd.f32 %v1010, %v1424
        %v1426 = vpop.f32.mrb[0].mxu0
        %v1427 = vpop.f32.mrb[0].mxu0
        %v1428 = vpop.f32.mrb[0].mxu0
        %1429 = vdwg.mxu0
        %1430 = vmatprep.subr.bf16.mxu0 0
        %1431 = vmatpush1.bf16.msra.mxu0 %v1124
        %1432 = vmatprep.subr.bf16.mxu0 0
        %1433 = vmatpush1.bf16.msra.mxu0 %v1125
        %1434 = vmatprep.subr.bf16.mxu0 0
        %1435 = vmatpush1.bf16.msra.mxu0 %v1126
        %1436 = vmatprep.subr.bf16.mxu0 0
        %1437 = vmatpush1.bf16.msra.mxu0 %v1127
        %1438 = vmatprep.subr.bf16.mxu0 0
        %1439 = vmatpush1.bf16.msra.mxu0 %v1128
        %1440 = vmatprep.subr.bf16.mxu0 0
        %1441 = vmatpush1.bf16.msra.mxu0 %v1129
        %1442 = vmatprep.subr.bf16.mxu0 0
        %1443 = vmatpush1.bf16.msra.mxu0 %v1130
        %1444 = vmatprep.subr.bf16.mxu0 0
        %1445 = vmatpush1.bf16.msra.mxu0 %v1131
        %1446 = vmatprep.subr.bf16.mxu0 0
        %1447 = vmatpush1.bf16.msra.mxu0 0
        %1448 = vmatprep.subr.bf16.mxu0 0
        %1449 = vmatpush1.bf16.msra.mxu0 0
        %1450 = vmatprep.subr.bf16.mxu0 0
        %1451 = vmatpush1.bf16.msra.mxu0 0
        %1452 = vmatprep.subr.bf16.mxu0 0
        %1453 = vmatpush1.bf16.msra.mxu0 0
        %1454 = vmatprep.subr.bf16.mxu0 0
        %1455 = vmatpush1.bf16.msra.mxu0 0
        %1456 = vmatprep.subr.bf16.mxu0 0
        %1457 = vmatpush1.bf16.msra.mxu0 0
        %1458 = vmatprep.subr.bf16.mxu0 0
        %1459 = vmatpush1.bf16.msra.mxu0 0
        %1460 = vmatprep.subr.bf16.mxu0 0
        %1461 = vmatpush1.bf16.msra.mxu0 0
        %1462 = vmatprep.mubr.bf16.mxu0 0
        %1463 = vmatmul.mubr.bf16.gmra.mrb[0].mxu0 %v1362
        %v1464 = vpop.f32.mrb[0].mxu0
        %v1465 = vadd.f32 %v1401, %v1464
        %v1466 = vpop.f32.mrb[0].mxu0
        %v1467 = vpop.f32.mrb[0].mxu0
        %v1468 = vadd.f32 %v1404, %v1467
        %v1469 = vpop.f32.mrb[0].mxu0
        %1470 = vmatprep.mubr.bf16.mxu0 0
        %1471 = vmatmul.mubr.bf16.gmra.mrb[0].mxu0 %v1363
        %v1472 = vpop.f32.mrb[0].mxu0
        %v1473 = vadd.f32 %v1409, %v1472
        %v1474 = vpop.f32.mrb[0].mxu0
        %v1475 = vpop.f32.mrb[0].mxu0
        %v1476 = vadd.f32 %v1412, %v1475
        %v1477 = vpop.f32.mrb[0].mxu0
        %1478 = vmatprep.mubr.bf16.mxu0 0
        %1479 = vmatmul.mubr.bf16.gmra.mrb[0].mxu0 %v1364
        %v1480 = vpop.f32.mrb[0].mxu0
        %v1481 = vadd.f32 %v1417, %v1480
        %v1482 = vpop.f32.mrb[0].mxu0
        %v1483 = vpop.f32.mrb[0].mxu0
        %v1484 = vadd.f32 %v1420, %v1483
        %v1485 = vpop.f32.mrb[0].mxu0
        %1486 = vmatprep.mubr.bf16.mxu0 0
        %1487 = vmatmul.mubr.bf16.gmra.mrb[0].mxu0 %v1365
        %v1488 = vpop.f32.mrb[0].mxu0
        %v1489 = vadd.f32 %v1425, %v1488
        %v1490 = vpop.f32.mrb[0].mxu0
        %v1491 = vpop.f32.mrb[0].mxu0
        %v1492 = vpop.f32.mrb[0].mxu0
        %1493 = vdwg.mxu0
        %v1501 = vrot.slane %v1465, 1
        %v1502 = vrot.slane %v1468, 1
        %v1503 = vsel %vm336, %v1501, %v1502
        %v1504 = vrot.slane %v1473, 1
        %v1505 = vsel %vm336, %v1502, %v1504
        %v1506 = vrot.slane %v1476, 1
        %v1507 = vsel %vm336, %v1504, %v1506
        %v1508 = vrot.slane %v1481, 1
        %v1509 = vsel %vm336, %v1506, %v1508
        %v1510 = vrot.slane %v1484, 1
        %v1511 = vsel %vm336, %v1508, %v1510
        %v1512 = vrot.slane %v1489, 1
        %v1513 = vsel %vm336, %v1510, %v1512
        %v1521 = vsel %vm336, %v1512, 0.0
        %v1522 = vsel %vm910, 0.0, %v1503
        %v1523 = vsel %vm911, 0.0, %v1505
        %v1524 = vsel %vm912, 0.0, %v1507
        %v1525 = vsel %vm913, 0.0, %v1509
        %v1526 = vsel %vm914, 0.0, %v1511
        %v1527 = vsel %vm915, 0.0, %v1513
        %v1528 = vsel %vm916, 0.0, %v1521
        %vm1529 = vcmp.ge.s32.totalorder %v861, 12
        %vm1530 = vcmp.ge.s32.totalorder %v862, 12
        %vm1531 = vcmp.ge.s32.totalorder %v863, 12
        %vm1532 = vcmp.ge.s32.totalorder %v864, 12
        %vm1533 = vcmp.ge.s32.totalorder %v865, 12
        %vm1534 = vcmp.ge.s32.totalorder %v866, 12
        %vm1535 = vcmp.ge.s32.totalorder %v867, 12
        %v1536 = vrot.slane %v1465, 2
        %v1537 = vrot.slane %v1468, 2
        %v1538 = vsel %vm303, %v1536, %v1537
        %v1539 = vrot.slane %v1473, 2
        %v1540 = vsel %vm303, %v1537, %v1539
        %v1541 = vrot.slane %v1476, 2
        %v1542 = vsel %vm303, %v1539, %v1541
        %v1543 = vrot.slane %v1481, 2
        %v1544 = vsel %vm303, %v1541, %v1543
        %v1545 = vrot.slane %v1484, 2
        %v1546 = vsel %vm303, %v1543, %v1545
        %v1547 = vrot.slane %v1489, 2
        %v1548 = vsel %vm303, %v1545, %v1547
        %v1556 = vsel %vm303, %v1547, 0.0
        %v1557 = vsel %vm1529, 0.0, %v1538
        %v1558 = vsel %vm1530, 0.0, %v1540
        %v1559 = vsel %vm1531, 0.0, %v1542
        %v1560 = vsel %vm1532, 0.0, %v1544
        %v1561 = vsel %vm1533, 0.0, %v1546
        %v1562 = vsel %vm1534, 0.0, %v1548
        %v1563 = vsel %vm1535, 0.0, %v1556
        %v1564 = vmax.f32 %v1465, %v1522
        %v1565 = vmax.f32 %v1468, %v1523
        %v1566 = vmax.f32 %v1473, %v1524
        %v1567 = vmax.f32 %v1476, %v1525
        %v1568 = vmax.f32 %v1481, %v1526
        %v1569 = vmax.f32 %v1484, %v1527
        %v1570 = vmax.f32 %v1489, %v1528
        %v1571 = vmax.f32 %v1564, %v1557
        %v1572 = vmax.f32 %v1565, %v1558
        %v1573 = vmax.f32 %v1566, %v1559
        %v1574 = vmax.f32 %v1567, %v1560
        %v1575 = vmax.f32 %v1568, %v1561
        %v1576 = vmax.f32 %v1569, %v1562
        %v1577 = vmax.f32 %v1570, %v1563
        %v1579 = vrot.slane %v1571, 1
        %v1581 = vrot.slane %v1571, 2
        %v1583 = vrot.slane %v1571, 3
        %v1586 = vrot.slane %v1572, 4
        %v1588 = vrot.slane %v1572, 5
        %v1590 = vrot.slane %v1572, 6
        %v1592 = vrot.slane %v1572, 7
        %v1595 = vrot.slane %v1573, 1
        %v1597 = vrot.slane %v1573, 2
        %v1599 = vrot.slane %v1573, 3
        %v1602 = vrot.slane %v1574, 4
        %v1604 = vrot.slane %v1574, 5
        %v1606 = vrot.slane %v1574, 6
        %v1608 = vrot.slane %v1574, 7
        %v1610 = vsel %vm356, %v1571, %v1579
        %v1611 = vsel %vm321, %v1610, %v1581
        %v1612 = vsel %vm349, %v1611, %v1583
        %v1613 = vsel %vm312, %v1612, %v1586
        %v1614 = vsel %vm342, %v1613, %v1588
        %v1615 = vsel %vm303, %v1614, %v1590
        %v1616 = vsel %vm336, %v1615, %v1592
        %v1617 = vsel %vm356, %v1573, %v1595
        %v1618 = vsel %vm321, %v1617, %v1597
        %v1619 = vsel %vm349, %v1618, %v1599
        %v1620 = vsel %vm312, %v1619, %v1602
        %v1621 = vsel %vm342, %v1620, %v1604
        %v1622 = vsel %vm303, %v1621, %v1606
        %v1623 = vsel %vm336, %v1622, %v1608
        %v1625 = vrot.slane %v1575, 1
        %v1627 = vrot.slane %v1575, 2
        %v1629 = vrot.slane %v1575, 3
        %v1632 = vrot.slane %v1576, 4
        %v1634 = vrot.slane %v1576, 5
        %v1636 = vrot.slane %v1576, 6
        %v1638 = vrot.slane %v1576, 7
        %v1641 = vrot.slane %v1577, 1
        %v1643 = vrot.slane %v1577, 2
        %v1645 = vrot.slane %v1577, 3
        %v1647 = vsel %vm356, %v1575, %v1625
        %v1648 = vsel %vm321, %v1647, %v1627
        %v1649 = vsel %vm349, %v1648, %v1629
        %v1650 = vsel %vm312, %v1649, %v1632
        %v1651 = vsel %vm342, %v1650, %v1634
        %v1652 = vsel %vm303, %v1651, %v1636
        %v1653 = vsel %vm336, %v1652, %v1638
        %v1654 = vsel %vm356, %v1577, %v1641
        %v1655 = vsel %vm321, %v1654, %v1643
        %v1656 = vsel %vm349, %v1655, %v1645
        %v1657 = vmax.f32 %v1616, 0.0
        %v1658 = vmax.f32 %v1623, 0.0
        %v1659 = vmax.f32 %v1653, 0.0
        %v1660 = vmax.f32 %v1656, 0.0
        %vm1661 = vcmp.lt.s32.totalorder %v728, 0
        %v1662 = vsub.s32 0, %v728
        %v1663 = vsel %vm1661, %v1662, %v728
        %v1664 = vmul.u32.u64.compose %v1663, 2454267026
        %v1665 = vextract.low.u32 %v1664
        %v1666 = vextract.high.u32 %v1664
        %vm1667 = vc.u32 %v1665, 2454267026
        %v1668 = vsel %vm1667, 1, 0
        %v1669 = vadd.s32 %v1666, %v1668
        %v1670 = vshrl.u32 %v1669, 2
        %v1671 = vmul.u32 %v1670, 7
        %v1672 = vsub.s32 %v1663, %v1671
        %v1673 = vsub.s32 0, %v1672
        %v1674 = vsel %vm1661, %v1673, %v1672
        %vm1675 = vcmp.lt.s32.totalorder %v729, 0
        %v1676 = vsub.s32 0, %v729
        %v1677 = vsel %vm1675, %v1676, %v729
        %v1678 = vmul.u32.u64.compose %v1677, 2454267026
        %v1679 = vextract.low.u32 %v1678
        %v1680 = vextract.high.u32 %v1678
        %vm1681 = vc.u32 %v1679, 2454267026
        %v1682 = vsel %vm1681, 1, 0
        %v1683 = vadd.s32 %v1680, %v1682
        %v1684 = vshrl.u32 %v1683, 2
        %v1685 = vmul.u32 %v1684, 7
        %v1686 = vsub.s32 %v1677, %v1685
        %v1687 = vsub.s32 0, %v1686
        %v1688 = vsel %vm1675, %v1687, %v1686
        %vm1689 = vcmp.lt.s32.totalorder %v730, 0
        %v1690 = vsub.s32 0, %v730
        %v1691 = vsel %vm1689, %v1690, %v730
        %v1692 = vmul.u32.u64.compose %v1691, 2454267026
        %v1693 = vextract.low.u32 %v1692
        %v1694 = vextract.high.u32 %v1692
        %vm1695 = vc.u32 %v1693, 2454267026
        %v1696 = vsel %vm1695, 1, 0
        %v1697 = vadd.s32 %v1694, %v1696
        %v1698 = vshrl.u32 %v1697, 2
        %v1699 = vmul.u32 %v1698, 7
        %v1700 = vsub.s32 %v1691, %v1699
        %v1701 = vsub.s32 0, %v1700
        %v1702 = vsel %vm1689, %v1701, %v1700
        %vm1703 = vcmp.lt.s32.totalorder %v731, 0
        %v1704 = vsub.s32 0, %v731
        %v1705 = vsel %vm1703, %v1704, %v731
        %v1706 = vmul.u32.u64.compose %v1705, 2454267026
        %v1707 = vextract.low.u32 %v1706
        %v1708 = vextract.high.u32 %v1706
        %vm1709 = vc.u32 %v1707, 2454267026
        %v1710 = vsel %vm1709, 1, 0
        %v1711 = vadd.s32 %v1708, %v1710
        %v1712 = vshrl.u32 %v1711, 2
        %v1713 = vmul.u32 %v1712, 7
        %v1714 = vsub.s32 %v1705, %v1713
        %v1715 = vsub.s32 0, %v1714
        %v1716 = vsel %vm1703, %v1715, %v1714
        %vm1717 = vcmp.ne.s32.totalorder %v1674, 0
        %vm1718 = vcmp.ne.s32.totalorder %v1688, 0
        %vm1719 = vcmp.ne.s32.totalorder %v1702, 0
        %vm1720 = vcmp.ne.s32.totalorder %v1716, 0
        %vm1721 = vcmp.lt.s32.totalorder %v1674, 0
        %vm1722 = vcmp.lt.s32.totalorder %v1688, 0
        %vm1723 = vcmp.lt.s32.totalorder %v1702, 0
        %vm1724 = vcmp.lt.s32.totalorder %v1716, 0
        %vm1725 = vmand %vm1721, %vm1717
        %vm1726 = vmand %vm1722, %vm1718
        %vm1727 = vmand %vm1723, %vm1719
        %vm1728 = vmand %vm1724, %vm1720
        %v1729 = vadd.s32 %v1674, 7
        %v1730 = vadd.s32 %v1688, 7
        %v1731 = vadd.s32 %v1702, 7
        %v1732 = vadd.s32 %v1716, 7
        %v1733 = vsel %vm1725, %v1729, %v1674
        %v1734 = vsel %vm1726, %v1730, %v1688
        %v1735 = vsel %vm1727, %v1731, %v1702
        %v1736 = vsel %vm1728, %v1732, %v1716
        %vm1737 = vcmp.eq.s32.totalorder %v1733, 0
        %vm1738 = vcmp.eq.s32.totalorder %v1734, 0
        %vm1739 = vcmp.eq.s32.totalorder %v1735, 0
        %vm1740 = vcmp.eq.s32.totalorder %v1736, 0
        %v1745 = vrot.slane %v1657, 7
        %v1746 = vrot.slane %v1658, 7
        %v1747 = vsel %vm356, %v1745, %v1746
        %v1748 = vrot.slane %v1659, 7
        %v1749 = vsel %vm356, %v1746, %v1748
        %v1750 = vrot.slane %v1660, 7
        %v1751 = vsel %vm356, %v1748, %v1750
        %v1756 = vsel %vm356, 0.0, %v1745
        %v1757 = vsel %vm1737, 0.0, %v1756
        %v1758 = vsel %vm1738, 0.0, %v1747
        %v1759 = vsel %vm1739, 0.0, %v1749
        %v1760 = vsel %vm1740, 0.0, %v1751
        %vm1761 = vcmp.eq.s32.totalorder %v1733, 6
        %vm1762 = vcmp.eq.s32.totalorder %v1734, 6
        %vm1763 = vcmp.eq.s32.totalorder %v1735, 6
        %vm1764 = vcmp.eq.s32.totalorder %v1736, 6
        %v1765 = vrot.slane %v1657, 1
        %v1766 = vrot.slane %v1658, 1
        %v1767 = vsel %vm336, %v1765, %v1766
        %v1768 = vrot.slane %v1659, 1
        %v1769 = vsel %vm336, %v1766, %v1768
        %v1770 = vrot.slane %v1660, 1
        %v1771 = vsel %vm336, %v1768, %v1770
        %v1776 = vsel %vm349, %v1770, 0.0
        %v1777 = vsel %vm1761, 0.0, %v1767
        %v1778 = vsel %vm1762, 0.0, %v1769
        %v1779 = vsel %vm1763, 0.0, %v1771
        %v1780 = vsel %vm1764, 0.0, %v1776
        %v1781 = vpack.c.bf16 %v1758, %v1757
        %v1782 = vpack.c.bf16 %v1760, %v1759
        %v1783 = vpack.c.bf16 %v1658, %v1657
        %v1784 = vpack.c.bf16 %v1660, %v1659
        %v1785 = vpack.c.bf16 %v1778, %v1777
        %v1786 = vpack.c.bf16 %v1780, %v1779
        %1787 = vmatprep.subr.bf16.mxu0 0
        %1788 = vmatpush1.bf16.msra.mxu0 %v1108
        %1789 = vmatprep.subr.bf16.mxu0 0
        %1790 = vmatpush1.bf16.msra.mxu0 %v1109
        %1791 = vmatprep.subr.bf16.mxu0 0
        %1792 = vmatpush1.bf16.msra.mxu0 %v1110
        %1793 = vmatprep.subr.bf16.mxu0 0
        %1794 = vmatpush1.bf16.msra.mxu0 %v1111
        %1795 = vmatprep.subr.bf16.mxu0 0
        %1796 = vmatpush1.bf16.msra.mxu0 %v1112
        %1797 = vmatprep.subr.bf16.mxu0 0
        %1798 = vmatpush1.bf16.msra.mxu0 %v1113
        %1799 = vmatprep.subr.bf16.mxu0 0
        %1800 = vmatpush1.bf16.msra.mxu0 %v1114
        %1801 = vmatprep.subr.bf16.mxu0 0
        %1802 = vmatpush1.bf16.msra.mxu0 %v1115
        %1803 = vmatprep.subr.bf16.mxu0 0
        %1804 = vmatpush1.bf16.msra.mxu0 %v1116
        %1805 = vmatprep.subr.bf16.mxu0 0
        %1806 = vmatpush1.bf16.msra.mxu0 %v1117
        %1807 = vmatprep.subr.bf16.mxu0 0
        %1808 = vmatpush1.bf16.msra.mxu0 %v1118
        %1809 = vmatprep.subr.bf16.mxu0 0
        %1810 = vmatpush1.bf16.msra.mxu0 %v1119
        %1811 = vmatprep.subr.bf16.mxu0 0
        %1812 = vmatpush1.bf16.msra.mxu0 %v1120
        %1813 = vmatprep.subr.bf16.mxu0 0
        %1814 = vmatpush1.bf16.msra.mxu0 %v1121
        %1815 = vmatprep.subr.bf16.mxu0 0
        %1816 = vmatpush1.bf16.msra.mxu0 %v1122
        %1817 = vmatprep.subr.bf16.mxu0 0
        %1818 = vmatpush1.bf16.msra.mxu0 %v1123
        %1819 = vmatprep.mubr.bf16.mxu0 %v1783
        %1820 = vmatmul.mubr.bf16.gmra.mrb[0].mxu0 %v1781
        %v1821 = vpop.f32.mrb[0].mxu0
        %v1822 = vadd.f32 %v1010, %v1821
        %v1823 = vpop.f32.mrb[0].mxu0
        %v1824 = vpop.f32.mrb[0].mxu0
        %v1825 = vadd.f32 %v1010, %v1824
        %v1826 = vpop.f32.mrb[0].mxu0
        %1827 = vmatprep.mubr.bf16.mxu0 %v1784
        %1828 = vmatmul.mubr.bf16.gmra.mrb[0].mxu0 %v1782
        %v1829 = vpop.f32.mrb[0].mxu0
        %v1830 = vadd.f32 %v1010, %v1829
        %v1831 = vpop.f32.mrb[0].mxu0
        %v1832 = vpop.f32.mrb[0].mxu0
        %v1833 = vadd.f32 %v1010, %v1832
        %v1834 = vpop.f32.mrb[0].mxu0
        %1835 = vdwg.mxu0
        %1836 = vmatprep.subr.bf16.mxu0 0
        %1837 = vmatpush1.bf16.msra.mxu0 %v1124
        %1838 = vmatprep.subr.bf16.mxu0 0
        %1839 = vmatpush1.bf16.msra.mxu0 %v1125
        %1840 = vmatprep.subr.bf16.mxu0 0
        %1841 = vmatpush1.bf16.msra.mxu0 %v1126
        %1842 = vmatprep.subr.bf16.mxu0 0
        %1843 = vmatpush1.bf16.msra.mxu0 %v1127
        %1844 = vmatprep.subr.bf16.mxu0 0
        %1845 = vmatpush1.bf16.msra.mxu0 %v1128
        %1846 = vmatprep.subr.bf16.mxu0 0
        %1847 = vmatpush1.bf16.msra.mxu0 %v1129
        %1848 = vmatprep.subr.bf16.mxu0 0
        %1849 = vmatpush1.bf16.msra.mxu0 %v1130
        %1850 = vmatprep.subr.bf16.mxu0 0
        %1851 = vmatpush1.bf16.msra.mxu0 %v1131
        %1852 = vmatprep.subr.bf16.mxu0 0
        %1853 = vmatpush1.bf16.msra.mxu0 0
        %1854 = vmatprep.subr.bf16.mxu0 0
        %1855 = vmatpush1.bf16.msra.mxu0 0
        %1856 = vmatprep.subr.bf16.mxu0 0
        %1857 = vmatpush1.bf16.msra.mxu0 0
        %1858 = vmatprep.subr.bf16.mxu0 0
        %1859 = vmatpush1.bf16.msra.mxu0 0
        %1860 = vmatprep.subr.bf16.mxu0 0
        %1861 = vmatpush1.bf16.msra.mxu0 0
        %1862 = vmatprep.subr.bf16.mxu0 0
        %1863 = vmatpush1.bf16.msra.mxu0 0
        %1864 = vmatprep.subr.bf16.mxu0 0
        %1865 = vmatpush1.bf16.msra.mxu0 0
        %1866 = vmatprep.subr.bf16.mxu0 0
        %1867 = vmatpush1.bf16.msra.mxu0 0
        %1868 = vmatprep.mubr.bf16.mxu0 0
        %1869 = vmatmul.mubr.bf16.gmra.mrb[0].mxu0 %v1785
        %v1870 = vpop.f32.mrb[0].mxu0
        %v1871 = vadd.f32 %v1822, %v1870
        %v1872 = vpop.f32.mrb[0].mxu0
        %v1873 = vpop.f32.mrb[0].mxu0
        %v1874 = vadd.f32 %v1825, %v1873
        %v1875 = vpop.f32.mrb[0].mxu0
        %1876 = vmatprep.mubr.bf16.mxu0 0
        %1877 = vmatmul.mubr.bf16.gmra.mrb[0].mxu0 %v1786
        %v1878 = vpop.f32.mrb[0].mxu0
        %v1879 = vadd.f32 %v1830, %v1878
        %v1880 = vpop.f32.mrb[0].mxu0
        %v1881 = vpop.f32.mrb[0].mxu0
        %v1882 = vadd.f32 %v1833, %v1881
        %v1883 = vpop.f32.mrb[0].mxu0
        %1884 = vdwg.mxu0
        %v1885 = vmax.f32 %v1871, 0.0
        %v1886 = vmax.f32 %v1874, 0.0
        %v1887 = vmax.f32 %v1879, 0.0
        %v1888 = vmax.f32 %v1882, 0.0
        %v1893 = vrot.slane %v1885, 7
        %v1894 = vrot.slane %v1886, 7
        %v1895 = vsel %vm356, %v1893, %v1894
        %v1896 = vrot.slane %v1887, 7
        %v1897 = vsel %vm356, %v1894, %v1896
        %v1898 = vrot.slane %v1888, 7
        %v1899 = vsel %vm356, %v1896, %v1898
        %v1904 = vsel %vm356, 0.0, %v1893
        %v1905 = vsel %vm1737, 0.0, %v1904
        %v1906 = vsel %vm1738, 0.0, %v1895
        %v1907 = vsel %vm1739, 0.0, %v1897
        %v1908 = vsel %vm1740, 0.0, %v1899
        %v1909 = vrot.slane %v1885, 1
        %v1910 = vrot.slane %v1886, 1
        %v1911 = vsel %vm336, %v1909, %v1910
        %v1912 = vrot.slane %v1887, 1
        %v1913 = vsel %vm336, %v1910, %v1912
        %v1914 = vrot.slane %v1888, 1
        %v1915 = vsel %vm336, %v1912, %v1914
        %v1920 = vsel %vm349, %v1914, 0.0
        %v1921 = vsel %vm1761, 0.0, %v1911
        %v1922 = vsel %vm1762, 0.0, %v1913
        %v1923 = vsel %vm1763, 0.0, %v1915
        %v1924 = vsel %vm1764, 0.0, %v1920
        %v1925 = vpack.c.bf16 %v1906, %v1905
        %v1926 = vpack.c.bf16 %v1908, %v1907
        %v1927 = vpack.c.bf16 %v1886, %v1885
        %v1928 = vpack.c.bf16 %v1888, %v1887
        %v1929 = vpack.c.bf16 %v1922, %v1921
        %v1930 = vpack.c.bf16 %v1924, %v1923
        %1931 = vmatprep.subr.bf16.mxu0 0
        %1932 = vmatpush1.bf16.msra.mxu0 %v1108
        %1933 = vmatprep.subr.bf16.mxu0 0
        %1934 = vmatpush1.bf16.msra.mxu0 %v1109
        %1935 = vmatprep.subr.bf16.mxu0 0
        %1936 = vmatpush1.bf16.msra.mxu0 %v1110
        %1937 = vmatprep.subr.bf16.mxu0 0
        %1938 = vmatpush1.bf16.msra.mxu0 %v1111
        %1939 = vmatprep.subr.bf16.mxu0 0
        %1940 = vmatpush1.bf16.msra.mxu0 %v1112
        %1941 = vmatprep.subr.bf16.mxu0 0
        %1942 = vmatpush1.bf16.msra.mxu0 %v1113
        %1943 = vmatprep.subr.bf16.mxu0 0
        %1944 = vmatpush1.bf16.msra.mxu0 %v1114
        %1945 = vmatprep.subr.bf16.mxu0 0
        %1946 = vmatpush1.bf16.msra.mxu0 %v1115
        %1947 = vmatprep.subr.bf16.mxu0 0
        %1948 = vmatpush1.bf16.msra.mxu0 %v1116
        %1949 = vmatprep.subr.bf16.mxu0 0
        %1950 = vmatpush1.bf16.msra.mxu0 %v1117
        %1951 = vmatprep.subr.bf16.mxu0 0
        %1952 = vmatpush1.bf16.msra.mxu0 %v1118
        %1953 = vmatprep.subr.bf16.mxu0 0
        %1954 = vmatpush1.bf16.msra.mxu0 %v1119
        %1955 = vmatprep.subr.bf16.mxu0 0
        %1956 = vmatpush1.bf16.msra.mxu0 %v1120
        %1957 = vmatprep.subr.bf16.mxu0 0
        %1958 = vmatpush1.bf16.msra.mxu0 %v1121
        %1959 = vmatprep.subr.bf16.mxu0 0
        %1960 = vmatpush1.bf16.msra.mxu0 %v1122
        %1961 = vmatprep.subr.bf16.mxu0 0
        %1962 = vmatpush1.bf16.msra.mxu0 %v1123
        %1963 = vmatprep.mubr.bf16.mxu0 %v1927
        %1964 = vmatmul.mubr.bf16.gmra.mrb[0].mxu0 %v1925
        %v1965 = vpop.f32.mrb[0].mxu0
        %v1966 = vadd.f32 %v1010, %v1965
        %v1967 = vpop.f32.mrb[0].mxu0
        %v1968 = vpop.f32.mrb[0].mxu0
        %v1969 = vadd.f32 %v1010, %v1968
        %v1970 = vpop.f32.mrb[0].mxu0
        %1971 = vmatprep.mubr.bf16.mxu0 %v1928
        %1972 = vmatmul.mubr.bf16.gmra.mrb[0].mxu0 %v1926
        %v1973 = vpop.f32.mrb[0].mxu0
        %v1974 = vadd.f32 %v1010, %v1973
        %v1975 = vpop.f32.mrb[0].mxu0
        %v1976 = vpop.f32.mrb[0].mxu0
        %v1977 = vadd.f32 %v1010, %v1976
        %v1978 = vpop.f32.mrb[0].mxu0
        %1979 = vdwg.mxu0
        %1980 = vmatprep.subr.bf16.mxu0 0
        %1981 = vmatpush1.bf16.msra.mxu0 %v1124
        %1982 = vmatprep.subr.bf16.mxu0 0
        %1983 = vmatpush1.bf16.msra.mxu0 %v1125
        %1984 = vmatprep.subr.bf16.mxu0 0
        %1985 = vmatpush1.bf16.msra.mxu0 %v1126
        %1986 = vmatprep.subr.bf16.mxu0 0
        %1987 = vmatpush1.bf16.msra.mxu0 %v1127
        %1988 = vmatprep.subr.bf16.mxu0 0
        %1989 = vmatpush1.bf16.msra.mxu0 %v1128
        %1990 = vmatprep.subr.bf16.mxu0 0
        %1991 = vmatpush1.bf16.msra.mxu0 %v1129
        %1992 = vmatprep.subr.bf16.mxu0 0
        %1993 = vmatpush1.bf16.msra.mxu0 %v1130
        %1994 = vmatprep.subr.bf16.mxu0 0
        %1995 = vmatpush1.bf16.msra.mxu0 %v1131
        %1996 = vmatprep.subr.bf16.mxu0 0
        %1997 = vmatpush1.bf16.msra.mxu0 0
        %1998 = vmatprep.subr.bf16.mxu0 0
        %1999 = vmatpush1.bf16.msra.mxu0 0
        %2000 = vmatprep.subr.bf16.mxu0 0
        %2001 = vmatpush1.bf16.msra.mxu0 0
        %2002 = vmatprep.subr.bf16.mxu0 0
        %2003 = vmatpush1.bf16.msra.mxu0 0
        %2004 = vmatprep.subr.bf16.mxu0 0
        %2005 = vmatpush1.bf16.msra.mxu0 0
        %2006 = vmatprep.subr.bf16.mxu0 0
        %2007 = vmatpush1.bf16.msra.mxu0 0
        %2008 = vmatprep.subr.bf16.mxu0 0
        %2009 = vmatpush1.bf16.msra.mxu0 0
        %2010 = vmatprep.subr.bf16.mxu0 0
        %2011 = vmatpush1.bf16.msra.mxu0 0
        %2012 = vmatprep.mubr.bf16.mxu0 0
        %2013 = vmatmul.mubr.bf16.gmra.mrb[0].mxu0 %v1929
        %v2014 = vpop.f32.mrb[0].mxu0
        %v2015 = vadd.f32 %v1966, %v2014
        %v2016 = vpop.f32.mrb[0].mxu0
        %v2017 = vpop.f32.mrb[0].mxu0
        %v2018 = vadd.f32 %v1969, %v2017
        %v2019 = vpop.f32.mrb[0].mxu0
        %2020 = vmatprep.mubr.bf16.mxu0 0
        %2021 = vmatmul.mubr.bf16.gmra.mrb[0].mxu0 %v1930
        %v2022 = vpop.f32.mrb[0].mxu0
        %v2023 = vadd.f32 %v1974, %v2022
        %v2024 = vpop.f32.mrb[0].mxu0
        %v2025 = vpop.f32.mrb[0].mxu0
        %v2026 = vadd.f32 %v1977, %v2025
        %v2027 = vpop.f32.mrb[0].mxu0
        %2028 = vdwg.mxu0
        %v2029 = vadd.f32 %v2015, %v1616
        %v2030 = vadd.f32 %v2018, %v1623
        %v2031 = vadd.f32 %v2023, %v1653
        %v2032 = vadd.f32 %v2026, %v1656
        %v2037 = vrot.slane %v2029, 1
        %v2038 = vrot.slane %v2030, 1
        %v2039 = vsel %vm336, %v2037, %v2038
        %v2040 = vrot.slane %v2031, 1
        %v2041 = vsel %vm336, %v2038, %v2040
        %v2042 = vrot.slane %v2032, 1
        %v2043 = vsel %vm336, %v2040, %v2042
        %v2048 = vsel %vm349, %v2042, 0.0
        %v2049 = vsel %vm1761, 0.0, %v2039
        %v2050 = vsel %vm1762, 0.0, %v2041
        %v2051 = vsel %vm1763, 0.0, %v2043
        %v2052 = vsel %vm1764, 0.0, %v2048
        %vm2053 = vcmp.ge.s32.totalorder %v1733, 5
        %vm2054 = vcmp.ge.s32.totalorder %v1734, 5
        %vm2055 = vcmp.ge.s32.totalorder %v1735, 5
        %vm2056 = vcmp.ge.s32.totalorder %v1736, 5
        %v2057 = vrot.slane %v2029, 2
        %v2058 = vrot.slane %v2030, 2
        %v2059 = vsel %vm303, %v2057, %v2058
        %v2060 = vrot.slane %v2031, 2
        %v2061 = vsel %vm303, %v2058, %v2060
        %v2062 = vrot.slane %v2032, 2
        %v2063 = vsel %vm303, %v2060, %v2062
        %v2068 = vsel %vm321, %v2062, 0.0
        %v2069 = vsel %vm2053, 0.0, %v2059
        %v2070 = vsel %vm2054, 0.0, %v2061
        %v2071 = vsel %vm2055, 0.0, %v2063
        %v2072 = vsel %vm2056, 0.0, %v2068
        %v2073 = vmax.f32 %v2029, %v2049
        %v2074 = vmax.f32 %v2030, %v2050
        %v2075 = vmax.f32 %v2031, %v2051
        %v2076 = vmax.f32 %v2032, %v2052
        %v2077 = vmax.f32 %v2073, %v2069
        %v2078 = vmax.f32 %v2074, %v2070
        %v2079 = vmax.f32 %v2075, %v2071
        %v2080 = vmax.f32 %v2076, %v2072
        %v2082 = vrot.slane %v2077, 1
        %v2084 = vrot.slane %v2077, 2
        %v2086 = vrot.slane %v2077, 4
        %v2089 = vrot.slane %v2078, 5
        %v2091 = vrot.slane %v2078, 6
        %v2094 = vrot.slane %v2079, 1
        %v2096 = vrot.slane %v2079, 2
        %v2098 = vrot.slane %v2079, 4
        %v2100 = vrot.slane %v2079, 5
        %v2103 = vrot.slane %v2080, 6
        %v2105 = vsel %vm356, %v2077, %v2082
        %v2106 = vsel %vm321, %v2105, %v2084
        %v2107 = vsel %vm349, %v2106, %v2086
        %v2108 = vsel %vm312, %v2107, %v2089
        %v2109 = vsel %vm342, %v2108, %v2091
        %v2110 = vsel %vm303, %v2109, %v2078
        %v2111 = vsel %vm336, %v2110, %v2094
        %v2112 = vsel %vm356, %v2096, %v2098
        %v2113 = vsel %vm321, %v2112, %v2100
        %v2114 = vsel %vm349, %v2113, %v2103
        %v2115 = vmax.f32 %v2111, 0.0
        %v2116 = vmax.f32 %v2114, 0.0
        %vm2117 = vcmp.lt.s32.totalorder %v728, 0
        %v2118 = vsub.s32 0, %v728
        %v2119 = vsel %vm2117, %v2118, %v728
        %v2120 = vmul.u32.u64.compose %v2119, 2863311531
        %v2121 = vextract.low.u32 %v2120
        %v2122 = vextract.high.u32 %v2120
        %v2123 = vshrl.u32 %v2122, 1
        %v2124 = vmul.u32 %v2123, 3
        %v2125 = vsub.s32 %v2119, %v2124
        %v2126 = vsub.s32 0, %v2125
        %v2127 = vsel %vm2117, %v2126, %v2125
        %vm2128 = vcmp.lt.s32.totalorder %v729, 0
        %v2129 = vsub.s32 0, %v729
        %v2130 = vsel %vm2128, %v2129, %v729
        %v2131 = vmul.u32.u64.compose %v2130, 2863311531
        %v2132 = vextract.low.u32 %v2131
        %v2133 = vextract.high.u32 %v2131
        %v2134 = vshrl.u32 %v2133, 1
        %v2135 = vmul.u32 %v2134, 3
        %v2136 = vsub.s32 %v2130, %v2135
        %v2137 = vsub.s32 0, %v2136
        %v2138 = vsel %vm2128, %v2137, %v2136
        %vm2139 = vcmp.ne.s32.totalorder %v2127, 0
        %vm2140 = vcmp.ne.s32.totalorder %v2138, 0
        %vm2141 = vcmp.lt.s32.totalorder %v2127, 0
        %vm2142 = vcmp.lt.s32.totalorder %v2138, 0
        %vm2143 = vmand %vm2141, %vm2139
        %vm2144 = vmand %vm2142, %vm2140
        %v2145 = vadd.s32 %v2127, 3
        %v2146 = vadd.s32 %v2138, 3
        %v2147 = vsel %vm2143, %v2145, %v2127
        %v2148 = vsel %vm2144, %v2146, %v2138
        %vm2149 = vcmp.eq.s32.totalorder %v2147, 0
        %vm2150 = vcmp.eq.s32.totalorder %v2148, 0
        %v2153 = vrot.slane %v2115, 7
        %v2154 = vrot.slane %v2116, 7
        %v2155 = vsel %vm356, %v2153, %v2154
        %v2158 = vsel %vm356, 0.0, %v2153
        %v2159 = vsel %vm2149, 0.0, %v2158
        %v2160 = vsel %vm2150, 0.0, %v2155
        %vm2161 = vcmp.eq.s32.totalorder %v2147, 2
        %vm2162 = vcmp.eq.s32.totalorder %v2148, 2
        %v2163 = vrot.slane %v2115, 1
        %v2164 = vrot.slane %v2116, 1
        %v2165 = vsel %vm336, %v2163, %v2164
        %v2168 = vsel %vm349, %v2164, 0.0
        %v2169 = vsel %vm2161, 0.0, %v2165
        %v2170 = vsel %vm2162, 0.0, %v2168
        %v2171 = vpack.c.bf16 %v2160, %v2159
        %v2172 = vpack.c.bf16 %v2116, %v2115
        %v2173 = vpack.c.bf16 %v2170, %v2169
        %2174 = vmatprep.subr.bf16.mxu0 0
        %2175 = vmatpush1.bf16.msra.mxu0 %v1108
        %2176 = vmatprep.subr.bf16.mxu0 0
        %2177 = vmatpush1.bf16.msra.mxu0 %v1109
        %2178 = vmatprep.subr.bf16.mxu0 0
        %2179 = vmatpush1.bf16.msra.mxu0 %v1110
        %2180 = vmatprep.subr.bf16.mxu0 0
        %2181 = vmatpush1.bf16.msra.mxu0 %v1111
        %2182 = vmatprep.subr.bf16.mxu0 0
        %2183 = vmatpush1.bf16.msra.mxu0 %v1112
        %2184 = vmatprep.subr.bf16.mxu0 0
        %2185 = vmatpush1.bf16.msra.mxu0 %v1113
        %2186 = vmatprep.subr.bf16.mxu0 0
        %2187 = vmatpush1.bf16.msra.mxu0 %v1114
        %2188 = vmatprep.subr.bf16.mxu0 0
        %2189 = vmatpush1.bf16.msra.mxu0 %v1115
        %2190 = vmatprep.subr.bf16.mxu0 0
        %2191 = vmatpush1.bf16.msra.mxu0 %v1116
        %2192 = vmatprep.subr.bf16.mxu0 0
        %2193 = vmatpush1.bf16.msra.mxu0 %v1117
        %2194 = vmatprep.subr.bf16.mxu0 0
        %2195 = vmatpush1.bf16.msra.mxu0 %v1118
        %2196 = vmatprep.subr.bf16.mxu0 0
        %2197 = vmatpush1.bf16.msra.mxu0 %v1119
        %2198 = vmatprep.subr.bf16.mxu0 0
        %2199 = vmatpush1.bf16.msra.mxu0 %v1120
        %2200 = vmatprep.subr.bf16.mxu0 0
        %2201 = vmatpush1.bf16.msra.mxu0 %v1121
        %2202 = vmatprep.subr.bf16.mxu0 0
        %2203 = vmatpush1.bf16.msra.mxu0 %v1122
        %2204 = vmatprep.subr.bf16.mxu0 0
        %2205 = vmatpush1.bf16.msra.mxu0 %v1123
        %2206 = vmatprep.mubr.bf16.mxu0 %v2172
        %2207 = vmatmul.mubr.bf16.gmra.mrb[0].mxu0 %v2171
        %v2208 = vpop.f32.mrb[0].mxu0
        %v2209 = vadd.f32 %v1010, %v2208
        %v2210 = vpop.f32.mrb[0].mxu0
        %v2211 = vpop.f32.mrb[0].mxu0
        %v2212 = vadd.f32 %v1010, %v2211
        %v2213 = vpop.f32.mrb[0].mxu0
        %2214 = vdwg.mxu0
        %2215 = vmatprep.subr.bf16.mxu0 0
        %2216 = vmatpush1.bf16.msra.mxu0 %v1124
        %2217 = vmatprep.subr.bf16.mxu0 0
        %2218 = vmatpush1.bf16.msra.mxu0 %v1125
        %2219 = vmatprep.subr.bf16.mxu0 0
        %2220 = vmatpush1.bf16.msra.mxu0 %v1126
        %2221 = vmatprep.subr.bf16.mxu0 0
        %2222 = vmatpush1.bf16.msra.mxu0 %v1127
        %2223 = vmatprep.subr.bf16.mxu0 0
        %2224 = vmatpush1.bf16.msra.mxu0 %v1128
        %2225 = vmatprep.subr.bf16.mxu0 0
        %2226 = vmatpush1.bf16.msra.mxu0 %v1129
        %2227 = vmatprep.subr.bf16.mxu0 0
        %2228 = vmatpush1.bf16.msra.mxu0 %v1130
        %2229 = vmatprep.subr.bf16.mxu0 0
        %2230 = vmatpush1.bf16.msra.mxu0 %v1131
        %2231 = vmatprep.subr.bf16.mxu0 0
        %2232 = vmatpush1.bf16.msra.mxu0 0
        %2233 = vmatprep.subr.bf16.mxu0 0
        %2234 = vmatpush1.bf16.msra.mxu0 0
        %2235 = vmatprep.subr.bf16.mxu0 0
        %2236 = vmatpush1.bf16.msra.mxu0 0
        %2237 = vmatprep.subr.bf16.mxu0 0
        %2238 = vmatpush1.bf16.msra.mxu0 0
        %2239 = vmatprep.subr.bf16.mxu0 0
        %2240 = vmatpush1.bf16.msra.mxu0 0
        %2241 = vmatprep.subr.bf16.mxu0 0
        %2242 = vmatpush1.bf16.msra.mxu0 0
        %2243 = vmatprep.subr.bf16.mxu0 0
        %2244 = vmatpush1.bf16.msra.mxu0 0
        %2245 = vmatprep.subr.bf16.mxu0 0
        %2246 = vmatpush1.bf16.msra.mxu0 0
        %2247 = vmatprep.mubr.bf16.mxu0 0
        %2248 = vmatmul.mubr.bf16.gmra.mrb[0].mxu0 %v2173
        %v2249 = vpop.f32.mrb[0].mxu0
        %v2250 = vadd.f32 %v2209, %v2249
        %v2251 = vpop.f32.mrb[0].mxu0
        %v2252 = vpop.f32.mrb[0].mxu0
        %v2253 = vadd.f32 %v2212, %v2252
        %v2254 = vpop.f32.mrb[0].mxu0
        %2255 = vdwg.mxu0
        %v2256 = vmax.f32 %v2250, 0.0
        %v2257 = vmax.f32 %v2253, 0.0
        %v2260 = vrot.slane %v2256, 7
        %v2261 = vrot.slane %v2257, 7
        %v2262 = vsel %vm356, %v2260, %v2261
        %v2265 = vsel %vm356, 0.0, %v2260
        %v2266 = vsel %vm2149, 0.0, %v2265
        %v2267 = vsel %vm2150, 0.0, %v2262
        %v2268 = vrot.slane %v2256, 1
        %v2269 = vrot.slane %v2257, 1
        %v2270 = vsel %vm336, %v2268, %v2269
        %v2273 = vsel %vm349, %v2269, 0.0
        %v2274 = vsel %vm2161, 0.0, %v2270
        %v2275 = vsel %vm2162, 0.0, %v2273
        %v2276 = vpack.c.bf16 %v2267, %v2266
        %v2277 = vpack.c.bf16 %v2257, %v2256
        %v2278 = vpack.c.bf16 %v2275, %v2274
        %2279 = vmatprep.subr.bf16.mxu0 0
        %2280 = vmatpush1.bf16.msra.mxu0 %v1108
        %2281 = vmatprep.subr.bf16.mxu0 0
        %2282 = vmatpush1.bf16.msra.mxu0 %v1109
        %2283 = vmatprep.subr.bf16.mxu0 0
        %2284 = vmatpush1.bf16.msra.mxu0 %v1110
        %2285 = vmatprep.subr.bf16.mxu0 0
        %2286 = vmatpush1.bf16.msra.mxu0 %v1111
        %2287 = vmatprep.subr.bf16.mxu0 0
        %2288 = vmatpush1.bf16.msra.mxu0 %v1112
        %2289 = vmatprep.subr.bf16.mxu0 0
        %2290 = vmatpush1.bf16.msra.mxu0 %v1113
        %2291 = vmatprep.subr.bf16.mxu0 0
        %2292 = vmatpush1.bf16.msra.mxu0 %v1114
        %2293 = vmatprep.subr.bf16.mxu0 0
        %2294 = vmatpush1.bf16.msra.mxu0 %v1115
        %2295 = vmatprep.subr.bf16.mxu0 0
        %2296 = vmatpush1.bf16.msra.mxu0 %v1116
        %2297 = vmatprep.subr.bf16.mxu0 0
        %2298 = vmatpush1.bf16.msra.mxu0 %v1117
        %2299 = vmatprep.subr.bf16.mxu0 0
        %2300 = vmatpush1.bf16.msra.mxu0 %v1118
        %2301 = vmatprep.subr.bf16.mxu0 0
        %2302 = vmatpush1.bf16.msra.mxu0 %v1119
        %2303 = vmatprep.subr.bf16.mxu0 0
        %2304 = vmatpush1.bf16.msra.mxu0 %v1120
        %2305 = vmatprep.subr.bf16.mxu0 0
        %2306 = vmatpush1.bf16.msra.mxu0 %v1121
        %2307 = vmatprep.subr.bf16.mxu0 0
        %2308 = vmatpush1.bf16.msra.mxu0 %v1122
        %2309 = vmatprep.subr.bf16.mxu0 0
        %2310 = vmatpush1.bf16.msra.mxu0 %v1123
        %2311 = vmatprep.mubr.bf16.mxu0 %v2277
        %2312 = vmatmul.mubr.bf16.gmra.mrb[0].mxu0 %v2276
        %v2313 = vpop.f32.mrb[0].mxu0
        %v2314 = vadd.f32 %v1010, %v2313
        %v2315 = vpop.f32.mrb[0].mxu0
        %v2316 = vpop.f32.mrb[0].mxu0
        %v2317 = vadd.f32 %v1010, %v2316
        %v2318 = vpop.f32.mrb[0].mxu0
        %2319 = vdwg.mxu0
        %2320 = vmatprep.subr.bf16.mxu0 0
        %2321 = vmatpush1.bf16.msra.mxu0 %v1124
        %2322 = vmatprep.subr.bf16.mxu0 0
        %2323 = vmatpush1.bf16.msra.mxu0 %v1125
        %2324 = vmatprep.subr.bf16.mxu0 0
        %2325 = vmatpush1.bf16.msra.mxu0 %v1126
        %2326 = vmatprep.subr.bf16.mxu0 0
        %2327 = vmatpush1.bf16.msra.mxu0 %v1127
        %2328 = vmatprep.subr.bf16.mxu0 0
        %2329 = vmatpush1.bf16.msra.mxu0 %v1128
        %2330 = vmatprep.subr.bf16.mxu0 0
        %2331 = vmatpush1.bf16.msra.mxu0 %v1129
        %2332 = vmatprep.subr.bf16.mxu0 0
        %2333 = vmatpush1.bf16.msra.mxu0 %v1130
        %2334 = vmatprep.subr.bf16.mxu0 0
        %2335 = vmatpush1.bf16.msra.mxu0 %v1131
        %2336 = vmatprep.subr.bf16.mxu0 0
        %2337 = vmatpush1.bf16.msra.mxu0 0
        %2338 = vmatprep.subr.bf16.mxu0 0
        %2339 = vmatpush1.bf16.msra.mxu0 0
        %2340 = vmatprep.subr.bf16.mxu0 0
        %2341 = vmatpush1.bf16.msra.mxu0 0
        %2342 = vmatprep.subr.bf16.mxu0 0
        %2343 = vmatpush1.bf16.msra.mxu0 0
        %2344 = vmatprep.subr.bf16.mxu0 0
        %2345 = vmatpush1.bf16.msra.mxu0 0
        %2346 = vmatprep.subr.bf16.mxu0 0
        %2347 = vmatpush1.bf16.msra.mxu0 0
        %2348 = vmatprep.subr.bf16.mxu0 0
        %2349 = vmatpush1.bf16.msra.mxu0 0
        %2350 = vmatprep.subr.bf16.mxu0 0
        %2351 = vmatpush1.bf16.msra.mxu0 0
        %2352 = vmatprep.mubr.bf16.mxu0 0
        %2353 = vmatmul.mubr.bf16.gmra.mrb[0].mxu0 %v2278
        %v2354 = vpop.f32.mrb[0].mxu0
        %v2355 = vadd.f32 %v2314, %v2354
        %v2356 = vpop.f32.mrb[0].mxu0
        %v2357 = vpop.f32.mrb[0].mxu0
        %v2358 = vadd.f32 %v2317, %v2357
        %v2359 = vpop.f32.mrb[0].mxu0
        %2360 = vdwg.mxu0
        %v2361 = vadd.f32 %v2355, %v2111
        %v2362 = vadd.f32 %v2358, %v2114
        %v2365 = vrot.slane %v2361, 1
        %v2366 = vrot.slane %v2362, 1
        %v2367 = vsel %vm336, %v2365, %v2366
        %v2370 = vsel %vm349, %v2366, 0.0
        %v2371 = vsel %vm2161, 0.0, %v2367
        %v2372 = vsel %vm2162, 0.0, %v2370
        %vm2373 = vcmp.ge.s32.totalorder %v2147, 1
        %vm2374 = vcmp.ge.s32.totalorder %v2148, 1
        %v2375 = vrot.slane %v2361, 2
        %v2376 = vrot.slane %v2362, 2
        %v2377 = vsel %vm303, %v2375, %v2376
        %v2380 = vsel %vm321, %v2376, 0.0
        %v2381 = vsel %vm2373, 0.0, %v2377
        %v2382 = vsel %vm2374, 0.0, %v2380
        %v2383 = vmax.f32 %v2361, %v2371
        %v2384 = vmax.f32 %v2362, %v2372
        %v2385 = vmax.f32 %v2383, %v2381
        %v2386 = vmax.f32 %v2384, %v2382
        %v2388 = vrot.slane %v2385, 2
        %v2390 = vrot.slane %v2385, 4
        %v2393 = vrot.slane %v2386, 6
        %v2395 = vsel %vm356, %v2385, %v2388
        %v2396 = vsel %vm321, %v2395, %v2390
        %v2397 = vsel %vm349, %v2396, %v2393
        %v2398 = vmax.f32 %v2397, 0.0
        %v2399 = vpack.c.bf16 %v2398, %v2398
        %2400 = vmatprep.subr.bf16.mxu0 0
        %2401 = vmatpush1.bf16.msra.mxu0 %v1108
        %2402 = vmatprep.subr.bf16.mxu0 0
        %2403 = vmatpush1.bf16.msra.mxu0 %v1109
        %2404 = vmatprep.subr.bf16.mxu0 0
        %2405 = vmatpush1.bf16.msra.mxu0 %v1110
        %2406 = vmatprep.subr.bf16.mxu0 0
        %2407 = vmatpush1.bf16.msra.mxu0 %v1111
        %2408 = vmatprep.subr.bf16.mxu0 0
        %2409 = vmatpush1.bf16.msra.mxu0 %v1112
        %2410 = vmatprep.subr.bf16.mxu0 0
        %2411 = vmatpush1.bf16.msra.mxu0 %v1113
        %2412 = vmatprep.subr.bf16.mxu0 0
        %2413 = vmatpush1.bf16.msra.mxu0 %v1114
        %2414 = vmatprep.subr.bf16.mxu0 0
        %2415 = vmatpush1.bf16.msra.mxu0 %v1115
        %2416 = vmatprep.subr.bf16.mxu0 0
        %2417 = vmatpush1.bf16.msra.mxu0 %v1116
        %2418 = vmatprep.subr.bf16.mxu0 0
        %2419 = vmatpush1.bf16.msra.mxu0 %v1117
        %2420 = vmatprep.subr.bf16.mxu0 0
        %2421 = vmatpush1.bf16.msra.mxu0 %v1118
        %2422 = vmatprep.subr.bf16.mxu0 0
        %2423 = vmatpush1.bf16.msra.mxu0 %v1119
        %2424 = vmatprep.subr.bf16.mxu0 0
        %2425 = vmatpush1.bf16.msra.mxu0 %v1120
        %2426 = vmatprep.subr.bf16.mxu0 0
        %2427 = vmatpush1.bf16.msra.mxu0 %v1121
        %2428 = vmatprep.subr.bf16.mxu0 0
        %2429 = vmatpush1.bf16.msra.mxu0 %v1122
        %2430 = vmatprep.subr.bf16.mxu0 0
        %2431 = vmatpush1.bf16.msra.mxu0 %v1123
        %2432 = vmatprep.mubr.bf16.mxu0 %v2399
        %2433 = vmatmul.mubr.bf16.gmra.mrb[0].mxu0 0
        %v2434 = vpop.f32.mrb[0].mxu0
        %v2435 = vadd.f32 %v1010, %v2434
        %v2436 = vpop.f32.mrb[0].mxu0
        %v2437 = vpop.f32.mrb[0].mxu0
        %v2438 = vpop.f32.mrb[0].mxu0
        %2439 = vdwg.mxu0
        %2440 = vmatprep.subr.bf16.mxu0 0
        %2441 = vmatpush1.bf16.msra.mxu0 %v1124
        %2442 = vmatprep.subr.bf16.mxu0 0
        %2443 = vmatpush1.bf16.msra.mxu0 %v1125
        %2444 = vmatprep.subr.bf16.mxu0 0
        %2445 = vmatpush1.bf16.msra.mxu0 %v1126
        %2446 = vmatprep.subr.bf16.mxu0 0
        %2447 = vmatpush1.bf16.msra.mxu0 %v1127
        %2448 = vmatprep.subr.bf16.mxu0 0
        %2449 = vmatpush1.bf16.msra.mxu0 %v1128
        %2450 = vmatprep.subr.bf16.mxu0 0
        %2451 = vmatpush1.bf16.msra.mxu0 %v1129
        %2452 = vmatprep.subr.bf16.mxu0 0
        %2453 = vmatpush1.bf16.msra.mxu0 %v1130
        %2454 = vmatprep.subr.bf16.mxu0 0
        %2455 = vmatpush1.bf16.msra.mxu0 %v1131
        %2456 = vmatprep.subr.bf16.mxu0 0
        %2457 = vmatpush1.bf16.msra.mxu0 0
        %2458 = vmatprep.subr.bf16.mxu0 0
        %2459 = vmatpush1.bf16.msra.mxu0 0
        %2460 = vmatprep.subr.bf16.mxu0 0
        %2461 = vmatpush1.bf16.msra.mxu0 0
        %2462 = vmatprep.subr.bf16.mxu0 0
        %2463 = vmatpush1.bf16.msra.mxu0 0
        %2464 = vmatprep.subr.bf16.mxu0 0
        %2465 = vmatpush1.bf16.msra.mxu0 0
        %2466 = vmatprep.subr.bf16.mxu0 0
        %2467 = vmatpush1.bf16.msra.mxu0 0
        %2468 = vmatprep.subr.bf16.mxu0 0
        %2469 = vmatpush1.bf16.msra.mxu0 0
        %2470 = vmatprep.subr.bf16.mxu0 0
        %2471 = vmatpush1.bf16.msra.mxu0 0
        %2472 = vmatprep.mubr.bf16.mxu0 0
        %2473 = vmatmul.mubr.bf16.gmra.mrb[0].mxu0 0
        %v2474 = vpop.f32.mrb[0].mxu0
        %v2475 = vadd.f32 %v2435, %v2474
        %v2476 = vpop.f32.mrb[0].mxu0
        %v2477 = vpop.f32.mrb[0].mxu0
        %v2478 = vpop.f32.mrb[0].mxu0
        %2479 = vdwg.mxu0
        %v2480 = vmax.f32 %v2475, 0.0
        %v2481 = vpack.c.bf16 %v2480, %v2480
        %2482 = vmatprep.subr.bf16.mxu0 0
        %2483 = vmatpush1.bf16.msra.mxu0 %v1108
        %2484 = vmatprep.subr.bf16.mxu0 0
        %2485 = vmatpush1.bf16.msra.mxu0 %v1109
        %2486 = vmatprep.subr.bf16.mxu0 0
        %2487 = vmatpush1.bf16.msra.mxu0 %v1110
        %2488 = vmatprep.subr.bf16.mxu0 0
        %2489 = vmatpush1.bf16.msra.mxu0 %v1111
        %2490 = vmatprep.subr.bf16.mxu0 0
        %2491 = vmatpush1.bf16.msra.mxu0 %v1112
        %2492 = vmatprep.subr.bf16.mxu0 0
        %2493 = vmatpush1.bf16.msra.mxu0 %v1113
        %2494 = vmatprep.subr.bf16.mxu0 0
        %2495 = vmatpush1.bf16.msra.mxu0 %v1114
        %2496 = vmatprep.subr.bf16.mxu0 0
        %2497 = vmatpush1.bf16.msra.mxu0 %v1115
        %2498 = vmatprep.subr.bf16.mxu0 0
        %2499 = vmatpush1.bf16.msra.mxu0 %v1116
        %2500 = vmatprep.subr.bf16.mxu0 0
        %2501 = vmatpush1.bf16.msra.mxu0 %v1117
        %2502 = vmatprep.subr.bf16.mxu0 0
        %2503 = vmatpush1.bf16.msra.mxu0 %v1118
        %2504 = vmatprep.subr.bf16.mxu0 0
        %2505 = vmatpush1.bf16.msra.mxu0 %v1119
        %2506 = vmatprep.subr.bf16.mxu0 0
        %2507 = vmatpush1.bf16.msra.mxu0 %v1120
        %2508 = vmatprep.subr.bf16.mxu0 0
        %2509 = vmatpush1.bf16.msra.mxu0 %v1121
        %2510 = vmatprep.subr.bf16.mxu0 0
        %2511 = vmatpush1.bf16.msra.mxu0 %v1122
        %2512 = vmatprep.subr.bf16.mxu0 0
        %2513 = vmatpush1.bf16.msra.mxu0 %v1123
        %2514 = vmatprep.mubr.bf16.mxu0 %v2481
        %2515 = vmatmul.mubr.bf16.gmra.mrb[0].mxu0 0
        %v2516 = vpop.f32.mrb[0].mxu0
        %v2517 = vadd.f32 %v1010, %v2516
        %v2518 = vpop.f32.mrb[0].mxu0
        %v2519 = vpop.f32.mrb[0].mxu0
        %v2520 = vpop.f32.mrb[0].mxu0
        %2521 = vdwg.mxu0
        %2522 = vmatprep.subr.bf16.mxu0 0
        %2523 = vmatpush1.bf16.msra.mxu0 %v1124
        %2524 = vmatprep.subr.bf16.mxu0 0
        %2525 = vmatpush1.bf16.msra.mxu0 %v1125
        %2526 = vmatprep.subr.bf16.mxu0 0
        %2527 = vmatpush1.bf16.msra.mxu0 %v1126
        %2528 = vmatprep.subr.bf16.mxu0 0
        %2529 = vmatpush1.bf16.msra.mxu0 %v1127
        %2530 = vmatprep.subr.bf16.mxu0 0
        %2531 = vmatpush1.bf16.msra.mxu0 %v1128
        %2532 = vmatprep.subr.bf16.mxu0 0
        %2533 = vmatpush1.bf16.msra.mxu0 %v1129
        %2534 = vmatprep.subr.bf16.mxu0 0
        %2535 = vmatpush1.bf16.msra.mxu0 %v1130
        %2536 = vmatprep.subr.bf16.mxu0 0
        %2537 = vmatpush1.bf16.msra.mxu0 %v1131
        %2538 = vmatprep.subr.bf16.mxu0 0
        %2539 = vmatpush1.bf16.msra.mxu0 0
        %2540 = vmatprep.subr.bf16.mxu0 0
        %2541 = vmatpush1.bf16.msra.mxu0 0
        %2542 = vmatprep.subr.bf16.mxu0 0
        %2543 = vmatpush1.bf16.msra.mxu0 0
        %2544 = vmatprep.subr.bf16.mxu0 0
        %2545 = vmatpush1.bf16.msra.mxu0 0
        %2546 = vmatprep.subr.bf16.mxu0 0
        %2547 = vmatpush1.bf16.msra.mxu0 0
        %2548 = vmatprep.subr.bf16.mxu0 0
        %2549 = vmatpush1.bf16.msra.mxu0 0
        %2550 = vmatprep.subr.bf16.mxu0 0
        %2551 = vmatpush1.bf16.msra.mxu0 0
        %2552 = vmatprep.subr.bf16.mxu0 0
        %2553 = vmatpush1.bf16.msra.mxu0 0
        %2554 = vmatprep.mubr.bf16.mxu0 0
        %2555 = vmatmul.mubr.bf16.gmra.mrb[0].mxu0 0
        %v2556 = vpop.f32.mrb[0].mxu0
        %v2557 = vadd.f32 %v2517, %v2556
        %v2558 = vpop.f32.mrb[0].mxu0
        %v2559 = vpop.f32.mrb[0].mxu0
        %v2560 = vpop.f32.mrb[0].mxu0
        %2561 = vdwg.mxu0
        %v2562 = vadd.f32 %v2557, %v2397
        %v2563 = vpack.c.bf16 %v2562, %v2562
        %v2564 = vld [vmem:[%s5] sm:$0xf]
        %v2565 = vld [vmem:[%s5 + $0x4] sm:$0xf]
        %v2566 = vld [vmem:[%s5 + $0x8] sm:$0xf]
        %v2567 = vld [vmem:[%s5 + $0xc] sm:$0xf]
        %v2568 = vld [vmem:[%s5 + $0x10] sm:$0xf]
        %v2569 = vld [vmem:[%s5 + $0x14] sm:$0xf]
        %v2570 = vld [vmem:[%s5 + $0x18] sm:$0xf]
        %v2571 = vld [vmem:[%s5 + $0x1c] sm:$0xf]
        %v2572 = vld [vmem:[%s5 + $0x20] sm:$0xf]
        %v2573 = vld [vmem:[%s5 + $0x24] sm:$0xf]
        %v2574 = vld [vmem:[%s5 + $0x28] sm:$0xf]
        %v2575 = vld [vmem:[%s5 + $0x2c] sm:$0xf]
        %v2576 = vld [vmem:[%s5 + $0x30] sm:$0xf]
        %v2577 = vld [vmem:[%s5 + $0x34] sm:$0xf]
        %v2578 = vld [vmem:[%s5 + $0x38] sm:$0xf]
        %v2579 = vld [vmem:[%s5 + $0x3c] sm:$0xf]
        %v2580 = vld [vmem:[%s6] sm:$0x1]
        %v2582 = vlaneseq
        %v2583 = vshrl.u32 %v2582, 7
        %v2584 = vsub.s32 0, %v2583
        %v2585 = vrot.slane %v2580, %v2584
        %v2603 = vunpack.c.l.b16 %v2564
        %v2604 = vunpack.c.l.b16 %v2565
        %v2605 = vunpack.c.l.b16 %v2566
        %v2606 = vunpack.c.l.b16 %v2567
        %v2607 = vunpack.c.l.b16 %v2568
        %v2608 = vunpack.c.l.b16 %v2569
        %v2609 = vunpack.c.l.b16 %v2570
        %v2610 = vunpack.c.l.b16 %v2571
        %v2611 = vunpack.c.l.b16 %v2572
        %v2612 = vunpack.c.l.b16 %v2573
        %v2613 = vunpack.c.l.b16 %v2574
        %v2614 = vunpack.c.l.b16 %v2575
        %v2615 = vunpack.c.l.b16 %v2576
        %v2616 = vunpack.c.l.b16 %v2577
        %v2617 = vunpack.c.l.b16 %v2578
        %v2618 = vunpack.c.l.b16 %v2579
        %v2619 = vpack.c.b16 %v2604, %v2603
        %v2620 = vpack.c.b16 %v2606, %v2605
        %v2621 = vpack.c.b16 %v2608, %v2607
        %v2622 = vpack.c.b16 %v2610, %v2609
        %v2623 = vpack.c.b16 %v2612, %v2611
        %v2624 = vpack.c.b16 %v2614, %v2613
        %v2625 = vpack.c.b16 %v2616, %v2615
        %v2626 = vpack.c.b16 %v2618, %v2617
        %2635 = vmatprep.subr.bf16.mxu0 0
        %2636 = vmatpush1.bf16.msra.mxu0 %v2619
        %2637 = vmatprep.subr.bf16.mxu0 0
        %2638 = vmatpush1.bf16.msra.mxu0 %v2620
        %2639 = vmatprep.subr.bf16.mxu0 0
        %2640 = vmatpush1.bf16.msra.mxu0 %v2621
        %2641 = vmatprep.subr.bf16.mxu0 0
        %2642 = vmatpush1.bf16.msra.mxu0 %v2622
        %2643 = vmatprep.subr.bf16.mxu0 0
        %2644 = vmatpush1.bf16.msra.mxu0 %v2623
        %2645 = vmatprep.subr.bf16.mxu0 0
        %2646 = vmatpush1.bf16.msra.mxu0 %v2624
        %2647 = vmatprep.subr.bf16.mxu0 0
        %2648 = vmatpush1.bf16.msra.mxu0 %v2625
        %2649 = vmatprep.subr.bf16.mxu0 0
        %2650 = vmatpush1.bf16.msra.mxu0 %v2626
        %2651 = vmatprep.subr.bf16.mxu0 0
        %2652 = vmatpush1.bf16.msra.mxu0 0
        %2653 = vmatprep.subr.bf16.mxu0 0
        %2654 = vmatpush1.bf16.msra.mxu0 0
        %2655 = vmatprep.subr.bf16.mxu0 0
        %2656 = vmatpush1.bf16.msra.mxu0 0
        %2657 = vmatprep.subr.bf16.mxu0 0
        %2658 = vmatpush1.bf16.msra.mxu0 0
        %2659 = vmatprep.subr.bf16.mxu0 0
        %2660 = vmatpush1.bf16.msra.mxu0 0
        %2661 = vmatprep.subr.bf16.mxu0 0
        %2662 = vmatpush1.bf16.msra.mxu0 0
        %2663 = vmatprep.subr.bf16.mxu0 0
        %2664 = vmatpush1.bf16.msra.mxu0 0
        %2665 = vmatprep.subr.bf16.mxu0 0
        %2666 = vmatpush1.bf16.msra.mxu0 0
        %2667 = vmatprep.mubr.bf16.mxu0 0
        %2668 = vmatmul.mubr.bf16.gmra.mrb[0].mxu0 %v2563
        %v2669 = vpop.f32.mrb[0].mxu0
        %v2670 = vadd.f32 %v2585, %v2669
        %v2671 = vpop.f32.mrb[0].mxu0
        %v2672 = vpop.f32.mrb[0].mxu0
        %v2673 = vpop.f32.mrb[0].mxu0
        %2674 = vdwg.mxu0
        %2675 = vst [vmem:[%s291] sm:$0xf] %v2670
        %p2676 = scmp.lt.s32.totalorder %s19, 1
        %s2677 = scalar_select %p2676, %s19, 1
        %s2678 = smul.addr %s2677, 4
        %s2679 = scalar_lea.vmem %s7, %s2678
        // Predicated region
        $region53: #{dpcnn_forward.1} parent=47 // pred_check
          %p2680 = pneg %p189
        $region54: #{dpcnn_forward.1} parent=47 // pred_check_branch
          %2682 = sbr.rel (%p2680) target = $region56
        $region55: #{dpcnn_forward.1} parent=47 // pred_region
          _
        $region56: #{dpcnn_forward.1} parent=47 // pred_fallthru
          _
      $region48: #{dpcnn_forward.1} parent=5 // pred_fallthru
        _
      %p2683 = scmp.le.s32.totalorder 2, %s14
      // Predicated region
      $region57: #{dpcnn_forward.1} parent=5 // pred_check
        %p2684 = pneg %p2683
      $region58: #{dpcnn_forward.1} parent=5 // pred_check_branch
        %2686 = sbr.rel (%p2684) target = $region60
      $region59: #{dpcnn_forward.1} parent=5 // pred_region
        %s2687 = ssub.s32 %s14, 2
        // Predicated region
        $region61: #{dpcnn_forward.1} parent=59 // pred_check
          %p2688 = pneg %p195
        $region62: #{dpcnn_forward.1} parent=59 // pred_check_branch
          %2690 = sbr.rel (%p2688) target = $region64
        $region63: #{dpcnn_forward.1} parent=59 // pred_region
          %p2691 = scmp.lt.s32.totalorder %s20, 1
          %s2692 = scalar_select %p2691, %s20, 1
          %s2693 = smul.addr %s2692, 4
          %s2694 = scalar_lea.vmem %s7, %s2693
        $region64: #{dpcnn_forward.1} parent=59 // pred_fallthru
          _
      $region60: #{dpcnn_forward.1} parent=5 // pred_fallthru
        _
    $region6: #{dpcnn_forward.1} parent=1 // loop_footer
      %s18 = sadd.s32 1, %s14
    $region7: #{dpcnn_forward.1} parent=1 // loop_footer_branch
      %13 = sbr.rel target = $region3
    $region8: #{dpcnn_forward.1} parent=1 // loop_exit
      _
    %2695 = vsyncpa [#allocation3], 1
    %s2696 = scalar_lea.sflag [#allocation3], 1
    %2697 = vsyncpa %s2696, 1

</llo_original>
